<compile_context>
chip_gen: v7x
topology: tpu7x:2x2x1
jax: 0.10.0
libtpu: 0.0.40
codegen_flags: <defaults>
</compile_context>

<pallas_src>
import functools

import jax
import jax.numpy as jnp
from jax.experimental import pallas as pl
from jax.experimental.pallas import tpu as pltpu


def _round_up(x, m):
    return ((x + m - 1) // m) * m


def _lstm_gmm_kernel(pre_ref, whh_ref, wgmm_ref, bgmm_ref, out_ref,
                     h_ref, c_ref, hblk_ref, *, hp, out_p, bsp, t_blk):
    """T_BLK timesteps of the LSTM recurrence + fused GMM projection.

    pre_ref : (T_BLK, BSP, 4*HP) bf16  x@W_ih^T + (b_ih+b_hh), gate slab g
                                       occupies lanes [g*HP, g*HP+HP).
    whh_ref : (HP, 4*HP)        bf16   padded W_hh^T in the same gate layout.
    wgmm_ref: (HP, OUT_P)       bf16   padded gmm_linear weight (transposed).
    bgmm_ref: (1, OUT_P)        f32    padded gmm_linear bias.
    out_ref : (T_BLK, BSP, OUT_P) f32  gmm outputs for this time block.
    h_ref, c_ref : (BSP, HP)    f32    VMEM carries (persist across grid).
    hblk_ref: (T_BLK, BSP, HP)  f32    per-step h staging for the fused gmm.
    """
    @pl.when(pl.program_id(0) == 0)
    def _():
        h_ref[...] = jnp.zeros_like(h_ref)
        c_ref[...] = jnp.zeros_like(c_ref)

    def step(i, carry):
        h_prev = h_ref[...]
        c_prev = c_ref[...]
        # Single MXU push per timestep; input projection already folded in.
        gates = pre_ref[i].astype(jnp.float32) + jnp.dot(
            h_prev.astype(jnp.bfloat16), whh_ref[...],
            preferred_element_type=jnp.float32)
        # PyTorch LSTM gate order: i, f, g, o — each slab 128-lane aligned.
        i_g = jax.nn.sigmoid(gates[:, 0 * hp:1 * hp])
        f_g = jax.nn.sigmoid(gates[:, 1 * hp:2 * hp])
        g_g = jnp.tanh(gates[:, 2 * hp:3 * hp])
        o_g = jax.nn.sigmoid(gates[:, 3 * hp:4 * hp])

        c_new = f_g * c_prev + i_g * g_g
        h_new = o_g * jnp.tanh(c_new)

        c_ref[...] = c_new
        h_ref[...] = h_new
        hblk_ref[i] = h_new
        return carry

    jax.lax.fori_loop(0, t_blk, step, 0, unroll=8)

    # Fused gmm_linear on the h block already resident in VMEM:
    # one (T_BLK*BSP, HP) @ (HP, OUT_P) matmul, lane-dense OUT_P store.
    h_all = hblk_ref[...].reshape(t_blk * bsp, hp).astype(jnp.bfloat16)
    y = jnp.dot(h_all, wgmm_ref[...], preferred_element_type=jnp.float32)
    y = y + bgmm_ref[...]
    out_ref[...] = y.reshape(t_blk, bsp, out_p)


def mdrnn_forward(actions, latents, params, *, latents_dim, actions_dim,
                  hiddens, gaussians):
    """actions: (SEQ, BS, ASIZE), latents: (SEQ, BS, LSIZE) — time-major."""
    seq_len, bs, _ = actions.shape
    out_dim = (2 * latents_dim + 1) * gaussians + 2

    H = hiddens
    HP = max(128, _round_up(H, 128))          # lane-aligned hidden dim
    OUT_P = max(128, _round_up(out_dim, 128)) # lane-aligned gmm output dim
    BSP = max(8, _round_up(bs, 8))            # sublane-aligned batch
    T_BLK = seq_len if seq_len <= 64 else 64  # timesteps per grid step
    SEQ_P = _round_up(seq_len, T_BLK)

    ins = jnp.concatenate([actions, latents], axis=-1)       # (SEQ, BS, IN)

    wih = params["weight_ih"]                                 # (4H, IN)
    whh = params["weight_hh"]                                 # (4H, H)
    bias = params["bias_ih"] + params["bias_hh"]              # (4H,)
    wg = params["gmm_weight"]                                 # (OUT, H)
    bg = params["gmm_bias"]                                   # (OUT,)

    # ---- Hoisted input projection: one big MXU-dense matmul (XLA, f32) ----
    pre = jnp.einsum("tbi,oi->tbo", ins, wih,
                     preferred_element_type=jnp.float32) + bias   # (SEQ,BS,4H)
    # Re-lay out gates so each gate slab is HP (=128k) lanes wide, zero-padded.
    pre = pre.reshape(seq_len, bs, 4, H)
    pre = jnp.pad(pre, ((0, SEQ_P - seq_len), (0, BSP - bs),
                        (0, 0), (0, HP - H)))
    pre = pre.reshape(SEQ_P, BSP, 4 * HP).astype(jnp.bfloat16)

    # Padded W_hh^T: (in_hidden, gate, out_hidden) -> (HP, 4*HP), zeros in pad.
    whh_g = jnp.transpose(whh.reshape(4, H, H), (2, 0, 1))    # (H, 4, H)
    whh_p = jnp.pad(whh_g, ((0, HP - H), (0, 0), (0, HP - H)))
    whh_p = whh_p.reshape(HP, 4 * HP).astype(jnp.bfloat16)

    # Padded gmm weights / bias.
    wg_p = jnp.pad(wg.T, ((0, HP - H), (0, OUT_P - out_dim)))  # (HP, OUT_P)
    wg_p = wg_p.astype(jnp.bfloat16)
    bg_p = jnp.pad(bg, (0, OUT_P - out_dim)).reshape(1, OUT_P)
    bg_p = bg_p.astype(jnp.float32)

    kernel = functools.partial(_lstm_gmm_kernel, hp=HP, out_p=OUT_P,
                               bsp=BSP, t_blk=T_BLK)

    # ---- Explicit VMEM budget (safe on v5e 16MiB scoped / v7x 64MiB phys) --
    pre_blk = T_BLK * BSP * 4 * HP * 2              # bf16
    out_blk = T_BLK * BSP * OUT_P * 4               # f32
    fixed = (HP * 4 * HP * 2 + HP * OUT_P * 2 + OUT_P * 4      # weights/bias
             + 2 * BSP * HP * 4 + T_BLK * BSP * HP * 4)        # scratch
    vmem_needed = 2 * pre_blk + 2 * out_blk + fixed
    vmem_limit = int(min(max(2 * vmem_needed + (4 << 20), 32 << 20), 60 << 20))

    gmm_pad = pl.pallas_call(
        kernel,
        out_shape=jax.ShapeDtypeStruct((SEQ_P, BSP, OUT_P), jnp.float32),
        grid_spec=pltpu.PrefetchScalarGridSpec(
            num_scalar_prefetch=0,
            grid=(SEQ_P // T_BLK,),
            in_specs=[
                pl.BlockSpec((T_BLK, BSP, 4 * HP), lambda t: (t, 0, 0)),
                pl.BlockSpec((HP, 4 * HP), lambda t: (0, 0)),
                pl.BlockSpec((HP, OUT_P), lambda t: (0, 0)),
                pl.BlockSpec((1, OUT_P), lambda t: (0, 0)),
            ],
            out_specs=pl.BlockSpec((T_BLK, BSP, OUT_P), lambda t: (t, 0, 0)),
            scratch_shapes=[
                pltpu.VMEM((BSP, HP), jnp.float32),          # h carry
                pltpu.VMEM((BSP, HP), jnp.float32),          # c carry
                pltpu.VMEM((T_BLK, BSP, HP), jnp.float32),   # h block staging
            ],
        ),
        compiler_params=pltpu.CompilerParams(
            dimension_semantics=("arbitrary",),              # serial recurrence
            vmem_limit_bytes=vmem_limit),
    )(pre, whh_p, wg_p, bg_p)

    # Drop seq / batch / output padding (small tensor, cheap XLA slice).
    gmm_outs = gmm_pad[:seq_len, :bs, :out_dim]               # (SEQ, BS, OUT)

    # ---- GMM head splitting (cheap elementwise glue, plain JAX) ----
    stride = gaussians * latents_dim
    mus = gmm_outs[:, :, :stride].reshape(seq_len, bs, gaussians, latents_dim)
    sigmas = jnp.exp(
        gmm_outs[:, :, stride:2 * stride].reshape(seq_len, bs, gaussians,
                                                  latents_dim))
    pi = gmm_outs[:, :, 2 * stride:2 * stride + gaussians]
    logpi = jax.nn.log_softmax(pi, axis=-1)
    rs = gmm_outs[:, :, -2]
    ds = gmm_outs[:, :, -1]
    return mus, sigmas, logpi, rs, ds


def init_params(key, latents, actions, hiddens, gaussians):
    in_dim = latents + actions
    out_dim = (2 * latents + 1) * gaussians + 2
    ks = jax.random.split(key, 6)
    # Uniform(-1/sqrt(H), 1/sqrt(H)) like PyTorch LSTM / Linear defaults.
    s = 1.0 / jnp.sqrt(hiddens)
    return {
        "weight_ih": jax.random.uniform(ks[0], (4 * hiddens, in_dim),
                                        jnp.float32, -s, s),
        "weight_hh": jax.random.uniform(ks[1], (4 * hiddens, hiddens),
                                        jnp.float32, -s, s),
        "bias_ih": jax.random.uniform(ks[2], (4 * hiddens,), jnp.float32,
                                      -s, s),
        "bias_hh": jax.random.uniform(ks[3], (4 * hiddens,), jnp.float32,
                                      -s, s),
        "gmm_weight": jax.random.uniform(ks[4], (out_dim, hiddens),
                                         jnp.float32, -s, s),
        "gmm_bias": jax.random.uniform(ks[5], (out_dim,), jnp.float32,
                                       -s, s),
    }


if __name__ == "__main__":
    LSIZE, ASIZE, HIDDEN, NGAUSS = 8, 4, 32, 3
    SEQ, BS = 8, 2

    key = jax.random.PRNGKey(0)
    k_p, k_a, k_l = jax.random.split(key, 3)
    params = init_params(k_p, LSIZE, ASIZE, HIDDEN, NGAUSS)

    actions = jax.random.normal(k_a, (SEQ, BS, ASIZE), jnp.float32)
    latents = jax.random.normal(k_l, (SEQ, BS, LSIZE), jnp.float32)

    mus, sigmas, logpi, rs, ds = mdrnn_forward(
        actions, latents, params,
        latents_dim=LSIZE, actions_dim=ASIZE,
        hiddens=HIDDEN, gaussians=NGAUSS)

    jax.block_until_ready((mus, sigmas, logpi, rs, ds))

    assert mus.shape == (SEQ, BS, NGAUSS, LSIZE)
    assert sigmas.shape == (SEQ, BS, NGAUSS, LSIZE)
    assert logpi.shape == (SEQ, BS, NGAUSS)
    assert rs.shape == (SEQ, BS)
    assert ds.shape == (SEQ, BS)
    assert bool(jnp.all(jnp.isfinite(mus)))
    assert bool(jnp.all(jnp.isfinite(sigmas)))
    assert bool(jnp.all(jnp.isfinite(logpi)))
    print("KERNEL_OK")
</pallas_src>

<mosaic_0001>
module attributes {stable_mosaic.version = 11 : i64} {
  func.func @_lstm_gmm_kernel(%arg0: i32, %arg1: memref<8x8x512xbf16, #tpu.memory_space<vmem>>, %arg2: memref<128x512xbf16, #tpu.memory_space<vmem>>, %arg3: memref<128x128xbf16, #tpu.memory_space<vmem>>, %arg4: memref<1x128xf32, #tpu.memory_space<vmem>>, %arg5: memref<8x8x128xf32, #tpu.memory_space<vmem>>, %arg6: memref<8x128xf32, #tpu.memory_space<vmem>>, %arg7: memref<8x128xf32, #tpu.memory_space<vmem>>, %arg8: memref<8x8x128xf32, #tpu.memory_space<vmem>>) attributes {dimension_semantics = [#tpu.dimension_semantics<arbitrary>], iteration_bounds = array<i64: 1>, scalar_prefetch = 0 : i64, scratch_operands = 3 : i64, tpu.core_type = #tpu.core_type<tc>, window_params = [{transform_indices = @transform_0, window_bounds = array<i64: 8, 8, 512>}, {pipeline_mode = #tpu.pipeline_mode<synchronous>, transform_indices = @transform_1, window_bounds = array<i64: 128, 512>}, {pipeline_mode = #tpu.pipeline_mode<synchronous>, transform_indices = @transform_2, window_bounds = array<i64: 128, 128>}, {pipeline_mode = #tpu.pipeline_mode<synchronous>, transform_indices = @transform_3, window_bounds = array<i64: 1, 128>}, {transform_indices = @transform_4, window_bounds = array<i64: 8, 8, 128>}]} {
    %c0_i32 = arith.constant 0 : i32
    %0 = arith.cmpi eq, %arg0, %c0_i32 : i32
    %1 = arith.extui %0 : i1 to i32
    %c0_i32_0 = arith.constant 0 : i32
    %2 = arith.cmpi ne, %1, %c0_i32_0 : i32
    scf.if %2 {
      %cst_155 = arith.constant 0.000000e+00 : f32
      %341 = vector.broadcast %cst_155 : f32 to vector<8x128xf32>
      %c0_156 = arith.constant 0 : index
      %c0_157 = arith.constant 0 : index
      %342 = vector.load %arg6[%c0_156, %c0_157] : memref<8x128xf32, #tpu.memory_space<vmem>>, vector<8x128xf32>
      tpu.vector_store %arg6[%c0_156, %c0_157], %341 {strides = array<i32>} : memref<8x128xf32, #tpu.memory_space<vmem>>, vector<8x128xf32>,
      %cst_158 = arith.constant 0.000000e+00 : f32
      %343 = vector.broadcast %cst_158 : f32 to vector<8x128xf32>
      %c0_159 = arith.constant 0 : index
      %c0_160 = arith.constant 0 : index
      %344 = vector.load %arg7[%c0_159, %c0_160] : memref<8x128xf32, #tpu.memory_space<vmem>>, vector<8x128xf32>
      tpu.vector_store %arg7[%c0_159, %c0_160], %343 {strides = array<i32>} : memref<8x128xf32, #tpu.memory_space<vmem>>, vector<8x128xf32>,
    } else {
    }
    %c0_i32_1 = arith.constant 0 : i32
    %c0 = arith.constant 0 : index
    %c0_2 = arith.constant 0 : index
    %3 = vector.load %arg6[%c0, %c0_2] : memref<8x128xf32, #tpu.memory_space<vmem>>, vector<8x128xf32>
    %c0_3 = arith.constant 0 : index
    %c0_4 = arith.constant 0 : index
    %4 = vector.load %arg7[%c0_3, %c0_4] : memref<8x128xf32, #tpu.memory_space<vmem>>, vector<8x128xf32>
    %5 = arith.index_cast %c0_i32_1 : i32 to index
    %c0_5 = arith.constant 0 : index
    %c0_6 = arith.constant 0 : index
    %6 = vector.load %arg1[%5, %c0_5, %c0_6] : memref<8x8x512xbf16, #tpu.memory_space<vmem>>, vector<1x8x512xbf16>
    %7 = vector.shape_cast %6 : vector<1x8x512xbf16> to vector<8x512xbf16>
    %8 = arith.extf %7 : vector<8x512xbf16> to vector<8x512xf32>
    %9 = arith.truncf %3 : vector<8x128xf32> to vector<8x128xbf16>
    %c0_7 = arith.constant 0 : index
    %c0_8 = arith.constant 0 : index
    %10 = vector.load %arg2[%c0_7, %c0_8] : memref<128x512xbf16, #tpu.memory_space<vmem>>, vector<128x512xbf16>
    %cst = arith.constant dense<0.000000e+00> : vector<8x512xf32>
    %11 = tpu.matmul %9, %10, %cst {dimension_numbers = #tpu.dot_dimension_numbers<[1], [0], [0], [1], [0, 0, 1, 1], [], []>} : vector<8x128xbf16>, vector<128x512xbf16>, vector<8x512xf32> -> vector<8x512xf32>
    %12 = arith.addf %8, %11 : vector<8x512xf32>
    %13 = vector.extract_strided_slice %12 {offsets = [0, 0], sizes = [8, 128], strides = [1, 1]} : vector<8x512xf32> to vector<8x128xf32>
    %14 = arith.negf %13 : vector<8x128xf32>
    %15 = math.exp %14 : vector<8x128xf32>
    %cst_9 = arith.constant 1.000000e+00 : f32
    %16 = vector.broadcast %cst_9 : f32 to vector<8x128xf32>
    %17 = arith.addf %16, %15 : vector<8x128xf32>
    %18 = arith.divf %16, %17 : vector<8x128xf32>
    %19 = vector.extract_strided_slice %12 {offsets = [0, 128], sizes = [8, 128], strides = [1, 1]} : vector<8x512xf32> to vector<8x128xf32>
    %20 = arith.negf %19 : vector<8x128xf32>
    %21 = math.exp %20 : vector<8x128xf32>
    %cst_10 = arith.constant 1.000000e+00 : f32
    %22 = vector.broadcast %cst_10 : f32 to vector<8x128xf32>
    %23 = arith.addf %22, %21 : vector<8x128xf32>
    %24 = arith.divf %22, %23 : vector<8x128xf32>
    %25 = vector.extract_strided_slice %12 {offsets = [0, 256], sizes = [8, 128], strides = [1, 1]} : vector<8x512xf32> to vector<8x128xf32>
    %26 = math.tanh %25 : vector<8x128xf32>
    %27 = vector.extract_strided_slice %12 {offsets = [0, 384], sizes = [8, 128], strides = [1, 1]} : vector<8x512xf32> to vector<8x128xf32>
    %28 = arith.negf %27 : vector<8x128xf32>
    %29 = math.exp %28 : vector<8x128xf32>
    %cst_11 = arith.constant 1.000000e+00 : f32
    %30 = vector.broadcast %cst_11 : f32 to vector<8x128xf32>
    %31 = arith.addf %30, %29 : vector<8x128xf32>
    %32 = arith.divf %30, %31 : vector<8x128xf32>
    %33 = arith.mulf %24, %4 : vector<8x128xf32>
    %34 = arith.mulf %18, %26 : vector<8x128xf32>
    %35 = arith.addf %33, %34 : vector<8x128xf32>
    %36 = math.tanh %35 : vector<8x128xf32>
    %37 = arith.mulf %32, %36 : vector<8x128xf32>
    %c0_12 = arith.constant 0 : index
    %c0_13 = arith.constant 0 : index
    %38 = vector.load %arg7[%c0_12, %c0_13] : memref<8x128xf32, #tpu.memory_space<vmem>>, vector<8x128xf32>
    tpu.vector_store %arg7[%c0_12, %c0_13], %35 {strides = array<i32>} : memref<8x128xf32, #tpu.memory_space<vmem>>, vector<8x128xf32>,
    %c0_14 = arith.constant 0 : index
    %c0_15 = arith.constant 0 : index
    %39 = vector.load %arg6[%c0_14, %c0_15] : memref<8x128xf32, #tpu.memory_space<vmem>>, vector<8x128xf32>
    tpu.vector_store %arg6[%c0_14, %c0_15], %37 {strides = array<i32>} : memref<8x128xf32, #tpu.memory_space<vmem>>, vector<8x128xf32>,
    %40 = arith.index_cast %c0_i32_1 : i32 to index
    %c0_16 = arith.constant 0 : index
    %c0_17 = arith.constant 0 : index
    %41 = vector.load %arg8[%40, %c0_16, %c0_17] : memref<8x8x128xf32, #tpu.memory_space<vmem>>, vector<1x8x128xf32>
    %42 = vector.shape_cast %41 : vector<1x8x128xf32> to vector<8x128xf32>
    %43 = vector.shape_cast %37 : vector<8x128xf32> to vector<1x8x128xf32>
    tpu.vector_store %arg8[%40, %c0_16, %c0_17], %43 {strides = array<i32>} : memref<8x8x128xf32, #tpu.memory_space<vmem>>, vector<1x8x128xf32>,
    %c1_i32 = arith.constant 1 : i32
    %c0_18 = arith.constant 0 : index
    %c0_19 = arith.constant 0 : index
    %44 = vector.load %arg6[%c0_18, %c0_19] : memref<8x128xf32, #tpu.memory_space<vmem>>, vector<8x128xf32>
    %c0_20 = arith.constant 0 : index
    %c0_21 = arith.constant 0 : index
    %45 = vector.load %arg7[%c0_20, %c0_21] : memref<8x128xf32, #tpu.memory_space<vmem>>, vector<8x128xf32>
    %46 = arith.index_cast %c1_i32 : i32 to index
    %c0_22 = arith.constant 0 : index
    %c0_23 = arith.constant 0 : index
    %47 = vector.load %arg1[%46, %c0_22, %c0_23] : memref<8x8x512xbf16, #tpu.memory_space<vmem>>, vector<1x8x512xbf16>
    %48 = vector.shape_cast %47 : vector<1x8x512xbf16> to vector<8x512xbf16>
    %49 = arith.extf %48 : vector<8x512xbf16> to vector<8x512xf32>
    %50 = arith.truncf %44 : vector<8x128xf32> to vector<8x128xbf16>
    %c0_24 = arith.constant 0 : index
    %c0_25 = arith.constant 0 : index
    %51 = vector.load %arg2[%c0_24, %c0_25] : memref<128x512xbf16, #tpu.memory_space<vmem>>, vector<128x512xbf16>
    %cst_26 = arith.constant dense<0.000000e+00> : vector<8x512xf32>
    %52 = tpu.matmul %50, %51, %cst_26 {dimension_numbers = #tpu.dot_dimension_numbers<[1], [0], [0], [1], [0, 0, 1, 1], [], []>} : vector<8x128xbf16>, vector<128x512xbf16>, vector<8x512xf32> -> vector<8x512xf32>
    %53 = arith.addf %49, %52 : vector<8x512xf32>
    %54 = vector.extract_strided_slice %53 {offsets = [0, 0], sizes = [8, 128], strides = [1, 1]} : vector<8x512xf32> to vector<8x128xf32>
    %55 = arith.negf %54 : vector<8x128xf32>
    %56 = math.exp %55 : vector<8x128xf32>
    %cst_27 = arith.constant 1.000000e+00 : f32
    %57 = vector.broadcast %cst_27 : f32 to vector<8x128xf32>
    %58 = arith.addf %57, %56 : vector<8x128xf32>
    %59 = arith.divf %57, %58 : vector<8x128xf32>
    %60 = vector.extract_strided_slice %53 {offsets = [0, 128], sizes = [8, 128], strides = [1, 1]} : vector<8x512xf32> to vector<8x128xf32>
    %61 = arith.negf %60 : vector<8x128xf32>
    %62 = math.exp %61 : vector<8x128xf32>
    %cst_28 = arith.constant 1.000000e+00 : f32
    %63 = vector.broadcast %cst_28 : f32 to vector<8x128xf32>
    %64 = arith.addf %63, %62 : vector<8x128xf32>
    %65 = arith.divf %63, %64 : vector<8x128xf32>
    %66 = vector.extract_strided_slice %53 {offsets = [0, 256], sizes = [8, 128], strides = [1, 1]} : vector<8x512xf32> to vector<8x128xf32>
    %67 = math.tanh %66 : vector<8x128xf32>
    %68 = vector.extract_strided_slice %53 {offsets = [0, 384], sizes = [8, 128], strides = [1, 1]} : vector<8x512xf32> to vector<8x128xf32>
    %69 = arith.negf %68 : vector<8x128xf32>
    %70 = math.exp %69 : vector<8x128xf32>
    %cst_29 = arith.constant 1.000000e+00 : f32
    %71 = vector.broadcast %cst_29 : f32 to vector<8x128xf32>
    %72 = arith.addf %71, %70 : vector<8x128xf32>
    %73 = arith.divf %71, %72 : vector<8x128xf32>
    %74 = arith.mulf %65, %45 : vector<8x128xf32>
    %75 = arith.mulf %59, %67 : vector<8x128xf32>
    %76 = arith.addf %74, %75 : vector<8x128xf32>
    %77 = math.tanh %76 : vector<8x128xf32>
    %78 = arith.mulf %73, %77 : vector<8x128xf32>
    %c0_30 = arith.constant 0 : index
    %c0_31 = arith.constant 0 : index
    %79 = vector.load %arg7[%c0_30, %c0_31] : memref<8x128xf32, #tpu.memory_space<vmem>>, vector<8x128xf32>
    tpu.vector_store %arg7[%c0_30, %c0_31], %76 {strides = array<i32>} : memref<8x128xf32, #tpu.memory_space<vmem>>, vector<8x128xf32>,
    %c0_32 = arith.constant 0 : index
    %c0_33 = arith.constant 0 : index
    %80 = vector.load %arg6[%c0_32, %c0_33] : memref<8x128xf32, #tpu.memory_space<vmem>>, vector<8x128xf32>
    tpu.vector_store %arg6[%c0_32, %c0_33], %78 {strides = array<i32>} : memref<8x128xf32, #tpu.memory_space<vmem>>, vector<8x128xf32>,
    %81 = arith.index_cast %c1_i32 : i32 to index
    %c0_34 = arith.constant 0 : index
    %c0_35 = arith.constant 0 : index
    %82 = vector.load %arg8[%81, %c0_34, %c0_35] : memref<8x8x128xf32, #tpu.memory_space<vmem>>, vector<1x8x128xf32>
    %83 = vector.shape_cast %82 : vector<1x8x128xf32> to vector<8x128xf32>
    %84 = vector.shape_cast %78 : vector<8x128xf32> to vector<1x8x128xf32>
    tpu.vector_store %arg8[%81, %c0_34, %c0_35], %84 {strides = array<i32>} : memref<8x8x128xf32, #tpu.memory_space<vmem>>, vector<1x8x128xf32>,
    %c2_i32 = arith.constant 2 : i32
    %c0_36 = arith.constant 0 : index
    %c0_37 = arith.constant 0 : index
    %85 = vector.load %arg6[%c0_36, %c0_37] : memref<8x128xf32, #tpu.memory_space<vmem>>, vector<8x128xf32>
    %c0_38 = arith.constant 0 : index
    %c0_39 = arith.constant 0 : index
    %86 = vector.load %arg7[%c0_38, %c0_39] : memref<8x128xf32, #tpu.memory_space<vmem>>, vector<8x128xf32>
    %87 = arith.index_cast %c2_i32 : i32 to index
    %c0_40 = arith.constant 0 : index
    %c0_41 = arith.constant 0 : index
    %88 = vector.load %arg1[%87, %c0_40, %c0_41] : memref<8x8x512xbf16, #tpu.memory_space<vmem>>, vector<1x8x512xbf16>
    %89 = vector.shape_cast %88 : vector<1x8x512xbf16> to vector<8x512xbf16>
    %90 = arith.extf %89 : vector<8x512xbf16> to vector<8x512xf32>
    %91 = arith.truncf %85 : vector<8x128xf32> to vector<8x128xbf16>
    %c0_42 = arith.constant 0 : index
    %c0_43 = arith.constant 0 : index
    %92 = vector.load %arg2[%c0_42, %c0_43] : memref<128x512xbf16, #tpu.memory_space<vmem>>, vector<128x512xbf16>
    %cst_44 = arith.constant dense<0.000000e+00> : vector<8x512xf32>
    %93 = tpu.matmul %91, %92, %cst_44 {dimension_numbers = #tpu.dot_dimension_numbers<[1], [0], [0], [1], [0, 0, 1, 1], [], []>} : vector<8x128xbf16>, vector<128x512xbf16>, vector<8x512xf32> -> vector<8x512xf32>
    %94 = arith.addf %90, %93 : vector<8x512xf32>
    %95 = vector.extract_strided_slice %94 {offsets = [0, 0], sizes = [8, 128], strides = [1, 1]} : vector<8x512xf32> to vector<8x128xf32>
    %96 = arith.negf %95 : vector<8x128xf32>
    %97 = math.exp %96 : vector<8x128xf32>
    %cst_45 = arith.constant 1.000000e+00 : f32
    %98 = vector.broadcast %cst_45 : f32 to vector<8x128xf32>
    %99 = arith.addf %98, %97 : vector<8x128xf32>
    %100 = arith.divf %98, %99 : vector<8x128xf32>
    %101 = vector.extract_strided_slice %94 {offsets = [0, 128], sizes = [8, 128], strides = [1, 1]} : vector<8x512xf32> to vector<8x128xf32>
    %102 = arith.negf %101 : vector<8x128xf32>
    %103 = math.exp %102 : vector<8x128xf32>
    %cst_46 = arith.constant 1.000000e+00 : f32
    %104 = vector.broadcast %cst_46 : f32 to vector<8x128xf32>
    %105 = arith.addf %104, %103 : vector<8x128xf32>
    %106 = arith.divf %104, %105 : vector<8x128xf32>
    %107 = vector.extract_strided_slice %94 {offsets = [0, 256], sizes = [8, 128], strides = [1, 1]} : vector<8x512xf32> to vector<8x128xf32>
    %108 = math.tanh %107 : vector<8x128xf32>
    %109 = vector.extract_strided_slice %94 {offsets = [0, 384], sizes = [8, 128], strides = [1, 1]} : vector<8x512xf32> to vector<8x128xf32>
    %110 = arith.negf %109 : vector<8x128xf32>
    %111 = math.exp %110 : vector<8x128xf32>
    %cst_47 = arith.constant 1.000000e+00 : f32
    %112 = vector.broadcast %cst_47 : f32 to vector<8x128xf32>
    %113 = arith.addf %112, %111 : vector<8x128xf32>
    %114 = arith.divf %112, %113 : vector<8x128xf32>
    %115 = arith.mulf %106, %86 : vector<8x128xf32>
    %116 = arith.mulf %100, %108 : vector<8x128xf32>
    %117 = arith.addf %115, %116 : vector<8x128xf32>
    %118 = math.tanh %117 : vector<8x128xf32>
    %119 = arith.mulf %114, %118 : vector<8x128xf32>
    %c0_48 = arith.constant 0 : index
    %c0_49 = arith.constant 0 : index
    %120 = vector.load %arg7[%c0_48, %c0_49] : memref<8x128xf32, #tpu.memory_space<vmem>>, vector<8x128xf32>
    tpu.vector_store %arg7[%c0_48, %c0_49], %117 {strides = array<i32>} : memref<8x128xf32, #tpu.memory_space<vmem>>, vector<8x128xf32>,
    %c0_50 = arith.constant 0 : index
    %c0_51 = arith.constant 0 : index
    %121 = vector.load %arg6[%c0_50, %c0_51] : memref<8x128xf32, #tpu.memory_space<vmem>>, vector<8x128xf32>
    tpu.vector_store %arg6[%c0_50, %c0_51], %119 {strides = array<i32>} : memref<8x128xf32, #tpu.memory_space<vmem>>, vector<8x128xf32>,
    %122 = arith.index_cast %c2_i32 : i32 to index
    %c0_52 = arith.constant 0 : index
    %c0_53 = arith.constant 0 : index
    %123 = vector.load %arg8[%122, %c0_52, %c0_53] : memref<8x8x128xf32, #tpu.memory_space<vmem>>, vector<1x8x128xf32>
    %124 = vector.shape_cast %123 : vector<1x8x128xf32> to vector<8x128xf32>
    %125 = vector.shape_cast %119 : vector<8x128xf32> to vector<1x8x128xf32>
    tpu.vector_store %arg8[%122, %c0_52, %c0_53], %125 {strides = array<i32>} : memref<8x8x128xf32, #tpu.memory_space<vmem>>, vector<1x8x128xf32>,
    %c3_i32 = arith.constant 3 : i32
    %c0_54 = arith.constant 0 : index
    %c0_55 = arith.constant 0 : index
    %126 = vector.load %arg6[%c0_54, %c0_55] : memref<8x128xf32, #tpu.memory_space<vmem>>, vector<8x128xf32>
    %c0_56 = arith.constant 0 : index
    %c0_57 = arith.constant 0 : index
    %127 = vector.load %arg7[%c0_56, %c0_57] : memref<8x128xf32, #tpu.memory_space<vmem>>, vector<8x128xf32>
    %128 = arith.index_cast %c3_i32 : i32 to index
    %c0_58 = arith.constant 0 : index
    %c0_59 = arith.constant 0 : index
    %129 = vector.load %arg1[%128, %c0_58, %c0_59] : memref<8x8x512xbf16, #tpu.memory_space<vmem>>, vector<1x8x512xbf16>
    %130 = vector.shape_cast %129 : vector<1x8x512xbf16> to vector<8x512xbf16>
    %131 = arith.extf %130 : vector<8x512xbf16> to vector<8x512xf32>
    %132 = arith.truncf %126 : vector<8x128xf32> to vector<8x128xbf16>
    %c0_60 = arith.constant 0 : index
    %c0_61 = arith.constant 0 : index
    %133 = vector.load %arg2[%c0_60, %c0_61] : memref<128x512xbf16, #tpu.memory_space<vmem>>, vector<128x512xbf16>
    %cst_62 = arith.constant dense<0.000000e+00> : vector<8x512xf32>
    %134 = tpu.matmul %132, %133, %cst_62 {dimension_numbers = #tpu.dot_dimension_numbers<[1], [0], [0], [1], [0, 0, 1, 1], [], []>} : vector<8x128xbf16>, vector<128x512xbf16>, vector<8x512xf32> -> vector<8x512xf32>
    %135 = arith.addf %131, %134 : vector<8x512xf32>
    %136 = vector.extract_strided_slice %135 {offsets = [0, 0], sizes = [8, 128], strides = [1, 1]} : vector<8x512xf32> to vector<8x128xf32>
    %137 = arith.negf %136 : vector<8x128xf32>
    %138 = math.exp %137 : vector<8x128xf32>
    %cst_63 = arith.constant 1.000000e+00 : f32
    %139 = vector.broadcast %cst_63 : f32 to vector<8x128xf32>
    %140 = arith.addf %139, %138 : vector<8x128xf32>
    %141 = arith.divf %139, %140 : vector<8x128xf32>
    %142 = vector.extract_strided_slice %135 {offsets = [0, 128], sizes = [8, 128], strides = [1, 1]} : vector<8x512xf32> to vector<8x128xf32>
    %143 = arith.negf %142 : vector<8x128xf32>
    %144 = math.exp %143 : vector<8x128xf32>
    %cst_64 = arith.constant 1.000000e+00 : f32
    %145 = vector.broadcast %cst_64 : f32 to vector<8x128xf32>
    %146 = arith.addf %145, %144 : vector<8x128xf32>
    %147 = arith.divf %145, %146 : vector<8x128xf32>
    %148 = vector.extract_strided_slice %135 {offsets = [0, 256], sizes = [8, 128], strides = [1, 1]} : vector<8x512xf32> to vector<8x128xf32>
    %149 = math.tanh %148 : vector<8x128xf32>
    %150 = vector.extract_strided_slice %135 {offsets = [0, 384], sizes = [8, 128], strides = [1, 1]} : vector<8x512xf32> to vector<8x128xf32>
    %151 = arith.negf %150 : vector<8x128xf32>
    %152 = math.exp %151 : vector<8x128xf32>
    %cst_65 = arith.constant 1.000000e+00 : f32
    %153 = vector.broadcast %cst_65 : f32 to vector<8x128xf32>
    %154 = arith.addf %153, %152 : vector<8x128xf32>
    %155 = arith.divf %153, %154 : vector<8x128xf32>
    %156 = arith.mulf %147, %127 : vector<8x128xf32>
    %157 = arith.mulf %141, %149 : vector<8x128xf32>
    %158 = arith.addf %156, %157 : vector<8x128xf32>
    %159 = math.tanh %158 : vector<8x128xf32>
    %160 = arith.mulf %155, %159 : vector<8x128xf32>
    %c0_66 = arith.constant 0 : index
    %c0_67 = arith.constant 0 : index
    %161 = vector.load %arg7[%c0_66, %c0_67] : memref<8x128xf32, #tpu.memory_space<vmem>>, vector<8x128xf32>
    tpu.vector_store %arg7[%c0_66, %c0_67], %158 {strides = array<i32>} : memref<8x128xf32, #tpu.memory_space<vmem>>, vector<8x128xf32>,
    %c0_68 = arith.constant 0 : index
    %c0_69 = arith.constant 0 : index
    %162 = vector.load %arg6[%c0_68, %c0_69] : memref<8x128xf32, #tpu.memory_space<vmem>>, vector<8x128xf32>
    tpu.vector_store %arg6[%c0_68, %c0_69], %160 {strides = array<i32>} : memref<8x128xf32, #tpu.memory_space<vmem>>, vector<8x128xf32>,
    %163 = arith.index_cast %c3_i32 : i32 to index
    %c0_70 = arith.constant 0 : index
    %c0_71 = arith.constant 0 : index
    %164 = vector.load %arg8[%163, %c0_70, %c0_71] : memref<8x8x128xf32, #tpu.memory_space<vmem>>, vector<1x8x128xf32>
    %165 = vector.shape_cast %164 : vector<1x8x128xf32> to vector<8x128xf32>
    %166 = vector.shape_cast %160 : vector<8x128xf32> to vector<1x8x128xf32>
    tpu.vector_store %arg8[%163, %c0_70, %c0_71], %166 {strides = array<i32>} : memref<8x8x128xf32, #tpu.memory_space<vmem>>, vector<1x8x128xf32>,
    %c4_i32 = arith.constant 4 : i32
    %c0_72 = arith.constant 0 : index
    %c0_73 = arith.constant 0 : index
    %167 = vector.load %arg6[%c0_72, %c0_73] : memref<8x128xf32, #tpu.memory_space<vmem>>, vector<8x128xf32>
    %c0_74 = arith.constant 0 : index
    %c0_75 = arith.constant 0 : index
    %168 = vector.load %arg7[%c0_74, %c0_75] : memref<8x128xf32, #tpu.memory_space<vmem>>, vector<8x128xf32>
    %169 = arith.index_cast %c4_i32 : i32 to index
    %c0_76 = arith.constant 0 : index
    %c0_77 = arith.constant 0 : index
    %170 = vector.load %arg1[%169, %c0_76, %c0_77] : memref<8x8x512xbf16, #tpu.memory_space<vmem>>, vector<1x8x512xbf16>
    %171 = vector.shape_cast %170 : vector<1x8x512xbf16> to vector<8x512xbf16>
    %172 = arith.extf %171 : vector<8x512xbf16> to vector<8x512xf32>
    %173 = arith.truncf %167 : vector<8x128xf32> to vector<8x128xbf16>
    %c0_78 = arith.constant 0 : index
    %c0_79 = arith.constant 0 : index
    %174 = vector.load %arg2[%c0_78, %c0_79] : memref<128x512xbf16, #tpu.memory_space<vmem>>, vector<128x512xbf16>
    %cst_80 = arith.constant dense<0.000000e+00> : vector<8x512xf32>
    %175 = tpu.matmul %173, %174, %cst_80 {dimension_numbers = #tpu.dot_dimension_numbers<[1], [0], [0], [1], [0, 0, 1, 1], [], []>} : vector<8x128xbf16>, vector<128x512xbf16>, vector<8x512xf32> -> vector<8x512xf32>
    %176 = arith.addf %172, %175 : vector<8x512xf32>
    %177 = vector.extract_strided_slice %176 {offsets = [0, 0], sizes = [8, 128], strides = [1, 1]} : vector<8x512xf32> to vector<8x128xf32>
    %178 = arith.negf %177 : vector<8x128xf32>
    %179 = math.exp %178 : vector<8x128xf32>
    %cst_81 = arith.constant 1.000000e+00 : f32
    %180 = vector.broadcast %cst_81 : f32 to vector<8x128xf32>
    %181 = arith.addf %180, %179 : vector<8x128xf32>
    %182 = arith.divf %180, %181 : vector<8x128xf32>
    %183 = vector.extract_strided_slice %176 {offsets = [0, 128], sizes = [8, 128], strides = [1, 1]} : vector<8x512xf32> to vector<8x128xf32>
    %184 = arith.negf %183 : vector<8x128xf32>
    %185 = math.exp %184 : vector<8x128xf32>
    %cst_82 = arith.constant 1.000000e+00 : f32
    %186 = vector.broadcast %cst_82 : f32 to vector<8x128xf32>
    %187 = arith.addf %186, %185 : vector<8x128xf32>
    %188 = arith.divf %186, %187 : vector<8x128xf32>
    %189 = vector.extract_strided_slice %176 {offsets = [0, 256], sizes = [8, 128], strides = [1, 1]} : vector<8x512xf32> to vector<8x128xf32>
    %190 = math.tanh %189 : vector<8x128xf32>
    %191 = vector.extract_strided_slice %176 {offsets = [0, 384], sizes = [8, 128], strides = [1, 1]} : vector<8x512xf32> to vector<8x128xf32>
    %192 = arith.negf %191 : vector<8x128xf32>
    %193 = math.exp %192 : vector<8x128xf32>
    %cst_83 = arith.constant 1.000000e+00 : f32
    %194 = vector.broadcast %cst_83 : f32 to vector<8x128xf32>
    %195 = arith.addf %194, %193 : vector<8x128xf32>
    %196 = arith.divf %194, %195 : vector<8x128xf32>
    %197 = arith.mulf %188, %168 : vector<8x128xf32>
    %198 = arith.mulf %182, %190 : vector<8x128xf32>
    %199 = arith.addf %197, %198 : vector<8x128xf32>
    %200 = math.tanh %199 : vector<8x128xf32>
    %201 = arith.mulf %196, %200 : vector<8x128xf32>
    %c0_84 = arith.constant 0 : index
    %c0_85 = arith.constant 0 : index
    %202 = vector.load %arg7[%c0_84, %c0_85] : memref<8x128xf32, #tpu.memory_space<vmem>>, vector<8x128xf32>
    tpu.vector_store %arg7[%c0_84, %c0_85], %199 {strides = array<i32>} : memref<8x128xf32, #tpu.memory_space<vmem>>, vector<8x128xf32>,
    %c0_86 = arith.constant 0 : index
    %c0_87 = arith.constant 0 : index
    %203 = vector.load %arg6[%c0_86, %c0_87] : memref<8x128xf32, #tpu.memory_space<vmem>>, vector<8x128xf32>
    tpu.vector_store %arg6[%c0_86, %c0_87], %201 {strides = array<i32>} : memref<8x128xf32, #tpu.memory_space<vmem>>, vector<8x128xf32>,
    %204 = arith.index_cast %c4_i32 : i32 to index
    %c0_88 = arith.constant 0 : index
    %c0_89 = arith.constant 0 : index
    %205 = vector.load %arg8[%204, %c0_88, %c0_89] : memref<8x8x128xf32, #tpu.memory_space<vmem>>, vector<1x8x128xf32>
    %206 = vector.shape_cast %205 : vector<1x8x128xf32> to vector<8x128xf32>
    %207 = vector.shape_cast %201 : vector<8x128xf32> to vector<1x8x128xf32>
    tpu.vector_store %arg8[%204, %c0_88, %c0_89], %207 {strides = array<i32>} : memref<8x8x128xf32, #tpu.memory_space<vmem>>, vector<1x8x128xf32>,
    %c5_i32 = arith.constant 5 : i32
    %c0_90 = arith.constant 0 : index
    %c0_91 = arith.constant 0 : index
    %208 = vector.load %arg6[%c0_90, %c0_91] : memref<8x128xf32, #tpu.memory_space<vmem>>, vector<8x128xf32>
    %c0_92 = arith.constant 0 : index
    %c0_93 = arith.constant 0 : index
    %209 = vector.load %arg7[%c0_92, %c0_93] : memref<8x128xf32, #tpu.memory_space<vmem>>, vector<8x128xf32>
    %210 = arith.index_cast %c5_i32 : i32 to index
    %c0_94 = arith.constant 0 : index
    %c0_95 = arith.constant 0 : index
    %211 = vector.load %arg1[%210, %c0_94, %c0_95] : memref<8x8x512xbf16, #tpu.memory_space<vmem>>, vector<1x8x512xbf16>
    %212 = vector.shape_cast %211 : vector<1x8x512xbf16> to vector<8x512xbf16>
    %213 = arith.extf %212 : vector<8x512xbf16> to vector<8x512xf32>
    %214 = arith.truncf %208 : vector<8x128xf32> to vector<8x128xbf16>
    %c0_96 = arith.constant 0 : index
    %c0_97 = arith.constant 0 : index
    %215 = vector.load %arg2[%c0_96, %c0_97] : memref<128x512xbf16, #tpu.memory_space<vmem>>, vector<128x512xbf16>
    %cst_98 = arith.constant dense<0.000000e+00> : vector<8x512xf32>
    %216 = tpu.matmul %214, %215, %cst_98 {dimension_numbers = #tpu.dot_dimension_numbers<[1], [0], [0], [1], [0, 0, 1, 1], [], []>} : vector<8x128xbf16>, vector<128x512xbf16>, vector<8x512xf32> -> vector<8x512xf32>
    %217 = arith.addf %213, %216 : vector<8x512xf32>
    %218 = vector.extract_strided_slice %217 {offsets = [0, 0], sizes = [8, 128], strides = [1, 1]} : vector<8x512xf32> to vector<8x128xf32>
    %219 = arith.negf %218 : vector<8x128xf32>
    %220 = math.exp %219 : vector<8x128xf32>
    %cst_99 = arith.constant 1.000000e+00 : f32
    %221 = vector.broadcast %cst_99 : f32 to vector<8x128xf32>
    %222 = arith.addf %221, %220 : vector<8x128xf32>
    %223 = arith.divf %221, %222 : vector<8x128xf32>
    %224 = vector.extract_strided_slice %217 {offsets = [0, 128], sizes = [8, 128], strides = [1, 1]} : vector<8x512xf32> to vector<8x128xf32>
    %225 = arith.negf %224 : vector<8x128xf32>
    %226 = math.exp %225 : vector<8x128xf32>
    %cst_100 = arith.constant 1.000000e+00 : f32
    %227 = vector.broadcast %cst_100 : f32 to vector<8x128xf32>
    %228 = arith.addf %227, %226 : vector<8x128xf32>
    %229 = arith.divf %227, %228 : vector<8x128xf32>
    %230 = vector.extract_strided_slice %217 {offsets = [0, 256], sizes = [8, 128], strides = [1, 1]} : vector<8x512xf32> to vector<8x128xf32>
    %231 = math.tanh %230 : vector<8x128xf32>
    %232 = vector.extract_strided_slice %217 {offsets = [0, 384], sizes = [8, 128], strides = [1, 1]} : vector<8x512xf32> to vector<8x128xf32>
    %233 = arith.negf %232 : vector<8x128xf32>
    %234 = math.exp %233 : vector<8x128xf32>
    %cst_101 = arith.constant 1.000000e+00 : f32
    %235 = vector.broadcast %cst_101 : f32 to vector<8x128xf32>
    %236 = arith.addf %235, %234 : vector<8x128xf32>
    %237 = arith.divf %235, %236 : vector<8x128xf32>
    %238 = arith.mulf %229, %209 : vector<8x128xf32>
    %239 = arith.mulf %223, %231 : vector<8x128xf32>
    %240 = arith.addf %238, %239 : vector<8x128xf32>
    %241 = math.tanh %240 : vector<8x128xf32>
    %242 = arith.mulf %237, %241 : vector<8x128xf32>
    %c0_102 = arith.constant 0 : index
    %c0_103 = arith.constant 0 : index
    %243 = vector.load %arg7[%c0_102, %c0_103] : memref<8x128xf32, #tpu.memory_space<vmem>>, vector<8x128xf32>
    tpu.vector_store %arg7[%c0_102, %c0_103], %240 {strides = array<i32>} : memref<8x128xf32, #tpu.memory_space<vmem>>, vector<8x128xf32>,
    %c0_104 = arith.constant 0 : index
    %c0_105 = arith.constant 0 : index
    %244 = vector.load %arg6[%c0_104, %c0_105] : memref<8x128xf32, #tpu.memory_space<vmem>>, vector<8x128xf32>
    tpu.vector_store %arg6[%c0_104, %c0_105], %242 {strides = array<i32>} : memref<8x128xf32, #tpu.memory_space<vmem>>, vector<8x128xf32>,
    %245 = arith.index_cast %c5_i32 : i32 to index
    %c0_106 = arith.constant 0 : index
    %c0_107 = arith.constant 0 : index
    %246 = vector.load %arg8[%245, %c0_106, %c0_107] : memref<8x8x128xf32, #tpu.memory_space<vmem>>, vector<1x8x128xf32>
    %247 = vector.shape_cast %246 : vector<1x8x128xf32> to vector<8x128xf32>
    %248 = vector.shape_cast %242 : vector<8x128xf32> to vector<1x8x128xf32>
    tpu.vector_store %arg8[%245, %c0_106, %c0_107], %248 {strides = array<i32>} : memref<8x8x128xf32, #tpu.memory_space<vmem>>, vector<1x8x128xf32>,
    %c6_i32 = arith.constant 6 : i32
    %c0_108 = arith.constant 0 : index
    %c0_109 = arith.constant 0 : index
    %249 = vector.load %arg6[%c0_108, %c0_109] : memref<8x128xf32, #tpu.memory_space<vmem>>, vector<8x128xf32>
    %c0_110 = arith.constant 0 : index
    %c0_111 = arith.constant 0 : index
    %250 = vector.load %arg7[%c0_110, %c0_111] : memref<8x128xf32, #tpu.memory_space<vmem>>, vector<8x128xf32>
    %251 = arith.index_cast %c6_i32 : i32 to index
    %c0_112 = arith.constant 0 : index
    %c0_113 = arith.constant 0 : index
    %252 = vector.load %arg1[%251, %c0_112, %c0_113] : memref<8x8x512xbf16, #tpu.memory_space<vmem>>, vector<1x8x512xbf16>
    %253 = vector.shape_cast %252 : vector<1x8x512xbf16> to vector<8x512xbf16>
    %254 = arith.extf %253 : vector<8x512xbf16> to vector<8x512xf32>
    %255 = arith.truncf %249 : vector<8x128xf32> to vector<8x128xbf16>
    %c0_114 = arith.constant 0 : index
    %c0_115 = arith.constant 0 : index
    %256 = vector.load %arg2[%c0_114, %c0_115] : memref<128x512xbf16, #tpu.memory_space<vmem>>, vector<128x512xbf16>
    %cst_116 = arith.constant dense<0.000000e+00> : vector<8x512xf32>
    %257 = tpu.matmul %255, %256, %cst_116 {dimension_numbers = #tpu.dot_dimension_numbers<[1], [0], [0], [1], [0, 0, 1, 1], [], []>} : vector<8x128xbf16>, vector<128x512xbf16>, vector<8x512xf32> -> vector<8x512xf32>
    %258 = arith.addf %254, %257 : vector<8x512xf32>
    %259 = vector.extract_strided_slice %258 {offsets = [0, 0], sizes = [8, 128], strides = [1, 1]} : vector<8x512xf32> to vector<8x128xf32>
    %260 = arith.negf %259 : vector<8x128xf32>
    %261 = math.exp %260 : vector<8x128xf32>
    %cst_117 = arith.constant 1.000000e+00 : f32
    %262 = vector.broadcast %cst_117 : f32 to vector<8x128xf32>
    %263 = arith.addf %262, %261 : vector<8x128xf32>
    %264 = arith.divf %262, %263 : vector<8x128xf32>
    %265 = vector.extract_strided_slice %258 {offsets = [0, 128], sizes = [8, 128], strides = [1, 1]} : vector<8x512xf32> to vector<8x128xf32>
    %266 = arith.negf %265 : vector<8x128xf32>
    %267 = math.exp %266 : vector<8x128xf32>
    %cst_118 = arith.constant 1.000000e+00 : f32
    %268 = vector.broadcast %cst_118 : f32 to vector<8x128xf32>
    %269 = arith.addf %268, %267 : vector<8x128xf32>
    %270 = arith.divf %268, %269 : vector<8x128xf32>
    %271 = vector.extract_strided_slice %258 {offsets = [0, 256], sizes = [8, 128], strides = [1, 1]} : vector<8x512xf32> to vector<8x128xf32>
    %272 = math.tanh %271 : vector<8x128xf32>
    %273 = vector.extract_strided_slice %258 {offsets = [0, 384], sizes = [8, 128], strides = [1, 1]} : vector<8x512xf32> to vector<8x128xf32>
    %274 = arith.negf %273 : vector<8x128xf32>
    %275 = math.exp %274 : vector<8x128xf32>
    %cst_119 = arith.constant 1.000000e+00 : f32
    %276 = vector.broadcast %cst_119 : f32 to vector<8x128xf32>
    %277 = arith.addf %276, %275 : vector<8x128xf32>
    %278 = arith.divf %276, %277 : vector<8x128xf32>
    %279 = arith.mulf %270, %250 : vector<8x128xf32>
    %280 = arith.mulf %264, %272 : vector<8x128xf32>
    %281 = arith.addf %279, %280 : vector<8x128xf32>
    %282 = math.tanh %281 : vector<8x128xf32>
    %283 = arith.mulf %278, %282 : vector<8x128xf32>
    %c0_120 = arith.constant 0 : index
    %c0_121 = arith.constant 0 : index
    %284 = vector.load %arg7[%c0_120, %c0_121] : memref<8x128xf32, #tpu.memory_space<vmem>>, vector<8x128xf32>
    tpu.vector_store %arg7[%c0_120, %c0_121], %281 {strides = array<i32>} : memref<8x128xf32, #tpu.memory_space<vmem>>, vector<8x128xf32>,
    %c0_122 = arith.constant 0 : index
    %c0_123 = arith.constant 0 : index
    %285 = vector.load %arg6[%c0_122, %c0_123] : memref<8x128xf32, #tpu.memory_space<vmem>>, vector<8x128xf32>
    tpu.vector_store %arg6[%c0_122, %c0_123], %283 {strides = array<i32>} : memref<8x128xf32, #tpu.memory_space<vmem>>, vector<8x128xf32>,
    %286 = arith.index_cast %c6_i32 : i32 to index
    %c0_124 = arith.constant 0 : index
    %c0_125 = arith.constant 0 : index
    %287 = vector.load %arg8[%286, %c0_124, %c0_125] : memref<8x8x128xf32, #tpu.memory_space<vmem>>, vector<1x8x128xf32>
    %288 = vector.shape_cast %287 : vector<1x8x128xf32> to vector<8x128xf32>
    %289 = vector.shape_cast %283 : vector<8x128xf32> to vector<1x8x128xf32>
    tpu.vector_store %arg8[%286, %c0_124, %c0_125], %289 {strides = array<i32>} : memref<8x8x128xf32, #tpu.memory_space<vmem>>, vector<1x8x128xf32>,
    %c7_i32 = arith.constant 7 : i32
    %c0_126 = arith.constant 0 : index
    %c0_127 = arith.constant 0 : index
    %290 = vector.load %arg6[%c0_126, %c0_127] : memref<8x128xf32, #tpu.memory_space<vmem>>, vector<8x128xf32>
    %c0_128 = arith.constant 0 : index
    %c0_129 = arith.constant 0 : index
    %291 = vector.load %arg7[%c0_128, %c0_129] : memref<8x128xf32, #tpu.memory_space<vmem>>, vector<8x128xf32>
    %292 = arith.index_cast %c7_i32 : i32 to index
    %c0_130 = arith.constant 0 : index
    %c0_131 = arith.constant 0 : index
    %293 = vector.load %arg1[%292, %c0_130, %c0_131] : memref<8x8x512xbf16, #tpu.memory_space<vmem>>, vector<1x8x512xbf16>
    %294 = vector.shape_cast %293 : vector<1x8x512xbf16> to vector<8x512xbf16>
    %295 = arith.extf %294 : vector<8x512xbf16> to vector<8x512xf32>
    %296 = arith.truncf %290 : vector<8x128xf32> to vector<8x128xbf16>
    %c0_132 = arith.constant 0 : index
    %c0_133 = arith.constant 0 : index
    %297 = vector.load %arg2[%c0_132, %c0_133] : memref<128x512xbf16, #tpu.memory_space<vmem>>, vector<128x512xbf16>
    %cst_134 = arith.constant dense<0.000000e+00> : vector<8x512xf32>
    %298 = tpu.matmul %296, %297, %cst_134 {dimension_numbers = #tpu.dot_dimension_numbers<[1], [0], [0], [1], [0, 0, 1, 1], [], []>} : vector<8x128xbf16>, vector<128x512xbf16>, vector<8x512xf32> -> vector<8x512xf32>
    %299 = arith.addf %295, %298 : vector<8x512xf32>
    %300 = vector.extract_strided_slice %299 {offsets = [0, 0], sizes = [8, 128], strides = [1, 1]} : vector<8x512xf32> to vector<8x128xf32>
    %301 = arith.negf %300 : vector<8x128xf32>
    %302 = math.exp %301 : vector<8x128xf32>
    %cst_135 = arith.constant 1.000000e+00 : f32
    %303 = vector.broadcast %cst_135 : f32 to vector<8x128xf32>
    %304 = arith.addf %303, %302 : vector<8x128xf32>
    %305 = arith.divf %303, %304 : vector<8x128xf32>
    %306 = vector.extract_strided_slice %299 {offsets = [0, 128], sizes = [8, 128], strides = [1, 1]} : vector<8x512xf32> to vector<8x128xf32>
    %307 = arith.negf %306 : vector<8x128xf32>
    %308 = math.exp %307 : vector<8x128xf32>
    %cst_136 = arith.constant 1.000000e+00 : f32
    %309 = vector.broadcast %cst_136 : f32 to vector<8x128xf32>
    %310 = arith.addf %309, %308 : vector<8x128xf32>
    %311 = arith.divf %309, %310 : vector<8x128xf32>
    %312 = vector.extract_strided_slice %299 {offsets = [0, 256], sizes = [8, 128], strides = [1, 1]} : vector<8x512xf32> to vector<8x128xf32>
    %313 = math.tanh %312 : vector<8x128xf32>
    %314 = vector.extract_strided_slice %299 {offsets = [0, 384], sizes = [8, 128], strides = [1, 1]} : vector<8x512xf32> to vector<8x128xf32>
    %315 = arith.negf %314 : vector<8x128xf32>
    %316 = math.exp %315 : vector<8x128xf32>
    %cst_137 = arith.constant 1.000000e+00 : f32
    %317 = vector.broadcast %cst_137 : f32 to vector<8x128xf32>
    %318 = arith.addf %317, %316 : vector<8x128xf32>
    %319 = arith.divf %317, %318 : vector<8x128xf32>
    %320 = arith.mulf %311, %291 : vector<8x128xf32>
    %321 = arith.mulf %305, %313 : vector<8x128xf32>
    %322 = arith.addf %320, %321 : vector<8x128xf32>
    %323 = math.tanh %322 : vector<8x128xf32>
    %324 = arith.mulf %319, %323 : vector<8x128xf32>
    %c0_138 = arith.constant 0 : index
    %c0_139 = arith.constant 0 : index
    %325 = vector.load %arg7[%c0_138, %c0_139] : memref<8x128xf32, #tpu.memory_space<vmem>>, vector<8x128xf32>
    tpu.vector_store %arg7[%c0_138, %c0_139], %322 {strides = array<i32>} : memref<8x128xf32, #tpu.memory_space<vmem>>, vector<8x128xf32>,
    %c0_140 = arith.constant 0 : index
    %c0_141 = arith.constant 0 : index
    %326 = vector.load %arg6[%c0_140, %c0_141] : memref<8x128xf32, #tpu.memory_space<vmem>>, vector<8x128xf32>
    tpu.vector_store %arg6[%c0_140, %c0_141], %324 {strides = array<i32>} : memref<8x128xf32, #tpu.memory_space<vmem>>, vector<8x128xf32>,
    %327 = arith.index_cast %c7_i32 : i32 to index
    %c0_142 = arith.constant 0 : index
    %c0_143 = arith.constant 0 : index
    %328 = vector.load %arg8[%327, %c0_142, %c0_143] : memref<8x8x128xf32, #tpu.memory_space<vmem>>, vector<1x8x128xf32>
    %329 = vector.shape_cast %328 : vector<1x8x128xf32> to vector<8x128xf32>
    %330 = vector.shape_cast %324 : vector<8x128xf32> to vector<1x8x128xf32>
    tpu.vector_store %arg8[%327, %c0_142, %c0_143], %330 {strides = array<i32>} : memref<8x8x128xf32, #tpu.memory_space<vmem>>, vector<1x8x128xf32>,
    %c8_i32 = arith.constant 8 : i32
    %c0_144 = arith.constant 0 : index
    %c0_145 = arith.constant 0 : index
    %c0_146 = arith.constant 0 : index
    %331 = vector.load %arg8[%c0_144, %c0_145, %c0_146] : memref<8x8x128xf32, #tpu.memory_space<vmem>>, vector<8x8x128xf32>
    %332 = vector.shape_cast %331 : vector<8x8x128xf32> to vector<64x128xf32>
    %333 = arith.truncf %332 : vector<64x128xf32> to vector<64x128xbf16>
    %c0_147 = arith.constant 0 : index
    %c0_148 = arith.constant 0 : index
    %334 = vector.load %arg3[%c0_147, %c0_148] : memref<128x128xbf16, #tpu.memory_space<vmem>>, vector<128x128xbf16>
    %cst_149 = arith.constant dense<0.000000e+00> : vector<64x128xf32>
    %335 = tpu.matmul %333, %334, %cst_149 {dimension_numbers = #tpu.dot_dimension_numbers<[1], [0], [0], [1], [0, 0, 1, 1], [], []>} : vector<64x128xbf16>, vector<128x128xbf16>, vector<64x128xf32> -> vector<64x128xf32>
    %c0_150 = arith.constant 0 : index
    %c0_151 = arith.constant 0 : index
    %336 = vector.load %arg4[%c0_150, %c0_151] : memref<1x128xf32, #tpu.memory_space<vmem>>, vector<1x128xf32>
    %337 = vector.broadcast %336 : vector<1x128xf32> to vector<64x128xf32>
    %338 = arith.addf %335, %337 : vector<64x128xf32>
    %339 = vector.shape_cast %338 : vector<64x128xf32> to vector<8x8x128xf32>
    %c0_152 = arith.constant 0 : index
    %c0_153 = arith.constant 0 : index
    %c0_154 = arith.constant 0 : index
    %340 = vector.load %arg5[%c0_152, %c0_153, %c0_154] : memref<8x8x128xf32, #tpu.memory_space<vmem>>, vector<8x8x128xf32>
    tpu.vector_store %arg5[%c0_152, %c0_153, %c0_154], %339 {strides = array<i32>} : memref<8x8x128xf32, #tpu.memory_space<vmem>>, vector<8x8x128xf32>,
    return
  }
  func.func @transform_0(%arg0: i32) -> (i32, i32, i32) {
    %c0_i32 = arith.constant 0 : i32
    %c0_i32_0 = arith.constant 0 : i32
    %c0_i32_1 = arith.constant 0 : i32
    return %arg0, %c0_i32, %c0_i32_0 : i32, i32, i32
  }
  func.func @transform_1(%arg0: i32) -> (i32, i32) {
    %c0_i32 = arith.constant 0 : i32
    %c0_i32_0 = arith.constant 0 : i32
    %c0_i32_1 = arith.constant 0 : i32
    return %c0_i32, %c0_i32_0 : i32, i32
  }
  func.func @transform_2(%arg0: i32) -> (i32, i32) {
    %c0_i32 = arith.constant 0 : i32
    %c0_i32_0 = arith.constant 0 : i32
    %c0_i32_1 = arith.constant 0 : i32
    return %c0_i32, %c0_i32_0 : i32, i32
  }
  func.func @transform_3(%arg0: i32) -> (i32, i32) {
    %c0_i32 = arith.constant 0 : i32
    %c0_i32_0 = arith.constant 0 : i32
    %c0_i32_1 = arith.constant 0 : i32
    return %c0_i32, %c0_i32_0 : i32, i32
  }
  func.func @transform_4(%arg0: i32) -> (i32, i32, i32) {
    %c0_i32 = arith.constant 0 : i32
    %c0_i32_0 = arith.constant 0 : i32
    %c0_i32_1 = arith.constant 0 : i32
    return %arg0, %c0_i32, %c0_i32_0 : i32, i32, i32
  }
}

</mosaic_0001>

<llo_original>
// kernel: tpu_custom_call.1
$region0: #{tpu_custom_call.1}
  #allocation0 [shape = 'u32[]', space=smem, size = 0x4, offset = 0x4, fixed_abs, tag = 'smem constant byte address 0x4 - core index']
  #allocation1 [shape = 'u32[144,128]{1,0:T(1,128)}', space=vmem, size = 0x12000, scoped, tag = 'internal scratch']
  #allocation2 [shape = 'f32[8,128]{1,0:T(8,128)}', space=vmem, size = 0x1000, scoped, tag = 'scratch operand']
  #allocation3 [shape = 'f32[8,128]{1,0:T(8,128)}', space=vmem, size = 0x1000, scoped, tag = 'scratch operand']
  #allocation4 [shape = 'f32[8,8,128]{2,1,0:T(8,128)}', space=vmem, size = 0x8000, scoped, tag = 'scratch operand']
  %s0 = inlined_call_operand.hbm [shape: bf16[8,8,512], index: 0, kind: input, shape index: {}]
  %s1 = inlined_call_operand.hbm [shape: bf16[128,512], index: 1, kind: input, shape index: {}]
  %s2 = inlined_call_operand.hbm [shape: bf16[128,128], index: 2, kind: input, shape index: {}]
  %s3 = inlined_call_operand.vmem [shape: f32[1,128], index: 3, kind: input, shape index: {}]
  %s4 = inlined_call_operand.hbm [shape: f32[8,8,128], index: 4, kind: output, shape index: {}]
  %s5 = sld [smem:[#allocation0]]
  $region42: #{tpu_custom_call.1} parent=0
    _
  %s7 = ssub.s32 1, %s5
  %s8 = scalar_select 0, %s7, %s5
  $region1: #{tpu_custom_call.1} parent=0
    #allocation5 [shape = 'u8[65536]{0}', space=vmem, size = 0x10000, scoped, tag = 'input window, operand 0, single buffered']
    #allocation6 [shape = 's32[1]{0}', space=sflag, size = 0x4, scoped, tag = 'scoped memory for tpu_custom_call.1']
    #allocation7 [shape = 's32[1]{0}', space=sflag, size = 0x4, scoped, tag = 'scoped memory for tpu_custom_call.1']
    #allocation8 [shape = 'u8[131072]{0}', space=vmem, size = 0x20000, scoped, tag = 'input window, operand 1, single buffered']
    #allocation9 [shape = 's32[1]{0}', space=sflag, size = 0x4, scoped, tag = 'scoped memory for tpu_custom_call.1']
    #allocation10 [shape = 'u8[32768]{0}', space=vmem, size = 0x8000, scoped, tag = 'input window, operand 2, single buffered']
    #allocation11 [shape = 'u8[32768]{0}', space=vmem, size = 0x8000, scoped, tag = 'output window, operand 0, single buffered']
    %9 = vsyncpa [#allocation6], 0
    %10 = vsyncpa [#allocation9], 0
    %11 = vsyncpa [#allocation7], 0
    // Predicated region
    $region2: #{tpu_custom_call.1} parent=1 // pred_check
      _
    $region3: #{tpu_custom_call.1} parent=1 // pred_check_branch
      %13 = sbr.rel (0) target = $region5
    $region4: #{tpu_custom_call.1} parent=1 // pred_region
      %s15 = ssub.s32 2048, 2048
      %16 = vsyncadd [#allocation6], %s15
      %s17 = sshll.u32 [#allocation5], 4
      %s18 = int_to_ptr.vmem [resolvable:$true] %s17
      %23 = dma.hbm_to_vmem [thread:$0]  %s0, 2048, %s18, [#allocation6], 256, 256, 16
    $region5: #{tpu_custom_call.1} parent=1 // pred_fallthru
      _
    // Predicated region
    $region6: #{tpu_custom_call.1} parent=1 // pred_check
      _
    $region7: #{tpu_custom_call.1} parent=1 // pred_check_branch
      %25 = sbr.rel (0) target = $region9
    $region8: #{tpu_custom_call.1} parent=1 // pred_region
      %s27 = ssub.s32 4096, 4096
      %28 = vsyncadd [#allocation9], %s27
      %s29 = sshll.u32 [#allocation8], 4
      %s30 = int_to_ptr.vmem [resolvable:$true] %s29
      %35 = dma.hbm_to_vmem [thread:$0]  %s1, 4096, %s30, [#allocation9], 256, 256, 16
    $region9: #{tpu_custom_call.1} parent=1 // pred_fallthru
      _
    // Predicated region
    $region10: #{tpu_custom_call.1} parent=1 // pred_check
      _
    $region11: #{tpu_custom_call.1} parent=1 // pred_check_branch
      %37 = sbr.rel (0) target = $region13
    $region12: #{tpu_custom_call.1} parent=1 // pred_region
      %s39 = ssub.s32 1024, 1024
      %40 = vsyncadd [#allocation9], %s39
      %s41 = sshll.u32 [#allocation10], 4
      %s42 = int_to_ptr.vmem [resolvable:$true] %s41
      %47 = dma.hbm_to_vmem [thread:$0]  %s2, 1024, %s42, [#allocation9], 64, 64, 4
    $region13: #{tpu_custom_call.1} parent=1 // pred_fallthru
      _
    // Predicated region
    $region14: #{tpu_custom_call.1} parent=1 // pred_check
      _
    $region15: #{tpu_custom_call.1} parent=1 // pred_check_branch
      %49 = sbr.rel (0) target = $region17
    $region16: #{tpu_custom_call.1} parent=1 // pred_region
      _
    $region17: #{tpu_custom_call.1} parent=1 // pred_fallthru
      _
    // Predicated region
    $region18: #{tpu_custom_call.1} parent=1 // pred_check
      _
    $region19: #{tpu_custom_call.1} parent=1 // pred_check_branch
      %51 = sbr.rel (0) target = $region21
    $region20: #{tpu_custom_call.1} parent=1 // pred_region
      %52 = dma.done [#allocation6], 2048
    $region21: #{tpu_custom_call.1} parent=1 // pred_fallthru
      _
    // Predicated region
    $region22: #{tpu_custom_call.1} parent=1 // pred_check
      _
    $region23: #{tpu_custom_call.1} parent=1 // pred_check_branch
      %54 = sbr.rel (0) target = $region25
    $region24: #{tpu_custom_call.1} parent=1 // pred_region
      %55 = dma.done [#allocation9], 4096
    $region25: #{tpu_custom_call.1} parent=1 // pred_fallthru
      _
    // Predicated region
    $region26: #{tpu_custom_call.1} parent=1 // pred_check
      _
    $region27: #{tpu_custom_call.1} parent=1 // pred_check_branch
      %57 = sbr.rel (0) target = $region29
    $region28: #{tpu_custom_call.1} parent=1 // pred_region
      %58 = dma.done [#allocation9], 1024
    $region29: #{tpu_custom_call.1} parent=1 // pred_fallthru
      _
    %p60 = scmp.eq.s32.totalorder 0, 0
    // Predicated region
    $region30: #{tpu_custom_call.1} parent=1 // pred_check
      %p61 = pneg %p60
    $region31: #{tpu_custom_call.1} parent=1 // pred_check_branch
      %63 = sbr.rel (%p61) target = $region33
    $region32: #{tpu_custom_call.1} parent=1 // pred_region
      %64 = vst [vmem:[#allocation2] sm:$0xff] 0.0
      %65 = vst [vmem:[#allocation3] sm:$0xff] 0.0
    $region33: #{tpu_custom_call.1} parent=1 // pred_fallthru
      _
    %v66 = vld [vmem:[#allocation2] sm:$0xff]
    %v67 = vld [vmem:[#allocation3] sm:$0xff]
    %v68 = vld [vmem:[#allocation5] sm:$0xff]
    %v69 = vld [vmem:[#allocation5 + $0x8] sm:$0xff]
    %v70 = vunpack.c.l.bf16 %v68
    %v71 = vunpack.c.h.bf16 %v68
    %v72 = vunpack.c.l.bf16 %v69
    %v73 = vunpack.c.h.bf16 %v69
    %v74 = vpack.c.bf16 %v66, %v66
    %v75 = vld [vmem:[#allocation8] sm:$0xff]
    %v76 = vld [vmem:[#allocation8 + $0x8] sm:$0xff]
    %v77 = vld [vmem:[#allocation8 + $0x10] sm:$0xff]
    %v78 = vld [vmem:[#allocation8 + $0x18] sm:$0xff]
    %v79 = vld [vmem:[#allocation8 + $0x20] sm:$0xff]
    %v80 = vld [vmem:[#allocation8 + $0x28] sm:$0xff]
    %v81 = vld [vmem:[#allocation8 + $0x30] sm:$0xff]
    %v82 = vld [vmem:[#allocation8 + $0x38] sm:$0xff]
    %v83 = vld [vmem:[#allocation8 + $0x40] sm:$0xff]
    %v84 = vld [vmem:[#allocation8 + $0x48] sm:$0xff]
    %v85 = vld [vmem:[#allocation8 + $0x50] sm:$0xff]
    %v86 = vld [vmem:[#allocation8 + $0x58] sm:$0xff]
    %v87 = vld [vmem:[#allocation8 + $0x60] sm:$0xff]
    %v88 = vld [vmem:[#allocation8 + $0x68] sm:$0xff]
    %v89 = vld [vmem:[#allocation8 + $0x70] sm:$0xff]
    %v90 = vld [vmem:[#allocation8 + $0x78] sm:$0xff]
    %v91 = vld [vmem:[#allocation8 + $0x80] sm:$0xff]
    %v92 = vld [vmem:[#allocation8 + $0x88] sm:$0xff]
    %v93 = vld [vmem:[#allocation8 + $0x90] sm:$0xff]
    %v94 = vld [vmem:[#allocation8 + $0x98] sm:$0xff]
    %v95 = vld [vmem:[#allocation8 + $0xa0] sm:$0xff]
    %v96 = vld [vmem:[#allocation8 + $0xa8] sm:$0xff]
    %v97 = vld [vmem:[#allocation8 + $0xb0] sm:$0xff]
    %v98 = vld [vmem:[#allocation8 + $0xb8] sm:$0xff]
    %v99 = vld [vmem:[#allocation8 + $0xc0] sm:$0xff]
    %v100 = vld [vmem:[#allocation8 + $0xc8] sm:$0xff]
    %v101 = vld [vmem:[#allocation8 + $0xd0] sm:$0xff]
    %v102 = vld [vmem:[#allocation8 + $0xd8] sm:$0xff]
    %v103 = vld [vmem:[#allocation8 + $0xe0] sm:$0xff]
    %v104 = vld [vmem:[#allocation8 + $0xe8] sm:$0xff]
    %v105 = vld [vmem:[#allocation8 + $0xf0] sm:$0xff]
    %v106 = vld [vmem:[#allocation8 + $0xf8] sm:$0xff]
    %v139 = vunpack.c.l.b16 %v75
    %v140 = vunpack.c.h.b16 %v75
    %v141 = vunpack.c.l.b16 %v76
    %v142 = vunpack.c.h.b16 %v76
    %v143 = vunpack.c.l.b16 %v77
    %v144 = vunpack.c.h.b16 %v77
    %v145 = vunpack.c.l.b16 %v78
    %v146 = vunpack.c.h.b16 %v78
    %v147 = vunpack.c.l.b16 %v79
    %v148 = vunpack.c.h.b16 %v79
    %v149 = vunpack.c.l.b16 %v80
    %v150 = vunpack.c.h.b16 %v80
    %v151 = vunpack.c.l.b16 %v81
    %v152 = vunpack.c.h.b16 %v81
    %v153 = vunpack.c.l.b16 %v82
    %v154 = vunpack.c.h.b16 %v82
    %v155 = vunpack.c.l.b16 %v83
    %v156 = vunpack.c.h.b16 %v83
    %v157 = vunpack.c.l.b16 %v84
    %v158 = vunpack.c.h.b16 %v84
    %v159 = vunpack.c.l.b16 %v85
    %v160 = vunpack.c.h.b16 %v85
    %v161 = vunpack.c.l.b16 %v86
    %v162 = vunpack.c.h.b16 %v86
    %v163 = vunpack.c.l.b16 %v87
    %v164 = vunpack.c.h.b16 %v87
    %v165 = vunpack.c.l.b16 %v88
    %v166 = vunpack.c.h.b16 %v88
    %v167 = vunpack.c.l.b16 %v89
    %v168 = vunpack.c.h.b16 %v89
    %v169 = vunpack.c.l.b16 %v90
    %v170 = vunpack.c.h.b16 %v90
    %v171 = vunpack.c.l.b16 %v91
    %v172 = vunpack.c.h.b16 %v91
    %v173 = vunpack.c.l.b16 %v92
    %v174 = vunpack.c.h.b16 %v92
    %v175 = vunpack.c.l.b16 %v93
    %v176 = vunpack.c.h.b16 %v93
    %v177 = vunpack.c.l.b16 %v94
    %v178 = vunpack.c.h.b16 %v94
    %v179 = vunpack.c.l.b16 %v95
    %v180 = vunpack.c.h.b16 %v95
    %v181 = vunpack.c.l.b16 %v96
    %v182 = vunpack.c.h.b16 %v96
    %v183 = vunpack.c.l.b16 %v97
    %v184 = vunpack.c.h.b16 %v97
    %v185 = vunpack.c.l.b16 %v98
    %v186 = vunpack.c.h.b16 %v98
    %v187 = vunpack.c.l.b16 %v99
    %v188 = vunpack.c.h.b16 %v99
    %v189 = vunpack.c.l.b16 %v100
    %v190 = vunpack.c.h.b16 %v100
    %v191 = vunpack.c.l.b16 %v101
    %v192 = vunpack.c.h.b16 %v101
    %v193 = vunpack.c.l.b16 %v102
    %v194 = vunpack.c.h.b16 %v102
    %v195 = vunpack.c.l.b16 %v103
    %v196 = vunpack.c.h.b16 %v103
    %v197 = vunpack.c.l.b16 %v104
    %v198 = vunpack.c.h.b16 %v104
    %v199 = vunpack.c.l.b16 %v105
    %v200 = vunpack.c.h.b16 %v105
    %v201 = vunpack.c.l.b16 %v106
    %v202 = vunpack.c.h.b16 %v106
    %v203 = vpack.c.b16 %v143, %v139
    %v204 = vpack.c.b16 %v144, %v140
    %v205 = vpack.c.b16 %v145, %v141
    %v206 = vpack.c.b16 %v146, %v142
    %v207 = vpack.c.b16 %v151, %v147
    %v208 = vpack.c.b16 %v152, %v148
    %v209 = vpack.c.b16 %v153, %v149
    %v210 = vpack.c.b16 %v154, %v150
    %v211 = vpack.c.b16 %v159, %v155
    %v212 = vpack.c.b16 %v160, %v156
    %v213 = vpack.c.b16 %v161, %v157
    %v214 = vpack.c.b16 %v162, %v158
    %v215 = vpack.c.b16 %v167, %v163
    %v216 = vpack.c.b16 %v168, %v164
    %v217 = vpack.c.b16 %v169, %v165
    %v218 = vpack.c.b16 %v170, %v166
    %v219 = vpack.c.b16 %v175, %v171
    %v220 = vpack.c.b16 %v176, %v172
    %v221 = vpack.c.b16 %v177, %v173
    %v222 = vpack.c.b16 %v178, %v174
    %v223 = vpack.c.b16 %v183, %v179
    %v224 = vpack.c.b16 %v184, %v180
    %v225 = vpack.c.b16 %v185, %v181
    %v226 = vpack.c.b16 %v186, %v182
    %v227 = vpack.c.b16 %v191, %v187
    %v228 = vpack.c.b16 %v192, %v188
    %v229 = vpack.c.b16 %v193, %v189
    %v230 = vpack.c.b16 %v194, %v190
    %v231 = vpack.c.b16 %v199, %v195
    %v232 = vpack.c.b16 %v200, %v196
    %v233 = vpack.c.b16 %v201, %v197
    %v234 = vpack.c.b16 %v202, %v198
    %267 = vmatprep.subr.bf16.mxu0 %v204
    %268 = vmatpush1.bf16.msra.mxu0 %v203
    %269 = vmatprep.subr.bf16.mxu0 %v208
    %270 = vmatpush1.bf16.msra.mxu0 %v207
    %271 = vmatprep.subr.bf16.mxu0 %v212
    %272 = vmatpush1.bf16.msra.mxu0 %v211
    %273 = vmatprep.subr.bf16.mxu0 %v216
    %274 = vmatpush1.bf16.msra.mxu0 %v215
    %275 = vmatprep.subr.bf16.mxu0 %v220
    %276 = vmatpush1.bf16.msra.mxu0 %v219
    %277 = vmatprep.subr.bf16.mxu0 %v224
    %278 = vmatpush1.bf16.msra.mxu0 %v223
    %279 = vmatprep.subr.bf16.mxu0 %v228
    %280 = vmatpush1.bf16.msra.mxu0 %v227
    %281 = vmatprep.subr.bf16.mxu0 %v232
    %282 = vmatpush1.bf16.msra.mxu0 %v231
    %283 = vmatprep.subr.bf16.mxu0 0
    %284 = vmatpush1.bf16.msra.mxu0 0
    %285 = vmatprep.subr.bf16.mxu0 0
    %286 = vmatpush1.bf16.msra.mxu0 0
    %287 = vmatprep.subr.bf16.mxu0 0
    %288 = vmatpush1.bf16.msra.mxu0 0
    %289 = vmatprep.subr.bf16.mxu0 0
    %290 = vmatpush1.bf16.msra.mxu0 0
    %291 = vmatprep.subr.bf16.mxu0 0
    %292 = vmatpush1.bf16.msra.mxu0 0
    %293 = vmatprep.subr.bf16.mxu0 0
    %294 = vmatpush1.bf16.msra.mxu0 0
    %295 = vmatprep.subr.bf16.mxu0 0
    %296 = vmatpush1.bf16.msra.mxu0 0
    %297 = vmatprep.subr.bf16.mxu0 0
    %298 = vmatpush1.bf16.msra.mxu0 0
    %299 = vmatprep.mubr.bf16.mxu0 0
    %300 = vmatmul.mubr.bf16.gmra.mrb[0].mxu0 %v74
    %v301 = vpop.f32.mrb[0].mxu0
    %v302 = vadd.f32 0.0, %v301
    %v303 = vpop.f32.mrb[0].mxu0
    %v304 = vadd.f32 0.0, %v303
    %v305 = vpop.f32.mrb[0].mxu0
    %v306 = vpop.f32.mrb[0].mxu0
    %307 = vdwg.mxu0
    %308 = vmatprep.subr.bf16.mxu0 %v206
    %309 = vmatpush1.bf16.msra.mxu0 %v205
    %310 = vmatprep.subr.bf16.mxu0 %v210
    %311 = vmatpush1.bf16.msra.mxu0 %v209
    %312 = vmatprep.subr.bf16.mxu0 %v214
    %313 = vmatpush1.bf16.msra.mxu0 %v213
    %314 = vmatprep.subr.bf16.mxu0 %v218
    %315 = vmatpush1.bf16.msra.mxu0 %v217
    %316 = vmatprep.subr.bf16.mxu0 %v222
    %317 = vmatpush1.bf16.msra.mxu0 %v221
    %318 = vmatprep.subr.bf16.mxu0 %v226
    %319 = vmatpush1.bf16.msra.mxu0 %v225
    %320 = vmatprep.subr.bf16.mxu0 %v230
    %321 = vmatpush1.bf16.msra.mxu0 %v229
    %322 = vmatprep.subr.bf16.mxu0 %v234
    %323 = vmatpush1.bf16.msra.mxu0 %v233
    %324 = vmatprep.subr.bf16.mxu0 0
    %325 = vmatpush1.bf16.msra.mxu0 0
    %326 = vmatprep.subr.bf16.mxu0 0
    %327 = vmatpush1.bf16.msra.mxu0 0
    %328 = vmatprep.subr.bf16.mxu0 0
    %329 = vmatpush1.bf16.msra.mxu0 0
    %330 = vmatprep.subr.bf16.mxu0 0
    %331 = vmatpush1.bf16.msra.mxu0 0
    %332 = vmatprep.subr.bf16.mxu0 0
    %333 = vmatpush1.bf16.msra.mxu0 0
    %334 = vmatprep.subr.bf16.mxu0 0
    %335 = vmatpush1.bf16.msra.mxu0 0
    %336 = vmatprep.subr.bf16.mxu0 0
    %337 = vmatpush1.bf16.msra.mxu0 0
    %338 = vmatprep.subr.bf16.mxu0 0
    %339 = vmatpush1.bf16.msra.mxu0 0
    %340 = vmatprep.mubr.bf16.mxu0 0
    %341 = vmatmul.mubr.bf16.gmra.mrb[0].mxu0 %v74
    %v342 = vpop.f32.mrb[0].mxu0
    %v343 = vadd.f32 0.0, %v342
    %v344 = vpop.f32.mrb[0].mxu0
    %v345 = vadd.f32 0.0, %v344
    %v346 = vpop.f32.mrb[0].mxu0
    %v347 = vpop.f32.mrb[0].mxu0
    %348 = vdwg.mxu0
    %v349 = vadd.f32 %v70, %v302
    %v350 = vadd.f32 %v71, %v304
    %v351 = vadd.f32 %v72, %v343
    %v352 = vadd.f32 %v73, %v345
    %v353 = vxor.u32 %v349, 2147483648
    %v354 = vmul.f32 %v353, 1.442695
    %v355 = vpow.pop %v354
    %v356 = vadd.f32 %v355, 1.0
    %v357 = vrcp.pop %v356
    %v358 = vmul.f32 1.0, %v357
    %v359 = vxor.u32 %v350, 2147483648
    %v360 = vmul.f32 %v359, 1.442695
    %v361 = vpow.pop %v360
    %v362 = vadd.f32 %v361, 1.0
    %v363 = vrcp.pop %v362
    %v364 = vmul.f32 1.0, %v363
    %v365 = vtanh.pop %v351
    %v366 = vxor.u32 %v352, 2147483648
    %v367 = vmul.f32 %v366, 1.442695
    %v368 = vpow.pop %v367
    %v369 = vadd.f32 %v368, 1.0
    %v370 = vrcp.pop %v369
    %v371 = vmul.f32 1.0, %v370
    %v372 = vmul.f32 %v364, %v67
    %v373 = vmul.f32 %v358, %v365
    %v374 = vadd.f32 %v372, %v373
    %v375 = vtanh.pop %v374
    %v376 = vmul.f32 %v371, %v375
    %377 = vst [vmem:[#allocation3] sm:$0xff] %v374
    %378 = vst [vmem:[#allocation2] sm:$0xff] %v376
    %379 = vst [vmem:[#allocation4] sm:$0xff] %v376
    %v380 = vld [vmem:[#allocation2] sm:$0xff]
    %v381 = vld [vmem:[#allocation3] sm:$0xff]
    %s382 = scalar_lea.vmem [#allocation5], 16
    %v383 = vld [vmem:[%s382] sm:$0xff]
    %v384 = vld [vmem:[%s382 + $0x8] sm:$0xff]
    %v385 = vunpack.c.l.bf16 %v383
    %v386 = vunpack.c.h.bf16 %v383
    %v387 = vunpack.c.l.bf16 %v384
    %v388 = vunpack.c.h.bf16 %v384
    %v389 = vpack.c.bf16 %v380, %v380
    %v390 = vld [vmem:[#allocation8] sm:$0xff]
    %v391 = vld [vmem:[#allocation8 + $0x8] sm:$0xff]
    %v392 = vld [vmem:[#allocation8 + $0x10] sm:$0xff]
    %v393 = vld [vmem:[#allocation8 + $0x18] sm:$0xff]
    %v394 = vld [vmem:[#allocation8 + $0x20] sm:$0xff]
    %v395 = vld [vmem:[#allocation8 + $0x28] sm:$0xff]
    %v396 = vld [vmem:[#allocation8 + $0x30] sm:$0xff]
    %v397 = vld [vmem:[#allocation8 + $0x38] sm:$0xff]
    %v398 = vld [vmem:[#allocation8 + $0x40] sm:$0xff]
    %v399 = vld [vmem:[#allocation8 + $0x48] sm:$0xff]
    %v400 = vld [vmem:[#allocation8 + $0x50] sm:$0xff]
    %v401 = vld [vmem:[#allocation8 + $0x58] sm:$0xff]
    %v402 = vld [vmem:[#allocation8 + $0x60] sm:$0xff]
    %v403 = vld [vmem:[#allocation8 + $0x68] sm:$0xff]
    %v404 = vld [vmem:[#allocation8 + $0x70] sm:$0xff]
    %v405 = vld [vmem:[#allocation8 + $0x78] sm:$0xff]
    %v406 = vld [vmem:[#allocation8 + $0x80] sm:$0xff]
    %v407 = vld [vmem:[#allocation8 + $0x88] sm:$0xff]
    %v408 = vld [vmem:[#allocation8 + $0x90] sm:$0xff]
    %v409 = vld [vmem:[#allocation8 + $0x98] sm:$0xff]
    %v410 = vld [vmem:[#allocation8 + $0xa0] sm:$0xff]
    %v411 = vld [vmem:[#allocation8 + $0xa8] sm:$0xff]
    %v412 = vld [vmem:[#allocation8 + $0xb0] sm:$0xff]
    %v413 = vld [vmem:[#allocation8 + $0xb8] sm:$0xff]
    %v414 = vld [vmem:[#allocation8 + $0xc0] sm:$0xff]
    %v415 = vld [vmem:[#allocation8 + $0xc8] sm:$0xff]
    %v416 = vld [vmem:[#allocation8 + $0xd0] sm:$0xff]
    %v417 = vld [vmem:[#allocation8 + $0xd8] sm:$0xff]
    %v418 = vld [vmem:[#allocation8 + $0xe0] sm:$0xff]
    %v419 = vld [vmem:[#allocation8 + $0xe8] sm:$0xff]
    %v420 = vld [vmem:[#allocation8 + $0xf0] sm:$0xff]
    %v421 = vld [vmem:[#allocation8 + $0xf8] sm:$0xff]
    %v454 = vunpack.c.l.b16 %v390
    %v455 = vunpack.c.h.b16 %v390
    %v456 = vunpack.c.l.b16 %v391
    %v457 = vunpack.c.h.b16 %v391
    %v458 = vunpack.c.l.b16 %v392
    %v459 = vunpack.c.h.b16 %v392
    %v460 = vunpack.c.l.b16 %v393
    %v461 = vunpack.c.h.b16 %v393
    %v462 = vunpack.c.l.b16 %v394
    %v463 = vunpack.c.h.b16 %v394
    %v464 = vunpack.c.l.b16 %v395
    %v465 = vunpack.c.h.b16 %v395
    %v466 = vunpack.c.l.b16 %v396
    %v467 = vunpack.c.h.b16 %v396
    %v468 = vunpack.c.l.b16 %v397
    %v469 = vunpack.c.h.b16 %v397
    %v470 = vunpack.c.l.b16 %v398
    %v471 = vunpack.c.h.b16 %v398
    %v472 = vunpack.c.l.b16 %v399
    %v473 = vunpack.c.h.b16 %v399
    %v474 = vunpack.c.l.b16 %v400
    %v475 = vunpack.c.h.b16 %v400
    %v476 = vunpack.c.l.b16 %v401
    %v477 = vunpack.c.h.b16 %v401
    %v478 = vunpack.c.l.b16 %v402
    %v479 = vunpack.c.h.b16 %v402
    %v480 = vunpack.c.l.b16 %v403
    %v481 = vunpack.c.h.b16 %v403
    %v482 = vunpack.c.l.b16 %v404
    %v483 = vunpack.c.h.b16 %v404
    %v484 = vunpack.c.l.b16 %v405
    %v485 = vunpack.c.h.b16 %v405
    %v486 = vunpack.c.l.b16 %v406
    %v487 = vunpack.c.h.b16 %v406
    %v488 = vunpack.c.l.b16 %v407
    %v489 = vunpack.c.h.b16 %v407
    %v490 = vunpack.c.l.b16 %v408
    %v491 = vunpack.c.h.b16 %v408
    %v492 = vunpack.c.l.b16 %v409
    %v493 = vunpack.c.h.b16 %v409
    %v494 = vunpack.c.l.b16 %v410
    %v495 = vunpack.c.h.b16 %v410
    %v496 = vunpack.c.l.b16 %v411
    %v497 = vunpack.c.h.b16 %v411
    %v498 = vunpack.c.l.b16 %v412
    %v499 = vunpack.c.h.b16 %v412
    %v500 = vunpack.c.l.b16 %v413
    %v501 = vunpack.c.h.b16 %v413
    %v502 = vunpack.c.l.b16 %v414
    %v503 = vunpack.c.h.b16 %v414
    %v504 = vunpack.c.l.b16 %v415
    %v505 = vunpack.c.h.b16 %v415
    %v506 = vunpack.c.l.b16 %v416
    %v507 = vunpack.c.h.b16 %v416
    %v508 = vunpack.c.l.b16 %v417
    %v509 = vunpack.c.h.b16 %v417
    %v510 = vunpack.c.l.b16 %v418
    %v511 = vunpack.c.h.b16 %v418
    %v512 = vunpack.c.l.b16 %v419
    %v513 = vunpack.c.h.b16 %v419
    %v514 = vunpack.c.l.b16 %v420
    %v515 = vunpack.c.h.b16 %v420
    %v516 = vunpack.c.l.b16 %v421
    %v517 = vunpack.c.h.b16 %v421
    %v518 = vpack.c.b16 %v458, %v454
    %v519 = vpack.c.b16 %v459, %v455
    %v520 = vpack.c.b16 %v460, %v456
    %v521 = vpack.c.b16 %v461, %v457
    %v522 = vpack.c.b16 %v466, %v462
    %v523 = vpack.c.b16 %v467, %v463
    %v524 = vpack.c.b16 %v468, %v464
    %v525 = vpack.c.b16 %v469, %v465
    %v526 = vpack.c.b16 %v474, %v470
    %v527 = vpack.c.b16 %v475, %v471
    %v528 = vpack.c.b16 %v476, %v472
    %v529 = vpack.c.b16 %v477, %v473
    %v530 = vpack.c.b16 %v482, %v478
    %v531 = vpack.c.b16 %v483, %v479
    %v532 = vpack.c.b16 %v484, %v480
    %v533 = vpack.c.b16 %v485, %v481
    %v534 = vpack.c.b16 %v490, %v486
    %v535 = vpack.c.b16 %v491, %v487
    %v536 = vpack.c.b16 %v492, %v488
    %v537 = vpack.c.b16 %v493, %v489
    %v538 = vpack.c.b16 %v498, %v494
    %v539 = vpack.c.b16 %v499, %v495
    %v540 = vpack.c.b16 %v500, %v496
    %v541 = vpack.c.b16 %v501, %v497
    %v542 = vpack.c.b16 %v506, %v502
    %v543 = vpack.c.b16 %v507, %v503
    %v544 = vpack.c.b16 %v508, %v504
    %v545 = vpack.c.b16 %v509, %v505
    %v546 = vpack.c.b16 %v514, %v510
    %v547 = vpack.c.b16 %v515, %v511
    %v548 = vpack.c.b16 %v516, %v512
    %v549 = vpack.c.b16 %v517, %v513
    %582 = vmatprep.subr.bf16.mxu0 %v519
    %583 = vmatpush1.bf16.msra.mxu0 %v518
    %584 = vmatprep.subr.bf16.mxu0 %v523
    %585 = vmatpush1.bf16.msra.mxu0 %v522
    %586 = vmatprep.subr.bf16.mxu0 %v527
    %587 = vmatpush1.bf16.msra.mxu0 %v526
    %588 = vmatprep.subr.bf16.mxu0 %v531
    %589 = vmatpush1.bf16.msra.mxu0 %v530
    %590 = vmatprep.subr.bf16.mxu0 %v535
    %591 = vmatpush1.bf16.msra.mxu0 %v534
    %592 = vmatprep.subr.bf16.mxu0 %v539
    %593 = vmatpush1.bf16.msra.mxu0 %v538
    %594 = vmatprep.subr.bf16.mxu0 %v543
    %595 = vmatpush1.bf16.msra.mxu0 %v542
    %596 = vmatprep.subr.bf16.mxu0 %v547
    %597 = vmatpush1.bf16.msra.mxu0 %v546
    %598 = vmatprep.subr.bf16.mxu0 0
    %599 = vmatpush1.bf16.msra.mxu0 0
    %600 = vmatprep.subr.bf16.mxu0 0
    %601 = vmatpush1.bf16.msra.mxu0 0
    %602 = vmatprep.subr.bf16.mxu0 0
    %603 = vmatpush1.bf16.msra.mxu0 0
    %604 = vmatprep.subr.bf16.mxu0 0
    %605 = vmatpush1.bf16.msra.mxu0 0
    %606 = vmatprep.subr.bf16.mxu0 0
    %607 = vmatpush1.bf16.msra.mxu0 0
    %608 = vmatprep.subr.bf16.mxu0 0
    %609 = vmatpush1.bf16.msra.mxu0 0
    %610 = vmatprep.subr.bf16.mxu0 0
    %611 = vmatpush1.bf16.msra.mxu0 0
    %612 = vmatprep.subr.bf16.mxu0 0
    %613 = vmatpush1.bf16.msra.mxu0 0
    %614 = vmatprep.mubr.bf16.mxu0 0
    %615 = vmatmul.mubr.bf16.gmra.mrb[0].mxu0 %v389
    %v616 = vpop.f32.mrb[0].mxu0
    %v617 = vadd.f32 0.0, %v616
    %v618 = vpop.f32.mrb[0].mxu0
    %v619 = vadd.f32 0.0, %v618
    %v620 = vpop.f32.mrb[0].mxu0
    %v621 = vpop.f32.mrb[0].mxu0
    %622 = vdwg.mxu0
    %623 = vmatprep.subr.bf16.mxu0 %v521
    %624 = vmatpush1.bf16.msra.mxu0 %v520
    %625 = vmatprep.subr.bf16.mxu0 %v525
    %626 = vmatpush1.bf16.msra.mxu0 %v524
    %627 = vmatprep.subr.bf16.mxu0 %v529
    %628 = vmatpush1.bf16.msra.mxu0 %v528
    %629 = vmatprep.subr.bf16.mxu0 %v533
    %630 = vmatpush1.bf16.msra.mxu0 %v532
    %631 = vmatprep.subr.bf16.mxu0 %v537
    %632 = vmatpush1.bf16.msra.mxu0 %v536
    %633 = vmatprep.subr.bf16.mxu0 %v541
    %634 = vmatpush1.bf16.msra.mxu0 %v540
    %635 = vmatprep.subr.bf16.mxu0 %v545
    %636 = vmatpush1.bf16.msra.mxu0 %v544
    %637 = vmatprep.subr.bf16.mxu0 %v549
    %638 = vmatpush1.bf16.msra.mxu0 %v548
    %639 = vmatprep.subr.bf16.mxu0 0
    %640 = vmatpush1.bf16.msra.mxu0 0
    %641 = vmatprep.subr.bf16.mxu0 0
    %642 = vmatpush1.bf16.msra.mxu0 0
    %643 = vmatprep.subr.bf16.mxu0 0
    %644 = vmatpush1.bf16.msra.mxu0 0
    %645 = vmatprep.subr.bf16.mxu0 0
    %646 = vmatpush1.bf16.msra.mxu0 0
    %647 = vmatprep.subr.bf16.mxu0 0
    %648 = vmatpush1.bf16.msra.mxu0 0
    %649 = vmatprep.subr.bf16.mxu0 0
    %650 = vmatpush1.bf16.msra.mxu0 0
    %651 = vmatprep.subr.bf16.mxu0 0
    %652 = vmatpush1.bf16.msra.mxu0 0
    %653 = vmatprep.subr.bf16.mxu0 0
    %654 = vmatpush1.bf16.msra.mxu0 0
    %655 = vmatprep.mubr.bf16.mxu0 0
    %656 = vmatmul.mubr.bf16.gmra.mrb[0].mxu0 %v389
    %v657 = vpop.f32.mrb[0].mxu0
    %v658 = vadd.f32 0.0, %v657
    %v659 = vpop.f32.mrb[0].mxu0
    %v660 = vadd.f32 0.0, %v659
    %v661 = vpop.f32.mrb[0].mxu0
    %v662 = vpop.f32.mrb[0].mxu0
    %663 = vdwg.mxu0
    %v664 = vadd.f32 %v385, %v617
    %v665 = vadd.f32 %v386, %v619
    %v666 = vadd.f32 %v387, %v658
    %v667 = vadd.f32 %v388, %v660
    %v668 = vxor.u32 %v664, 2147483648
    %v669 = vmul.f32 %v668, 1.442695
    %v670 = vpow.pop %v669
    %v671 = vadd.f32 %v670, 1.0
    %v672 = vrcp.pop %v671
    %v673 = vmul.f32 1.0, %v672
    %v674 = vxor.u32 %v665, 2147483648
    %v675 = vmul.f32 %v674, 1.442695
    %v676 = vpow.pop %v675
    %v677 = vadd.f32 %v676, 1.0
    %v678 = vrcp.pop %v677
    %v679 = vmul.f32 1.0, %v678
    %v680 = vtanh.pop %v666
    %v681 = vxor.u32 %v667, 2147483648
    %v682 = vmul.f32 %v681, 1.442695
    %v683 = vpow.pop %v682
    %v684 = vadd.f32 %v683, 1.0
    %v685 = vrcp.pop %v684
    %v686 = vmul.f32 1.0, %v685
    %v687 = vmul.f32 %v679, %v381
    %v688 = vmul.f32 %v673, %v680
    %v689 = vadd.f32 %v687, %v688
    %v690 = vtanh.pop %v689
    %v691 = vmul.f32 %v686, %v690
    %692 = vst [vmem:[#allocation3] sm:$0xff] %v689
    %693 = vst [vmem:[#allocation2] sm:$0xff] %v691
    %s694 = scalar_lea.vmem [#allocation4], 8
    %695 = vst [vmem:[%s694] sm:$0xff] %v691
    %v696 = vld [vmem:[#allocation2] sm:$0xff]
    %v697 = vld [vmem:[#allocation3] sm:$0xff]
    %s698 = scalar_lea.vmem [#allocation5], 32
    %v699 = vld [vmem:[%s698] sm:$0xff]
    %v700 = vld [vmem:[%s698 + $0x8] sm:$0xff]
    %v701 = vunpack.c.l.bf16 %v699
    %v702 = vunpack.c.h.bf16 %v699
    %v703 = vunpack.c.l.bf16 %v700
    %v704 = vunpack.c.h.bf16 %v700
    %v705 = vpack.c.bf16 %v696, %v696
    %v706 = vld [vmem:[#allocation8] sm:$0xff]
    %v707 = vld [vmem:[#allocation8 + $0x8] sm:$0xff]
    %v708 = vld [vmem:[#allocation8 + $0x10] sm:$0xff]
    %v709 = vld [vmem:[#allocation8 + $0x18] sm:$0xff]
    %v710 = vld [vmem:[#allocation8 + $0x20] sm:$0xff]
    %v711 = vld [vmem:[#allocation8 + $0x28] sm:$0xff]
    %v712 = vld [vmem:[#allocation8 + $0x30] sm:$0xff]
    %v713 = vld [vmem:[#allocation8 + $0x38] sm:$0xff]
    %v714 = vld [vmem:[#allocation8 + $0x40] sm:$0xff]
    %v715 = vld [vmem:[#allocation8 + $0x48] sm:$0xff]
    %v716 = vld [vmem:[#allocation8 + $0x50] sm:$0xff]
    %v717 = vld [vmem:[#allocation8 + $0x58] sm:$0xff]
    %v718 = vld [vmem:[#allocation8 + $0x60] sm:$0xff]
    %v719 = vld [vmem:[#allocation8 + $0x68] sm:$0xff]
    %v720 = vld [vmem:[#allocation8 + $0x70] sm:$0xff]
    %v721 = vld [vmem:[#allocation8 + $0x78] sm:$0xff]
    %v722 = vld [vmem:[#allocation8 + $0x80] sm:$0xff]
    %v723 = vld [vmem:[#allocation8 + $0x88] sm:$0xff]
    %v724 = vld [vmem:[#allocation8 + $0x90] sm:$0xff]
    %v725 = vld [vmem:[#allocation8 + $0x98] sm:$0xff]
    %v726 = vld [vmem:[#allocation8 + $0xa0] sm:$0xff]
    %v727 = vld [vmem:[#allocation8 + $0xa8] sm:$0xff]
    %v728 = vld [vmem:[#allocation8 + $0xb0] sm:$0xff]
    %v729 = vld [vmem:[#allocation8 + $0xb8] sm:$0xff]
    %v730 = vld [vmem:[#allocation8 + $0xc0] sm:$0xff]
    %v731 = vld [vmem:[#allocation8 + $0xc8] sm:$0xff]
    %v732 = vld [vmem:[#allocation8 + $0xd0] sm:$0xff]
    %v733 = vld [vmem:[#allocation8 + $0xd8] sm:$0xff]
    %v734 = vld [vmem:[#allocation8 + $0xe0] sm:$0xff]
    %v735 = vld [vmem:[#allocation8 + $0xe8] sm:$0xff]
    %v736 = vld [vmem:[#allocation8 + $0xf0] sm:$0xff]
    %v737 = vld [vmem:[#allocation8 + $0xf8] sm:$0xff]
    %v770 = vunpack.c.l.b16 %v706
    %v771 = vunpack.c.h.b16 %v706
    %v772 = vunpack.c.l.b16 %v707
    %v773 = vunpack.c.h.b16 %v707
    %v774 = vunpack.c.l.b16 %v708
    %v775 = vunpack.c.h.b16 %v708
    %v776 = vunpack.c.l.b16 %v709
    %v777 = vunpack.c.h.b16 %v709
    %v778 = vunpack.c.l.b16 %v710
    %v779 = vunpack.c.h.b16 %v710
    %v780 = vunpack.c.l.b16 %v711
    %v781 = vunpack.c.h.b16 %v711
    %v782 = vunpack.c.l.b16 %v712
    %v783 = vunpack.c.h.b16 %v712
    %v784 = vunpack.c.l.b16 %v713
    %v785 = vunpack.c.h.b16 %v713
    %v786 = vunpack.c.l.b16 %v714
    %v787 = vunpack.c.h.b16 %v714
    %v788 = vunpack.c.l.b16 %v715
    %v789 = vunpack.c.h.b16 %v715
    %v790 = vunpack.c.l.b16 %v716
    %v791 = vunpack.c.h.b16 %v716
    %v792 = vunpack.c.l.b16 %v717
    %v793 = vunpack.c.h.b16 %v717
    %v794 = vunpack.c.l.b16 %v718
    %v795 = vunpack.c.h.b16 %v718
    %v796 = vunpack.c.l.b16 %v719
    %v797 = vunpack.c.h.b16 %v719
    %v798 = vunpack.c.l.b16 %v720
    %v799 = vunpack.c.h.b16 %v720
    %v800 = vunpack.c.l.b16 %v721
    %v801 = vunpack.c.h.b16 %v721
    %v802 = vunpack.c.l.b16 %v722
    %v803 = vunpack.c.h.b16 %v722
    %v804 = vunpack.c.l.b16 %v723
    %v805 = vunpack.c.h.b16 %v723
    %v806 = vunpack.c.l.b16 %v724
    %v807 = vunpack.c.h.b16 %v724
    %v808 = vunpack.c.l.b16 %v725
    %v809 = vunpack.c.h.b16 %v725
    %v810 = vunpack.c.l.b16 %v726
    %v811 = vunpack.c.h.b16 %v726
    %v812 = vunpack.c.l.b16 %v727
    %v813 = vunpack.c.h.b16 %v727
    %v814 = vunpack.c.l.b16 %v728
    %v815 = vunpack.c.h.b16 %v728
    %v816 = vunpack.c.l.b16 %v729
    %v817 = vunpack.c.h.b16 %v729
    %v818 = vunpack.c.l.b16 %v730
    %v819 = vunpack.c.h.b16 %v730
    %v820 = vunpack.c.l.b16 %v731
    %v821 = vunpack.c.h.b16 %v731
    %v822 = vunpack.c.l.b16 %v732
    %v823 = vunpack.c.h.b16 %v732
    %v824 = vunpack.c.l.b16 %v733
    %v825 = vunpack.c.h.b16 %v733
    %v826 = vunpack.c.l.b16 %v734
    %v827 = vunpack.c.h.b16 %v734
    %v828 = vunpack.c.l.b16 %v735
    %v829 = vunpack.c.h.b16 %v735
    %v830 = vunpack.c.l.b16 %v736
    %v831 = vunpack.c.h.b16 %v736
    %v832 = vunpack.c.l.b16 %v737
    %v833 = vunpack.c.h.b16 %v737
    %v834 = vpack.c.b16 %v774, %v770
    %v835 = vpack.c.b16 %v775, %v771
    %v836 = vpack.c.b16 %v776, %v772
    %v837 = vpack.c.b16 %v777, %v773
    %v838 = vpack.c.b16 %v782, %v778
    %v839 = vpack.c.b16 %v783, %v779
    %v840 = vpack.c.b16 %v784, %v780
    %v841 = vpack.c.b16 %v785, %v781
    %v842 = vpack.c.b16 %v790, %v786
    %v843 = vpack.c.b16 %v791, %v787
    %v844 = vpack.c.b16 %v792, %v788
    %v845 = vpack.c.b16 %v793, %v789
    %v846 = vpack.c.b16 %v798, %v794
    %v847 = vpack.c.b16 %v799, %v795
    %v848 = vpack.c.b16 %v800, %v796
    %v849 = vpack.c.b16 %v801, %v797
    %v850 = vpack.c.b16 %v806, %v802
    %v851 = vpack.c.b16 %v807, %v803
    %v852 = vpack.c.b16 %v808, %v804
    %v853 = vpack.c.b16 %v809, %v805
    %v854 = vpack.c.b16 %v814, %v810
    %v855 = vpack.c.b16 %v815, %v811
    %v856 = vpack.c.b16 %v816, %v812
    %v857 = vpack.c.b16 %v817, %v813
    %v858 = vpack.c.b16 %v822, %v818
    %v859 = vpack.c.b16 %v823, %v819
    %v860 = vpack.c.b16 %v824, %v820
    %v861 = vpack.c.b16 %v825, %v821
    %v862 = vpack.c.b16 %v830, %v826
    %v863 = vpack.c.b16 %v831, %v827
    %v864 = vpack.c.b16 %v832, %v828
    %v865 = vpack.c.b16 %v833, %v829
    %898 = vmatprep.subr.bf16.mxu0 %v835
    %899 = vmatpush1.bf16.msra.mxu0 %v834
    %900 = vmatprep.subr.bf16.mxu0 %v839
    %901 = vmatpush1.bf16.msra.mxu0 %v838
    %902 = vmatprep.subr.bf16.mxu0 %v843
    %903 = vmatpush1.bf16.msra.mxu0 %v842
    %904 = vmatprep.subr.bf16.mxu0 %v847
    %905 = vmatpush1.bf16.msra.mxu0 %v846
    %906 = vmatprep.subr.bf16.mxu0 %v851
    %907 = vmatpush1.bf16.msra.mxu0 %v850
    %908 = vmatprep.subr.bf16.mxu0 %v855
    %909 = vmatpush1.bf16.msra.mxu0 %v854
    %910 = vmatprep.subr.bf16.mxu0 %v859
    %911 = vmatpush1.bf16.msra.mxu0 %v858
    %912 = vmatprep.subr.bf16.mxu0 %v863
    %913 = vmatpush1.bf16.msra.mxu0 %v862
    %914 = vmatprep.subr.bf16.mxu0 0
    %915 = vmatpush1.bf16.msra.mxu0 0
    %916 = vmatprep.subr.bf16.mxu0 0
    %917 = vmatpush1.bf16.msra.mxu0 0
    %918 = vmatprep.subr.bf16.mxu0 0
    %919 = vmatpush1.bf16.msra.mxu0 0
    %920 = vmatprep.subr.bf16.mxu0 0
    %921 = vmatpush1.bf16.msra.mxu0 0
    %922 = vmatprep.subr.bf16.mxu0 0
    %923 = vmatpush1.bf16.msra.mxu0 0
    %924 = vmatprep.subr.bf16.mxu0 0
    %925 = vmatpush1.bf16.msra.mxu0 0
    %926 = vmatprep.subr.bf16.mxu0 0
    %927 = vmatpush1.bf16.msra.mxu0 0
    %928 = vmatprep.subr.bf16.mxu0 0
    %929 = vmatpush1.bf16.msra.mxu0 0
    %930 = vmatprep.mubr.bf16.mxu0 0
    %931 = vmatmul.mubr.bf16.gmra.mrb[0].mxu0 %v705
    %v932 = vpop.f32.mrb[0].mxu0
    %v933 = vadd.f32 0.0, %v932
    %v934 = vpop.f32.mrb[0].mxu0
    %v935 = vadd.f32 0.0, %v934
    %v936 = vpop.f32.mrb[0].mxu0
    %v937 = vpop.f32.mrb[0].mxu0
    %938 = vdwg.mxu0
    %939 = vmatprep.subr.bf16.mxu0 %v837
    %940 = vmatpush1.bf16.msra.mxu0 %v836
    %941 = vmatprep.subr.bf16.mxu0 %v841
    %942 = vmatpush1.bf16.msra.mxu0 %v840
    %943 = vmatprep.subr.bf16.mxu0 %v845
    %944 = vmatpush1.bf16.msra.mxu0 %v844
    %945 = vmatprep.subr.bf16.mxu0 %v849
    %946 = vmatpush1.bf16.msra.mxu0 %v848
    %947 = vmatprep.subr.bf16.mxu0 %v853
    %948 = vmatpush1.bf16.msra.mxu0 %v852
    %949 = vmatprep.subr.bf16.mxu0 %v857
    %950 = vmatpush1.bf16.msra.mxu0 %v856
    %951 = vmatprep.subr.bf16.mxu0 %v861
    %952 = vmatpush1.bf16.msra.mxu0 %v860
    %953 = vmatprep.subr.bf16.mxu0 %v865
    %954 = vmatpush1.bf16.msra.mxu0 %v864
    %955 = vmatprep.subr.bf16.mxu0 0
    %956 = vmatpush1.bf16.msra.mxu0 0
    %957 = vmatprep.subr.bf16.mxu0 0
    %958 = vmatpush1.bf16.msra.mxu0 0
    %959 = vmatprep.subr.bf16.mxu0 0
    %960 = vmatpush1.bf16.msra.mxu0 0
    %961 = vmatprep.subr.bf16.mxu0 0
    %962 = vmatpush1.bf16.msra.mxu0 0
    %963 = vmatprep.subr.bf16.mxu0 0
    %964 = vmatpush1.bf16.msra.mxu0 0
    %965 = vmatprep.subr.bf16.mxu0 0
    %966 = vmatpush1.bf16.msra.mxu0 0
    %967 = vmatprep.subr.bf16.mxu0 0
    %968 = vmatpush1.bf16.msra.mxu0 0
    %969 = vmatprep.subr.bf16.mxu0 0
    %970 = vmatpush1.bf16.msra.mxu0 0
    %971 = vmatprep.mubr.bf16.mxu0 0
    %972 = vmatmul.mubr.bf16.gmra.mrb[0].mxu0 %v705
    %v973 = vpop.f32.mrb[0].mxu0
    %v974 = vadd.f32 0.0, %v973
    %v975 = vpop.f32.mrb[0].mxu0
    %v976 = vadd.f32 0.0, %v975
    %v977 = vpop.f32.mrb[0].mxu0
    %v978 = vpop.f32.mrb[0].mxu0
    %979 = vdwg.mxu0
    %v980 = vadd.f32 %v701, %v933
    %v981 = vadd.f32 %v702, %v935
    %v982 = vadd.f32 %v703, %v974
    %v983 = vadd.f32 %v704, %v976
    %v984 = vxor.u32 %v980, 2147483648
    %v985 = vmul.f32 %v984, 1.442695
    %v986 = vpow.pop %v985
    %v987 = vadd.f32 %v986, 1.0
    %v988 = vrcp.pop %v987
    %v989 = vmul.f32 1.0, %v988
    %v990 = vxor.u32 %v981, 2147483648
    %v991 = vmul.f32 %v990, 1.442695
    %v992 = vpow.pop %v991
    %v993 = vadd.f32 %v992, 1.0
    %v994 = vrcp.pop %v993
    %v995 = vmul.f32 1.0, %v994
    %v996 = vtanh.pop %v982
    %v997 = vxor.u32 %v983, 2147483648
    %v998 = vmul.f32 %v997, 1.442695
    %v999 = vpow.pop %v998
    %v1000 = vadd.f32 %v999, 1.0
    %v1001 = vrcp.pop %v1000
    %v1002 = vmul.f32 1.0, %v1001
    %v1003 = vmul.f32 %v995, %v697
    %v1004 = vmul.f32 %v989, %v996
    %v1005 = vadd.f32 %v1003, %v1004
    %v1006 = vtanh.pop %v1005
    %v1007 = vmul.f32 %v1002, %v1006
    %1008 = vst [vmem:[#allocation3] sm:$0xff] %v1005
    %1009 = vst [vmem:[#allocation2] sm:$0xff] %v1007
    %s1010 = scalar_lea.vmem [#allocation4], 16
    %1011 = vst [vmem:[%s1010] sm:$0xff] %v1007
    %v1012 = vld [vmem:[#allocation2] sm:$0xff]
    %v1013 = vld [vmem:[#allocation3] sm:$0xff]
    %s1014 = scalar_lea.vmem [#allocation5], 48
    %v1015 = vld [vmem:[%s1014] sm:$0xff]
    %v1016 = vld [vmem:[%s1014 + $0x8] sm:$0xff]
    %v1017 = vunpack.c.l.bf16 %v1015
    %v1018 = vunpack.c.h.bf16 %v1015
    %v1019 = vunpack.c.l.bf16 %v1016
    %v1020 = vunpack.c.h.bf16 %v1016
    %v1021 = vpack.c.bf16 %v1012, %v1012
    %v1022 = vld [vmem:[#allocation8] sm:$0xff]
    %v1023 = vld [vmem:[#allocation8 + $0x8] sm:$0xff]
    %v1024 = vld [vmem:[#allocation8 + $0x10] sm:$0xff]
    %v1025 = vld [vmem:[#allocation8 + $0x18] sm:$0xff]
    %v1026 = vld [vmem:[#allocation8 + $0x20] sm:$0xff]
    %v1027 = vld [vmem:[#allocation8 + $0x28] sm:$0xff]
    %v1028 = vld [vmem:[#allocation8 + $0x30] sm:$0xff]
    %v1029 = vld [vmem:[#allocation8 + $0x38] sm:$0xff]
    %v1030 = vld [vmem:[#allocation8 + $0x40] sm:$0xff]
    %v1031 = vld [vmem:[#allocation8 + $0x48] sm:$0xff]
    %v1032 = vld [vmem:[#allocation8 + $0x50] sm:$0xff]
    %v1033 = vld [vmem:[#allocation8 + $0x58] sm:$0xff]
    %v1034 = vld [vmem:[#allocation8 + $0x60] sm:$0xff]
    %v1035 = vld [vmem:[#allocation8 + $0x68] sm:$0xff]
    %v1036 = vld [vmem:[#allocation8 + $0x70] sm:$0xff]
    %v1037 = vld [vmem:[#allocation8 + $0x78] sm:$0xff]
    %v1038 = vld [vmem:[#allocation8 + $0x80] sm:$0xff]
    %v1039 = vld [vmem:[#allocation8 + $0x88] sm:$0xff]
    %v1040 = vld [vmem:[#allocation8 + $0x90] sm:$0xff]
    %v1041 = vld [vmem:[#allocation8 + $0x98] sm:$0xff]
    %v1042 = vld [vmem:[#allocation8 + $0xa0] sm:$0xff]
    %v1043 = vld [vmem:[#allocation8 + $0xa8] sm:$0xff]
    %v1044 = vld [vmem:[#allocation8 + $0xb0] sm:$0xff]
    %v1045 = vld [vmem:[#allocation8 + $0xb8] sm:$0xff]
    %v1046 = vld [vmem:[#allocation8 + $0xc0] sm:$0xff]
    %v1047 = vld [vmem:[#allocation8 + $0xc8] sm:$0xff]
    %v1048 = vld [vmem:[#allocation8 + $0xd0] sm:$0xff]
    %v1049 = vld [vmem:[#allocation8 + $0xd8] sm:$0xff]
    %v1050 = vld [vmem:[#allocation8 + $0xe0] sm:$0xff]
    %v1051 = vld [vmem:[#allocation8 + $0xe8] sm:$0xff]
    %v1052 = vld [vmem:[#allocation8 + $0xf0] sm:$0xff]
    %v1053 = vld [vmem:[#allocation8 + $0xf8] sm:$0xff]
    %v1086 = vunpack.c.l.b16 %v1022
    %v1087 = vunpack.c.h.b16 %v1022
    %v1088 = vunpack.c.l.b16 %v1023
    %v1089 = vunpack.c.h.b16 %v1023
    %v1090 = vunpack.c.l.b16 %v1024
    %v1091 = vunpack.c.h.b16 %v1024
    %v1092 = vunpack.c.l.b16 %v1025
    %v1093 = vunpack.c.h.b16 %v1025
    %v1094 = vunpack.c.l.b16 %v1026
    %v1095 = vunpack.c.h.b16 %v1026
    %v1096 = vunpack.c.l.b16 %v1027
    %v1097 = vunpack.c.h.b16 %v1027
    %v1098 = vunpack.c.l.b16 %v1028
    %v1099 = vunpack.c.h.b16 %v1028
    %v1100 = vunpack.c.l.b16 %v1029
    %v1101 = vunpack.c.h.b16 %v1029
    %v1102 = vunpack.c.l.b16 %v1030
    %v1103 = vunpack.c.h.b16 %v1030
    %v1104 = vunpack.c.l.b16 %v1031
    %v1105 = vunpack.c.h.b16 %v1031
    %v1106 = vunpack.c.l.b16 %v1032
    %v1107 = vunpack.c.h.b16 %v1032
    %v1108 = vunpack.c.l.b16 %v1033
    %v1109 = vunpack.c.h.b16 %v1033
    %v1110 = vunpack.c.l.b16 %v1034
    %v1111 = vunpack.c.h.b16 %v1034
    %v1112 = vunpack.c.l.b16 %v1035
    %v1113 = vunpack.c.h.b16 %v1035
    %v1114 = vunpack.c.l.b16 %v1036
    %v1115 = vunpack.c.h.b16 %v1036
    %v1116 = vunpack.c.l.b16 %v1037
    %v1117 = vunpack.c.h.b16 %v1037
    %v1118 = vunpack.c.l.b16 %v1038
    %v1119 = vunpack.c.h.b16 %v1038
    %v1120 = vunpack.c.l.b16 %v1039
    %v1121 = vunpack.c.h.b16 %v1039
    %v1122 = vunpack.c.l.b16 %v1040
    %v1123 = vunpack.c.h.b16 %v1040
    %v1124 = vunpack.c.l.b16 %v1041
    %v1125 = vunpack.c.h.b16 %v1041
    %v1126 = vunpack.c.l.b16 %v1042
    %v1127 = vunpack.c.h.b16 %v1042
    %v1128 = vunpack.c.l.b16 %v1043
    %v1129 = vunpack.c.h.b16 %v1043
    %v1130 = vunpack.c.l.b16 %v1044
    %v1131 = vunpack.c.h.b16 %v1044
    %v1132 = vunpack.c.l.b16 %v1045
    %v1133 = vunpack.c.h.b16 %v1045
    %v1134 = vunpack.c.l.b16 %v1046
    %v1135 = vunpack.c.h.b16 %v1046
    %v1136 = vunpack.c.l.b16 %v1047
    %v1137 = vunpack.c.h.b16 %v1047
    %v1138 = vunpack.c.l.b16 %v1048
    %v1139 = vunpack.c.h.b16 %v1048
    %v1140 = vunpack.c.l.b16 %v1049
    %v1141 = vunpack.c.h.b16 %v1049
    %v1142 = vunpack.c.l.b16 %v1050
    %v1143 = vunpack.c.h.b16 %v1050
    %v1144 = vunpack.c.l.b16 %v1051
    %v1145 = vunpack.c.h.b16 %v1051
    %v1146 = vunpack.c.l.b16 %v1052
    %v1147 = vunpack.c.h.b16 %v1052
    %v1148 = vunpack.c.l.b16 %v1053
    %v1149 = vunpack.c.h.b16 %v1053
    %v1150 = vpack.c.b16 %v1090, %v1086
    %v1151 = vpack.c.b16 %v1091, %v1087
    %v1152 = vpack.c.b16 %v1092, %v1088
    %v1153 = vpack.c.b16 %v1093, %v1089
    %v1154 = vpack.c.b16 %v1098, %v1094
    %v1155 = vpack.c.b16 %v1099, %v1095
    %v1156 = vpack.c.b16 %v1100, %v1096
    %v1157 = vpack.c.b16 %v1101, %v1097
    %v1158 = vpack.c.b16 %v1106, %v1102
    %v1159 = vpack.c.b16 %v1107, %v1103
    %v1160 = vpack.c.b16 %v1108, %v1104
    %v1161 = vpack.c.b16 %v1109, %v1105
    %v1162 = vpack.c.b16 %v1114, %v1110
    %v1163 = vpack.c.b16 %v1115, %v1111
    %v1164 = vpack.c.b16 %v1116, %v1112
    %v1165 = vpack.c.b16 %v1117, %v1113
    %v1166 = vpack.c.b16 %v1122, %v1118
    %v1167 = vpack.c.b16 %v1123, %v1119
    %v1168 = vpack.c.b16 %v1124, %v1120
    %v1169 = vpack.c.b16 %v1125, %v1121
    %v1170 = vpack.c.b16 %v1130, %v1126
    %v1171 = vpack.c.b16 %v1131, %v1127
    %v1172 = vpack.c.b16 %v1132, %v1128
    %v1173 = vpack.c.b16 %v1133, %v1129
    %v1174 = vpack.c.b16 %v1138, %v1134
    %v1175 = vpack.c.b16 %v1139, %v1135
    %v1176 = vpack.c.b16 %v1140, %v1136
    %v1177 = vpack.c.b16 %v1141, %v1137
    %v1178 = vpack.c.b16 %v1146, %v1142
    %v1179 = vpack.c.b16 %v1147, %v1143
    %v1180 = vpack.c.b16 %v1148, %v1144
    %v1181 = vpack.c.b16 %v1149, %v1145
    %1214 = vmatprep.subr.bf16.mxu0 %v1151
    %1215 = vmatpush1.bf16.msra.mxu0 %v1150
    %1216 = vmatprep.subr.bf16.mxu0 %v1155
    %1217 = vmatpush1.bf16.msra.mxu0 %v1154
    %1218 = vmatprep.subr.bf16.mxu0 %v1159
    %1219 = vmatpush1.bf16.msra.mxu0 %v1158
    %1220 = vmatprep.subr.bf16.mxu0 %v1163
    %1221 = vmatpush1.bf16.msra.mxu0 %v1162
    %1222 = vmatprep.subr.bf16.mxu0 %v1167
    %1223 = vmatpush1.bf16.msra.mxu0 %v1166
    %1224 = vmatprep.subr.bf16.mxu0 %v1171
    %1225 = vmatpush1.bf16.msra.mxu0 %v1170
    %1226 = vmatprep.subr.bf16.mxu0 %v1175
    %1227 = vmatpush1.bf16.msra.mxu0 %v1174
    %1228 = vmatprep.subr.bf16.mxu0 %v1179
    %1229 = vmatpush1.bf16.msra.mxu0 %v1178
    %1230 = vmatprep.subr.bf16.mxu0 0
    %1231 = vmatpush1.bf16.msra.mxu0 0
    %1232 = vmatprep.subr.bf16.mxu0 0
    %1233 = vmatpush1.bf16.msra.mxu0 0
    %1234 = vmatprep.subr.bf16.mxu0 0
    %1235 = vmatpush1.bf16.msra.mxu0 0
    %1236 = vmatprep.subr.bf16.mxu0 0
    %1237 = vmatpush1.bf16.msra.mxu0 0
    %1238 = vmatprep.subr.bf16.mxu0 0
    %1239 = vmatpush1.bf16.msra.mxu0 0
    %1240 = vmatprep.subr.bf16.mxu0 0
    %1241 = vmatpush1.bf16.msra.mxu0 0
    %1242 = vmatprep.subr.bf16.mxu0 0
    %1243 = vmatpush1.bf16.msra.mxu0 0
    %1244 = vmatprep.subr.bf16.mxu0 0
    %1245 = vmatpush1.bf16.msra.mxu0 0
    %1246 = vmatprep.mubr.bf16.mxu0 0
    %1247 = vmatmul.mubr.bf16.gmra.mrb[0].mxu0 %v1021
    %v1248 = vpop.f32.mrb[0].mxu0
    %v1249 = vadd.f32 0.0, %v1248
    %v1250 = vpop.f32.mrb[0].mxu0
    %v1251 = vadd.f32 0.0, %v1250
    %v1252 = vpop.f32.mrb[0].mxu0
    %v1253 = vpop.f32.mrb[0].mxu0
    %1254 = vdwg.mxu0
    %1255 = vmatprep.subr.bf16.mxu0 %v1153
    %1256 = vmatpush1.bf16.msra.mxu0 %v1152
    %1257 = vmatprep.subr.bf16.mxu0 %v1157
    %1258 = vmatpush1.bf16.msra.mxu0 %v1156
    %1259 = vmatprep.subr.bf16.mxu0 %v1161
    %1260 = vmatpush1.bf16.msra.mxu0 %v1160
    %1261 = vmatprep.subr.bf16.mxu0 %v1165
    %1262 = vmatpush1.bf16.msra.mxu0 %v1164
    %1263 = vmatprep.subr.bf16.mxu0 %v1169
    %1264 = vmatpush1.bf16.msra.mxu0 %v1168
    %1265 = vmatprep.subr.bf16.mxu0 %v1173
    %1266 = vmatpush1.bf16.msra.mxu0 %v1172
    %1267 = vmatprep.subr.bf16.mxu0 %v1177
    %1268 = vmatpush1.bf16.msra.mxu0 %v1176
    %1269 = vmatprep.subr.bf16.mxu0 %v1181
    %1270 = vmatpush1.bf16.msra.mxu0 %v1180
    %1271 = vmatprep.subr.bf16.mxu0 0
    %1272 = vmatpush1.bf16.msra.mxu0 0
    %1273 = vmatprep.subr.bf16.mxu0 0
    %1274 = vmatpush1.bf16.msra.mxu0 0
    %1275 = vmatprep.subr.bf16.mxu0 0
    %1276 = vmatpush1.bf16.msra.mxu0 0
    %1277 = vmatprep.subr.bf16.mxu0 0
    %1278 = vmatpush1.bf16.msra.mxu0 0
    %1279 = vmatprep.subr.bf16.mxu0 0
    %1280 = vmatpush1.bf16.msra.mxu0 0
    %1281 = vmatprep.subr.bf16.mxu0 0
    %1282 = vmatpush1.bf16.msra.mxu0 0
    %1283 = vmatprep.subr.bf16.mxu0 0
    %1284 = vmatpush1.bf16.msra.mxu0 0
    %1285 = vmatprep.subr.bf16.mxu0 0
    %1286 = vmatpush1.bf16.msra.mxu0 0
    %1287 = vmatprep.mubr.bf16.mxu0 0
    %1288 = vmatmul.mubr.bf16.gmra.mrb[0].mxu0 %v1021
    %v1289 = vpop.f32.mrb[0].mxu0
    %v1290 = vadd.f32 0.0, %v1289
    %v1291 = vpop.f32.mrb[0].mxu0
    %v1292 = vadd.f32 0.0, %v1291
    %v1293 = vpop.f32.mrb[0].mxu0
    %v1294 = vpop.f32.mrb[0].mxu0
    %1295 = vdwg.mxu0
    %v1296 = vadd.f32 %v1017, %v1249
    %v1297 = vadd.f32 %v1018, %v1251
    %v1298 = vadd.f32 %v1019, %v1290
    %v1299 = vadd.f32 %v1020, %v1292
    %v1300 = vxor.u32 %v1296, 2147483648
    %v1301 = vmul.f32 %v1300, 1.442695
    %v1302 = vpow.pop %v1301
    %v1303 = vadd.f32 %v1302, 1.0
    %v1304 = vrcp.pop %v1303
    %v1305 = vmul.f32 1.0, %v1304
    %v1306 = vxor.u32 %v1297, 2147483648
    %v1307 = vmul.f32 %v1306, 1.442695
    %v1308 = vpow.pop %v1307
    %v1309 = vadd.f32 %v1308, 1.0
    %v1310 = vrcp.pop %v1309
    %v1311 = vmul.f32 1.0, %v1310
    %v1312 = vtanh.pop %v1298
    %v1313 = vxor.u32 %v1299, 2147483648
    %v1314 = vmul.f32 %v1313, 1.442695
    %v1315 = vpow.pop %v1314
    %v1316 = vadd.f32 %v1315, 1.0
    %v1317 = vrcp.pop %v1316
    %v1318 = vmul.f32 1.0, %v1317
    %v1319 = vmul.f32 %v1311, %v1013
    %v1320 = vmul.f32 %v1305, %v1312
    %v1321 = vadd.f32 %v1319, %v1320
    %v1322 = vtanh.pop %v1321
    %v1323 = vmul.f32 %v1318, %v1322
    %1324 = vst [vmem:[#allocation3] sm:$0xff] %v1321
    %1325 = vst [vmem:[#allocation2] sm:$0xff] %v1323
    %s1326 = scalar_lea.vmem [#allocation4], 24
    %1327 = vst [vmem:[%s1326] sm:$0xff] %v1323
    %v1328 = vld [vmem:[#allocation2] sm:$0xff]
    %v1329 = vld [vmem:[#allocation3] sm:$0xff]
    %s1330 = scalar_lea.vmem [#allocation5], 64
    %v1331 = vld [vmem:[%s1330] sm:$0xff]
    %v1332 = vld [vmem:[%s1330 + $0x8] sm:$0xff]
    %v1333 = vunpack.c.l.bf16 %v1331
    %v1334 = vunpack.c.h.bf16 %v1331
    %v1335 = vunpack.c.l.bf16 %v1332
    %v1336 = vunpack.c.h.bf16 %v1332
    %v1337 = vpack.c.bf16 %v1328, %v1328
    %v1338 = vld [vmem:[#allocation8] sm:$0xff]
    %v1339 = vld [vmem:[#allocation8 + $0x8] sm:$0xff]
    %v1340 = vld [vmem:[#allocation8 + $0x10] sm:$0xff]
    %v1341 = vld [vmem:[#allocation8 + $0x18] sm:$0xff]
    %v1342 = vld [vmem:[#allocation8 + $0x20] sm:$0xff]
    %v1343 = vld [vmem:[#allocation8 + $0x28] sm:$0xff]
    %v1344 = vld [vmem:[#allocation8 + $0x30] sm:$0xff]
    %v1345 = vld [vmem:[#allocation8 + $0x38] sm:$0xff]
    %v1346 = vld [vmem:[#allocation8 + $0x40] sm:$0xff]
    %v1347 = vld [vmem:[#allocation8 + $0x48] sm:$0xff]
    %v1348 = vld [vmem:[#allocation8 + $0x50] sm:$0xff]
    %v1349 = vld [vmem:[#allocation8 + $0x58] sm:$0xff]
    %v1350 = vld [vmem:[#allocation8 + $0x60] sm:$0xff]
    %v1351 = vld [vmem:[#allocation8 + $0x68] sm:$0xff]
    %v1352 = vld [vmem:[#allocation8 + $0x70] sm:$0xff]
    %v1353 = vld [vmem:[#allocation8 + $0x78] sm:$0xff]
    %v1354 = vld [vmem:[#allocation8 + $0x80] sm:$0xff]
    %v1355 = vld [vmem:[#allocation8 + $0x88] sm:$0xff]
    %v1356 = vld [vmem:[#allocation8 + $0x90] sm:$0xff]
    %v1357 = vld [vmem:[#allocation8 + $0x98] sm:$0xff]
    %v1358 = vld [vmem:[#allocation8 + $0xa0] sm:$0xff]
    %v1359 = vld [vmem:[#allocation8 + $0xa8] sm:$0xff]
    %v1360 = vld [vmem:[#allocation8 + $0xb0] sm:$0xff]
    %v1361 = vld [vmem:[#allocation8 + $0xb8] sm:$0xff]
    %v1362 = vld [vmem:[#allocation8 + $0xc0] sm:$0xff]
    %v1363 = vld [vmem:[#allocation8 + $0xc8] sm:$0xff]
    %v1364 = vld [vmem:[#allocation8 + $0xd0] sm:$0xff]
    %v1365 = vld [vmem:[#allocation8 + $0xd8] sm:$0xff]
    %v1366 = vld [vmem:[#allocation8 + $0xe0] sm:$0xff]
    %v1367 = vld [vmem:[#allocation8 + $0xe8] sm:$0xff]
    %v1368 = vld [vmem:[#allocation8 + $0xf0] sm:$0xff]
    %v1369 = vld [vmem:[#allocation8 + $0xf8] sm:$0xff]
    %v1402 = vunpack.c.l.b16 %v1338
    %v1403 = vunpack.c.h.b16 %v1338
    %v1404 = vunpack.c.l.b16 %v1339
    %v1405 = vunpack.c.h.b16 %v1339
    %v1406 = vunpack.c.l.b16 %v1340
    %v1407 = vunpack.c.h.b16 %v1340
    %v1408 = vunpack.c.l.b16 %v1341
    %v1409 = vunpack.c.h.b16 %v1341
    %v1410 = vunpack.c.l.b16 %v1342
    %v1411 = vunpack.c.h.b16 %v1342
    %v1412 = vunpack.c.l.b16 %v1343
    %v1413 = vunpack.c.h.b16 %v1343
    %v1414 = vunpack.c.l.b16 %v1344
    %v1415 = vunpack.c.h.b16 %v1344
    %v1416 = vunpack.c.l.b16 %v1345
    %v1417 = vunpack.c.h.b16 %v1345
    %v1418 = vunpack.c.l.b16 %v1346
    %v1419 = vunpack.c.h.b16 %v1346
    %v1420 = vunpack.c.l.b16 %v1347
    %v1421 = vunpack.c.h.b16 %v1347
    %v1422 = vunpack.c.l.b16 %v1348
    %v1423 = vunpack.c.h.b16 %v1348
    %v1424 = vunpack.c.l.b16 %v1349
    %v1425 = vunpack.c.h.b16 %v1349
    %v1426 = vunpack.c.l.b16 %v1350
    %v1427 = vunpack.c.h.b16 %v1350
    %v1428 = vunpack.c.l.b16 %v1351
    %v1429 = vunpack.c.h.b16 %v1351
    %v1430 = vunpack.c.l.b16 %v1352
    %v1431 = vunpack.c.h.b16 %v1352
    %v1432 = vunpack.c.l.b16 %v1353
    %v1433 = vunpack.c.h.b16 %v1353
    %v1434 = vunpack.c.l.b16 %v1354
    %v1435 = vunpack.c.h.b16 %v1354
    %v1436 = vunpack.c.l.b16 %v1355
    %v1437 = vunpack.c.h.b16 %v1355
    %v1438 = vunpack.c.l.b16 %v1356
    %v1439 = vunpack.c.h.b16 %v1356
    %v1440 = vunpack.c.l.b16 %v1357
    %v1441 = vunpack.c.h.b16 %v1357
    %v1442 = vunpack.c.l.b16 %v1358
    %v1443 = vunpack.c.h.b16 %v1358
    %v1444 = vunpack.c.l.b16 %v1359
    %v1445 = vunpack.c.h.b16 %v1359
    %v1446 = vunpack.c.l.b16 %v1360
    %v1447 = vunpack.c.h.b16 %v1360
    %v1448 = vunpack.c.l.b16 %v1361
    %v1449 = vunpack.c.h.b16 %v1361
    %v1450 = vunpack.c.l.b16 %v1362
    %v1451 = vunpack.c.h.b16 %v1362
    %v1452 = vunpack.c.l.b16 %v1363
    %v1453 = vunpack.c.h.b16 %v1363
    %v1454 = vunpack.c.l.b16 %v1364
    %v1455 = vunpack.c.h.b16 %v1364
    %v1456 = vunpack.c.l.b16 %v1365
    %v1457 = vunpack.c.h.b16 %v1365
    %v1458 = vunpack.c.l.b16 %v1366
    %v1459 = vunpack.c.h.b16 %v1366
    %v1460 = vunpack.c.l.b16 %v1367
    %v1461 = vunpack.c.h.b16 %v1367
    %v1462 = vunpack.c.l.b16 %v1368
    %v1463 = vunpack.c.h.b16 %v1368
    %v1464 = vunpack.c.l.b16 %v1369
    %v1465 = vunpack.c.h.b16 %v1369
    %v1466 = vpack.c.b16 %v1406, %v1402
    %v1467 = vpack.c.b16 %v1407, %v1403
    %v1468 = vpack.c.b16 %v1408, %v1404
    %v1469 = vpack.c.b16 %v1409, %v1405
    %v1470 = vpack.c.b16 %v1414, %v1410
    %v1471 = vpack.c.b16 %v1415, %v1411
    %v1472 = vpack.c.b16 %v1416, %v1412
    %v1473 = vpack.c.b16 %v1417, %v1413
    %v1474 = vpack.c.b16 %v1422, %v1418
    %v1475 = vpack.c.b16 %v1423, %v1419
    %v1476 = vpack.c.b16 %v1424, %v1420
    %v1477 = vpack.c.b16 %v1425, %v1421
    %v1478 = vpack.c.b16 %v1430, %v1426
    %v1479 = vpack.c.b16 %v1431, %v1427
    %v1480 = vpack.c.b16 %v1432, %v1428
    %v1481 = vpack.c.b16 %v1433, %v1429
    %v1482 = vpack.c.b16 %v1438, %v1434
    %v1483 = vpack.c.b16 %v1439, %v1435
    %v1484 = vpack.c.b16 %v1440, %v1436
    %v1485 = vpack.c.b16 %v1441, %v1437
    %v1486 = vpack.c.b16 %v1446, %v1442
    %v1487 = vpack.c.b16 %v1447, %v1443
    %v1488 = vpack.c.b16 %v1448, %v1444
    %v1489 = vpack.c.b16 %v1449, %v1445
    %v1490 = vpack.c.b16 %v1454, %v1450
    %v1491 = vpack.c.b16 %v1455, %v1451
    %v1492 = vpack.c.b16 %v1456, %v1452
    %v1493 = vpack.c.b16 %v1457, %v1453
    %v1494 = vpack.c.b16 %v1462, %v1458
    %v1495 = vpack.c.b16 %v1463, %v1459
    %v1496 = vpack.c.b16 %v1464, %v1460
    %v1497 = vpack.c.b16 %v1465, %v1461
    %1530 = vmatprep.subr.bf16.mxu0 %v1467
    %1531 = vmatpush1.bf16.msra.mxu0 %v1466
    %1532 = vmatprep.subr.bf16.mxu0 %v1471
    %1533 = vmatpush1.bf16.msra.mxu0 %v1470
    %1534 = vmatprep.subr.bf16.mxu0 %v1475
    %1535 = vmatpush1.bf16.msra.mxu0 %v1474
    %1536 = vmatprep.subr.bf16.mxu0 %v1479
    %1537 = vmatpush1.bf16.msra.mxu0 %v1478
    %1538 = vmatprep.subr.bf16.mxu0 %v1483
    %1539 = vmatpush1.bf16.msra.mxu0 %v1482
    %1540 = vmatprep.subr.bf16.mxu0 %v1487
    %1541 = vmatpush1.bf16.msra.mxu0 %v1486
    %1542 = vmatprep.subr.bf16.mxu0 %v1491
    %1543 = vmatpush1.bf16.msra.mxu0 %v1490
    %1544 = vmatprep.subr.bf16.mxu0 %v1495
    %1545 = vmatpush1.bf16.msra.mxu0 %v1494
    %1546 = vmatprep.subr.bf16.mxu0 0
    %1547 = vmatpush1.bf16.msra.mxu0 0
    %1548 = vmatprep.subr.bf16.mxu0 0
    %1549 = vmatpush1.bf16.msra.mxu0 0
    %1550 = vmatprep.subr.bf16.mxu0 0
    %1551 = vmatpush1.bf16.msra.mxu0 0
    %1552 = vmatprep.subr.bf16.mxu0 0
    %1553 = vmatpush1.bf16.msra.mxu0 0
    %1554 = vmatprep.subr.bf16.mxu0 0
    %1555 = vmatpush1.bf16.msra.mxu0 0
    %1556 = vmatprep.subr.bf16.mxu0 0
    %1557 = vmatpush1.bf16.msra.mxu0 0
    %1558 = vmatprep.subr.bf16.mxu0 0
    %1559 = vmatpush1.bf16.msra.mxu0 0
    %1560 = vmatprep.subr.bf16.mxu0 0
    %1561 = vmatpush1.bf16.msra.mxu0 0
    %1562 = vmatprep.mubr.bf16.mxu0 0
    %1563 = vmatmul.mubr.bf16.gmra.mrb[0].mxu0 %v1337
    %v1564 = vpop.f32.mrb[0].mxu0
    %v1565 = vadd.f32 0.0, %v1564
    %v1566 = vpop.f32.mrb[0].mxu0
    %v1567 = vadd.f32 0.0, %v1566
    %v1568 = vpop.f32.mrb[0].mxu0
    %v1569 = vpop.f32.mrb[0].mxu0
    %1570 = vdwg.mxu0
    %1571 = vmatprep.subr.bf16.mxu0 %v1469
    %1572 = vmatpush1.bf16.msra.mxu0 %v1468
    %1573 = vmatprep.subr.bf16.mxu0 %v1473
    %1574 = vmatpush1.bf16.msra.mxu0 %v1472
    %1575 = vmatprep.subr.bf16.mxu0 %v1477
    %1576 = vmatpush1.bf16.msra.mxu0 %v1476
    %1577 = vmatprep.subr.bf16.mxu0 %v1481
    %1578 = vmatpush1.bf16.msra.mxu0 %v1480
    %1579 = vmatprep.subr.bf16.mxu0 %v1485
    %1580 = vmatpush1.bf16.msra.mxu0 %v1484
    %1581 = vmatprep.subr.bf16.mxu0 %v1489
    %1582 = vmatpush1.bf16.msra.mxu0 %v1488
    %1583 = vmatprep.subr.bf16.mxu0 %v1493
    %1584 = vmatpush1.bf16.msra.mxu0 %v1492
    %1585 = vmatprep.subr.bf16.mxu0 %v1497
    %1586 = vmatpush1.bf16.msra.mxu0 %v1496
    %1587 = vmatprep.subr.bf16.mxu0 0
    %1588 = vmatpush1.bf16.msra.mxu0 0
    %1589 = vmatprep.subr.bf16.mxu0 0
    %1590 = vmatpush1.bf16.msra.mxu0 0
    %1591 = vmatprep.subr.bf16.mxu0 0
    %1592 = vmatpush1.bf16.msra.mxu0 0
    %1593 = vmatprep.subr.bf16.mxu0 0
    %1594 = vmatpush1.bf16.msra.mxu0 0
    %1595 = vmatprep.subr.bf16.mxu0 0
    %1596 = vmatpush1.bf16.msra.mxu0 0
    %1597 = vmatprep.subr.bf16.mxu0 0
    %1598 = vmatpush1.bf16.msra.mxu0 0
    %1599 = vmatprep.subr.bf16.mxu0 0
    %1600 = vmatpush1.bf16.msra.mxu0 0
    %1601 = vmatprep.subr.bf16.mxu0 0
    %1602 = vmatpush1.bf16.msra.mxu0 0
    %1603 = vmatprep.mubr.bf16.mxu0 0
    %1604 = vmatmul.mubr.bf16.gmra.mrb[0].mxu0 %v1337
    %v1605 = vpop.f32.mrb[0].mxu0
    %v1606 = vadd.f32 0.0, %v1605
    %v1607 = vpop.f32.mrb[0].mxu0
    %v1608 = vadd.f32 0.0, %v1607
    %v1609 = vpop.f32.mrb[0].mxu0
    %v1610 = vpop.f32.mrb[0].mxu0
    %1611 = vdwg.mxu0
    %v1612 = vadd.f32 %v1333, %v1565
    %v1613 = vadd.f32 %v1334, %v1567
    %v1614 = vadd.f32 %v1335, %v1606
    %v1615 = vadd.f32 %v1336, %v1608
    %v1616 = vxor.u32 %v1612, 2147483648
    %v1617 = vmul.f32 %v1616, 1.442695
    %v1618 = vpow.pop %v1617
    %v1619 = vadd.f32 %v1618, 1.0
    %v1620 = vrcp.pop %v1619
    %v1621 = vmul.f32 1.0, %v1620
    %v1622 = vxor.u32 %v1613, 2147483648
    %v1623 = vmul.f32 %v1622, 1.442695
    %v1624 = vpow.pop %v1623
    %v1625 = vadd.f32 %v1624, 1.0
    %v1626 = vrcp.pop %v1625
    %v1627 = vmul.f32 1.0, %v1626
    %v1628 = vtanh.pop %v1614
    %v1629 = vxor.u32 %v1615, 2147483648
    %v1630 = vmul.f32 %v1629, 1.442695
    %v1631 = vpow.pop %v1630
    %v1632 = vadd.f32 %v1631, 1.0
    %v1633 = vrcp.pop %v1632
    %v1634 = vmul.f32 1.0, %v1633
    %v1635 = vmul.f32 %v1627, %v1329
    %v1636 = vmul.f32 %v1621, %v1628
    %v1637 = vadd.f32 %v1635, %v1636
    %v1638 = vtanh.pop %v1637
    %v1639 = vmul.f32 %v1634, %v1638
    %1640 = vst [vmem:[#allocation3] sm:$0xff] %v1637
    %1641 = vst [vmem:[#allocation2] sm:$0xff] %v1639
    %s1642 = scalar_lea.vmem [#allocation4], 32
    %1643 = vst [vmem:[%s1642] sm:$0xff] %v1639
    %v1644 = vld [vmem:[#allocation2] sm:$0xff]
    %v1645 = vld [vmem:[#allocation3] sm:$0xff]
    %s1646 = scalar_lea.vmem [#allocation5], 80
    %v1647 = vld [vmem:[%s1646] sm:$0xff]
    %v1648 = vld [vmem:[%s1646 + $0x8] sm:$0xff]
    %v1649 = vunpack.c.l.bf16 %v1647
    %v1650 = vunpack.c.h.bf16 %v1647
    %v1651 = vunpack.c.l.bf16 %v1648
    %v1652 = vunpack.c.h.bf16 %v1648
    %v1653 = vpack.c.bf16 %v1644, %v1644
    %v1654 = vld [vmem:[#allocation8] sm:$0xff]
    %v1655 = vld [vmem:[#allocation8 + $0x8] sm:$0xff]
    %v1656 = vld [vmem:[#allocation8 + $0x10] sm:$0xff]
    %v1657 = vld [vmem:[#allocation8 + $0x18] sm:$0xff]
    %v1658 = vld [vmem:[#allocation8 + $0x20] sm:$0xff]
    %v1659 = vld [vmem:[#allocation8 + $0x28] sm:$0xff]
    %v1660 = vld [vmem:[#allocation8 + $0x30] sm:$0xff]
    %v1661 = vld [vmem:[#allocation8 + $0x38] sm:$0xff]
    %v1662 = vld [vmem:[#allocation8 + $0x40] sm:$0xff]
    %v1663 = vld [vmem:[#allocation8 + $0x48] sm:$0xff]
    %v1664 = vld [vmem:[#allocation8 + $0x50] sm:$0xff]
    %v1665 = vld [vmem:[#allocation8 + $0x58] sm:$0xff]
    %v1666 = vld [vmem:[#allocation8 + $0x60] sm:$0xff]
    %v1667 = vld [vmem:[#allocation8 + $0x68] sm:$0xff]
    %v1668 = vld [vmem:[#allocation8 + $0x70] sm:$0xff]
    %v1669 = vld [vmem:[#allocation8 + $0x78] sm:$0xff]
    %v1670 = vld [vmem:[#allocation8 + $0x80] sm:$0xff]
    %v1671 = vld [vmem:[#allocation8 + $0x88] sm:$0xff]
    %v1672 = vld [vmem:[#allocation8 + $0x90] sm:$0xff]
    %v1673 = vld [vmem:[#allocation8 + $0x98] sm:$0xff]
    %v1674 = vld [vmem:[#allocation8 + $0xa0] sm:$0xff]
    %v1675 = vld [vmem:[#allocation8 + $0xa8] sm:$0xff]
    %v1676 = vld [vmem:[#allocation8 + $0xb0] sm:$0xff]
    %v1677 = vld [vmem:[#allocation8 + $0xb8] sm:$0xff]
    %v1678 = vld [vmem:[#allocation8 + $0xc0] sm:$0xff]
    %v1679 = vld [vmem:[#allocation8 + $0xc8] sm:$0xff]
    %v1680 = vld [vmem:[#allocation8 + $0xd0] sm:$0xff]
    %v1681 = vld [vmem:[#allocation8 + $0xd8] sm:$0xff]
    %v1682 = vld [vmem:[#allocation8 + $0xe0] sm:$0xff]
    %v1683 = vld [vmem:[#allocation8 + $0xe8] sm:$0xff]
    %v1684 = vld [vmem:[#allocation8 + $0xf0] sm:$0xff]
    %v1685 = vld [vmem:[#allocation8 + $0xf8] sm:$0xff]
    %v1718 = vunpack.c.l.b16 %v1654
    %v1719 = vunpack.c.h.b16 %v1654
    %v1720 = vunpack.c.l.b16 %v1655
    %v1721 = vunpack.c.h.b16 %v1655
    %v1722 = vunpack.c.l.b16 %v1656
    %v1723 = vunpack.c.h.b16 %v1656
    %v1724 = vunpack.c.l.b16 %v1657
    %v1725 = vunpack.c.h.b16 %v1657
    %v1726 = vunpack.c.l.b16 %v1658
    %v1727 = vunpack.c.h.b16 %v1658
    %v1728 = vunpack.c.l.b16 %v1659
    %v1729 = vunpack.c.h.b16 %v1659
    %v1730 = vunpack.c.l.b16 %v1660
    %v1731 = vunpack.c.h.b16 %v1660
    %v1732 = vunpack.c.l.b16 %v1661
    %v1733 = vunpack.c.h.b16 %v1661
    %v1734 = vunpack.c.l.b16 %v1662
    %v1735 = vunpack.c.h.b16 %v1662
    %v1736 = vunpack.c.l.b16 %v1663
    %v1737 = vunpack.c.h.b16 %v1663
    %v1738 = vunpack.c.l.b16 %v1664
    %v1739 = vunpack.c.h.b16 %v1664
    %v1740 = vunpack.c.l.b16 %v1665
    %v1741 = vunpack.c.h.b16 %v1665
    %v1742 = vunpack.c.l.b16 %v1666
    %v1743 = vunpack.c.h.b16 %v1666
    %v1744 = vunpack.c.l.b16 %v1667
    %v1745 = vunpack.c.h.b16 %v1667
    %v1746 = vunpack.c.l.b16 %v1668
    %v1747 = vunpack.c.h.b16 %v1668
    %v1748 = vunpack.c.l.b16 %v1669
    %v1749 = vunpack.c.h.b16 %v1669
    %v1750 = vunpack.c.l.b16 %v1670
    %v1751 = vunpack.c.h.b16 %v1670
    %v1752 = vunpack.c.l.b16 %v1671
    %v1753 = vunpack.c.h.b16 %v1671
    %v1754 = vunpack.c.l.b16 %v1672
    %v1755 = vunpack.c.h.b16 %v1672
    %v1756 = vunpack.c.l.b16 %v1673
    %v1757 = vunpack.c.h.b16 %v1673
    %v1758 = vunpack.c.l.b16 %v1674
    %v1759 = vunpack.c.h.b16 %v1674
    %v1760 = vunpack.c.l.b16 %v1675
    %v1761 = vunpack.c.h.b16 %v1675
    %v1762 = vunpack.c.l.b16 %v1676
    %v1763 = vunpack.c.h.b16 %v1676
    %v1764 = vunpack.c.l.b16 %v1677
    %v1765 = vunpack.c.h.b16 %v1677
    %v1766 = vunpack.c.l.b16 %v1678
    %v1767 = vunpack.c.h.b16 %v1678
    %v1768 = vunpack.c.l.b16 %v1679
    %v1769 = vunpack.c.h.b16 %v1679
    %v1770 = vunpack.c.l.b16 %v1680
    %v1771 = vunpack.c.h.b16 %v1680
    %v1772 = vunpack.c.l.b16 %v1681
    %v1773 = vunpack.c.h.b16 %v1681
    %v1774 = vunpack.c.l.b16 %v1682
    %v1775 = vunpack.c.h.b16 %v1682
    %v1776 = vunpack.c.l.b16 %v1683
    %v1777 = vunpack.c.h.b16 %v1683
    %v1778 = vunpack.c.l.b16 %v1684
    %v1779 = vunpack.c.h.b16 %v1684
    %v1780 = vunpack.c.l.b16 %v1685
    %v1781 = vunpack.c.h.b16 %v1685
    %v1782 = vpack.c.b16 %v1722, %v1718
    %v1783 = vpack.c.b16 %v1723, %v1719
    %v1784 = vpack.c.b16 %v1724, %v1720
    %v1785 = vpack.c.b16 %v1725, %v1721
    %v1786 = vpack.c.b16 %v1730, %v1726
    %v1787 = vpack.c.b16 %v1731, %v1727
    %v1788 = vpack.c.b16 %v1732, %v1728
    %v1789 = vpack.c.b16 %v1733, %v1729
    %v1790 = vpack.c.b16 %v1738, %v1734
    %v1791 = vpack.c.b16 %v1739, %v1735
    %v1792 = vpack.c.b16 %v1740, %v1736
    %v1793 = vpack.c.b16 %v1741, %v1737
    %v1794 = vpack.c.b16 %v1746, %v1742
    %v1795 = vpack.c.b16 %v1747, %v1743
    %v1796 = vpack.c.b16 %v1748, %v1744
    %v1797 = vpack.c.b16 %v1749, %v1745
    %v1798 = vpack.c.b16 %v1754, %v1750
    %v1799 = vpack.c.b16 %v1755, %v1751
    %v1800 = vpack.c.b16 %v1756, %v1752
    %v1801 = vpack.c.b16 %v1757, %v1753
    %v1802 = vpack.c.b16 %v1762, %v1758
    %v1803 = vpack.c.b16 %v1763, %v1759
    %v1804 = vpack.c.b16 %v1764, %v1760
    %v1805 = vpack.c.b16 %v1765, %v1761
    %v1806 = vpack.c.b16 %v1770, %v1766
    %v1807 = vpack.c.b16 %v1771, %v1767
    %v1808 = vpack.c.b16 %v1772, %v1768
    %v1809 = vpack.c.b16 %v1773, %v1769
    %v1810 = vpack.c.b16 %v1778, %v1774
    %v1811 = vpack.c.b16 %v1779, %v1775
    %v1812 = vpack.c.b16 %v1780, %v1776
    %v1813 = vpack.c.b16 %v1781, %v1777
    %1846 = vmatprep.subr.bf16.mxu0 %v1783
    %1847 = vmatpush1.bf16.msra.mxu0 %v1782
    %1848 = vmatprep.subr.bf16.mxu0 %v1787
    %1849 = vmatpush1.bf16.msra.mxu0 %v1786
    %1850 = vmatprep.subr.bf16.mxu0 %v1791
    %1851 = vmatpush1.bf16.msra.mxu0 %v1790
    %1852 = vmatprep.subr.bf16.mxu0 %v1795
    %1853 = vmatpush1.bf16.msra.mxu0 %v1794
    %1854 = vmatprep.subr.bf16.mxu0 %v1799
    %1855 = vmatpush1.bf16.msra.mxu0 %v1798
    %1856 = vmatprep.subr.bf16.mxu0 %v1803
    %1857 = vmatpush1.bf16.msra.mxu0 %v1802
    %1858 = vmatprep.subr.bf16.mxu0 %v1807
    %1859 = vmatpush1.bf16.msra.mxu0 %v1806
    %1860 = vmatprep.subr.bf16.mxu0 %v1811
    %1861 = vmatpush1.bf16.msra.mxu0 %v1810
    %1862 = vmatprep.subr.bf16.mxu0 0
    %1863 = vmatpush1.bf16.msra.mxu0 0
    %1864 = vmatprep.subr.bf16.mxu0 0
    %1865 = vmatpush1.bf16.msra.mxu0 0
    %1866 = vmatprep.subr.bf16.mxu0 0
    %1867 = vmatpush1.bf16.msra.mxu0 0
    %1868 = vmatprep.subr.bf16.mxu0 0
    %1869 = vmatpush1.bf16.msra.mxu0 0
    %1870 = vmatprep.subr.bf16.mxu0 0
    %1871 = vmatpush1.bf16.msra.mxu0 0
    %1872 = vmatprep.subr.bf16.mxu0 0
    %1873 = vmatpush1.bf16.msra.mxu0 0
    %1874 = vmatprep.subr.bf16.mxu0 0
    %1875 = vmatpush1.bf16.msra.mxu0 0
    %1876 = vmatprep.subr.bf16.mxu0 0
    %1877 = vmatpush1.bf16.msra.mxu0 0
    %1878 = vmatprep.mubr.bf16.mxu0 0
    %1879 = vmatmul.mubr.bf16.gmra.mrb[0].mxu0 %v1653
    %v1880 = vpop.f32.mrb[0].mxu0
    %v1881 = vadd.f32 0.0, %v1880
    %v1882 = vpop.f32.mrb[0].mxu0
    %v1883 = vadd.f32 0.0, %v1882
    %v1884 = vpop.f32.mrb[0].mxu0
    %v1885 = vpop.f32.mrb[0].mxu0
    %1886 = vdwg.mxu0
    %1887 = vmatprep.subr.bf16.mxu0 %v1785
    %1888 = vmatpush1.bf16.msra.mxu0 %v1784
    %1889 = vmatprep.subr.bf16.mxu0 %v1789
    %1890 = vmatpush1.bf16.msra.mxu0 %v1788
    %1891 = vmatprep.subr.bf16.mxu0 %v1793
    %1892 = vmatpush1.bf16.msra.mxu0 %v1792
    %1893 = vmatprep.subr.bf16.mxu0 %v1797
    %1894 = vmatpush1.bf16.msra.mxu0 %v1796
    %1895 = vmatprep.subr.bf16.mxu0 %v1801
    %1896 = vmatpush1.bf16.msra.mxu0 %v1800
    %1897 = vmatprep.subr.bf16.mxu0 %v1805
    %1898 = vmatpush1.bf16.msra.mxu0 %v1804
    %1899 = vmatprep.subr.bf16.mxu0 %v1809
    %1900 = vmatpush1.bf16.msra.mxu0 %v1808
    %1901 = vmatprep.subr.bf16.mxu0 %v1813
    %1902 = vmatpush1.bf16.msra.mxu0 %v1812
    %1903 = vmatprep.subr.bf16.mxu0 0
    %1904 = vmatpush1.bf16.msra.mxu0 0
    %1905 = vmatprep.subr.bf16.mxu0 0
    %1906 = vmatpush1.bf16.msra.mxu0 0
    %1907 = vmatprep.subr.bf16.mxu0 0
    %1908 = vmatpush1.bf16.msra.mxu0 0
    %1909 = vmatprep.subr.bf16.mxu0 0
    %1910 = vmatpush1.bf16.msra.mxu0 0
    %1911 = vmatprep.subr.bf16.mxu0 0
    %1912 = vmatpush1.bf16.msra.mxu0 0
    %1913 = vmatprep.subr.bf16.mxu0 0
    %1914 = vmatpush1.bf16.msra.mxu0 0
    %1915 = vmatprep.subr.bf16.mxu0 0
    %1916 = vmatpush1.bf16.msra.mxu0 0
    %1917 = vmatprep.subr.bf16.mxu0 0
    %1918 = vmatpush1.bf16.msra.mxu0 0
    %1919 = vmatprep.mubr.bf16.mxu0 0
    %1920 = vmatmul.mubr.bf16.gmra.mrb[0].mxu0 %v1653
    %v1921 = vpop.f32.mrb[0].mxu0
    %v1922 = vadd.f32 0.0, %v1921
    %v1923 = vpop.f32.mrb[0].mxu0
    %v1924 = vadd.f32 0.0, %v1923
    %v1925 = vpop.f32.mrb[0].mxu0
    %v1926 = vpop.f32.mrb[0].mxu0
    %1927 = vdwg.mxu0
    %v1928 = vadd.f32 %v1649, %v1881
    %v1929 = vadd.f32 %v1650, %v1883
    %v1930 = vadd.f32 %v1651, %v1922
    %v1931 = vadd.f32 %v1652, %v1924
    %v1932 = vxor.u32 %v1928, 2147483648
    %v1933 = vmul.f32 %v1932, 1.442695
    %v1934 = vpow.pop %v1933
    %v1935 = vadd.f32 %v1934, 1.0
    %v1936 = vrcp.pop %v1935
    %v1937 = vmul.f32 1.0, %v1936
    %v1938 = vxor.u32 %v1929, 2147483648
    %v1939 = vmul.f32 %v1938, 1.442695
    %v1940 = vpow.pop %v1939
    %v1941 = vadd.f32 %v1940, 1.0
    %v1942 = vrcp.pop %v1941
    %v1943 = vmul.f32 1.0, %v1942
    %v1944 = vtanh.pop %v1930
    %v1945 = vxor.u32 %v1931, 2147483648
    %v1946 = vmul.f32 %v1945, 1.442695
    %v1947 = vpow.pop %v1946
    %v1948 = vadd.f32 %v1947, 1.0
    %v1949 = vrcp.pop %v1948
    %v1950 = vmul.f32 1.0, %v1949
    %v1951 = vmul.f32 %v1943, %v1645
    %v1952 = vmul.f32 %v1937, %v1944
    %v1953 = vadd.f32 %v1951, %v1952
    %v1954 = vtanh.pop %v1953
    %v1955 = vmul.f32 %v1950, %v1954
    %1956 = vst [vmem:[#allocation3] sm:$0xff] %v1953
    %1957 = vst [vmem:[#allocation2] sm:$0xff] %v1955
    %s1958 = scalar_lea.vmem [#allocation4], 40
    %1959 = vst [vmem:[%s1958] sm:$0xff] %v1955
    %v1960 = vld [vmem:[#allocation2] sm:$0xff]
    %v1961 = vld [vmem:[#allocation3] sm:$0xff]
    %s1962 = scalar_lea.vmem [#allocation5], 96
    %v1963 = vld [vmem:[%s1962] sm:$0xff]
    %v1964 = vld [vmem:[%s1962 + $0x8] sm:$0xff]
    %v1965 = vunpack.c.l.bf16 %v1963
    %v1966 = vunpack.c.h.bf16 %v1963
    %v1967 = vunpack.c.l.bf16 %v1964
    %v1968 = vunpack.c.h.bf16 %v1964
    %v1969 = vpack.c.bf16 %v1960, %v1960
    %v1970 = vld [vmem:[#allocation8] sm:$0xff]
    %v1971 = vld [vmem:[#allocation8 + $0x8] sm:$0xff]
    %v1972 = vld [vmem:[#allocation8 + $0x10] sm:$0xff]
    %v1973 = vld [vmem:[#allocation8 + $0x18] sm:$0xff]
    %v1974 = vld [vmem:[#allocation8 + $0x20] sm:$0xff]
    %v1975 = vld [vmem:[#allocation8 + $0x28] sm:$0xff]
    %v1976 = vld [vmem:[#allocation8 + $0x30] sm:$0xff]
    %v1977 = vld [vmem:[#allocation8 + $0x38] sm:$0xff]
    %v1978 = vld [vmem:[#allocation8 + $0x40] sm:$0xff]
    %v1979 = vld [vmem:[#allocation8 + $0x48] sm:$0xff]
    %v1980 = vld [vmem:[#allocation8 + $0x50] sm:$0xff]
    %v1981 = vld [vmem:[#allocation8 + $0x58] sm:$0xff]
    %v1982 = vld [vmem:[#allocation8 + $0x60] sm:$0xff]
    %v1983 = vld [vmem:[#allocation8 + $0x68] sm:$0xff]
    %v1984 = vld [vmem:[#allocation8 + $0x70] sm:$0xff]
    %v1985 = vld [vmem:[#allocation8 + $0x78] sm:$0xff]
    %v1986 = vld [vmem:[#allocation8 + $0x80] sm:$0xff]
    %v1987 = vld [vmem:[#allocation8 + $0x88] sm:$0xff]
    %v1988 = vld [vmem:[#allocation8 + $0x90] sm:$0xff]
    %v1989 = vld [vmem:[#allocation8 + $0x98] sm:$0xff]
    %v1990 = vld [vmem:[#allocation8 + $0xa0] sm:$0xff]
    %v1991 = vld [vmem:[#allocation8 + $0xa8] sm:$0xff]
    %v1992 = vld [vmem:[#allocation8 + $0xb0] sm:$0xff]
    %v1993 = vld [vmem:[#allocation8 + $0xb8] sm:$0xff]
    %v1994 = vld [vmem:[#allocation8 + $0xc0] sm:$0xff]
    %v1995 = vld [vmem:[#allocation8 + $0xc8] sm:$0xff]
    %v1996 = vld [vmem:[#allocation8 + $0xd0] sm:$0xff]
    %v1997 = vld [vmem:[#allocation8 + $0xd8] sm:$0xff]
    %v1998 = vld [vmem:[#allocation8 + $0xe0] sm:$0xff]
    %v1999 = vld [vmem:[#allocation8 + $0xe8] sm:$0xff]
    %v2000 = vld [vmem:[#allocation8 + $0xf0] sm:$0xff]
    %v2001 = vld [vmem:[#allocation8 + $0xf8] sm:$0xff]
    %v2034 = vunpack.c.l.b16 %v1970
    %v2035 = vunpack.c.h.b16 %v1970
    %v2036 = vunpack.c.l.b16 %v1971
    %v2037 = vunpack.c.h.b16 %v1971
    %v2038 = vunpack.c.l.b16 %v1972
    %v2039 = vunpack.c.h.b16 %v1972
    %v2040 = vunpack.c.l.b16 %v1973
    %v2041 = vunpack.c.h.b16 %v1973
    %v2042 = vunpack.c.l.b16 %v1974
    %v2043 = vunpack.c.h.b16 %v1974
    %v2044 = vunpack.c.l.b16 %v1975
    %v2045 = vunpack.c.h.b16 %v1975
    %v2046 = vunpack.c.l.b16 %v1976
    %v2047 = vunpack.c.h.b16 %v1976
    %v2048 = vunpack.c.l.b16 %v1977
    %v2049 = vunpack.c.h.b16 %v1977
    %v2050 = vunpack.c.l.b16 %v1978
    %v2051 = vunpack.c.h.b16 %v1978
    %v2052 = vunpack.c.l.b16 %v1979
    %v2053 = vunpack.c.h.b16 %v1979
    %v2054 = vunpack.c.l.b16 %v1980
    %v2055 = vunpack.c.h.b16 %v1980
    %v2056 = vunpack.c.l.b16 %v1981
    %v2057 = vunpack.c.h.b16 %v1981
    %v2058 = vunpack.c.l.b16 %v1982
    %v2059 = vunpack.c.h.b16 %v1982
    %v2060 = vunpack.c.l.b16 %v1983
    %v2061 = vunpack.c.h.b16 %v1983
    %v2062 = vunpack.c.l.b16 %v1984
    %v2063 = vunpack.c.h.b16 %v1984
    %v2064 = vunpack.c.l.b16 %v1985
    %v2065 = vunpack.c.h.b16 %v1985
    %v2066 = vunpack.c.l.b16 %v1986
    %v2067 = vunpack.c.h.b16 %v1986
    %v2068 = vunpack.c.l.b16 %v1987
    %v2069 = vunpack.c.h.b16 %v1987
    %v2070 = vunpack.c.l.b16 %v1988
    %v2071 = vunpack.c.h.b16 %v1988
    %v2072 = vunpack.c.l.b16 %v1989
    %v2073 = vunpack.c.h.b16 %v1989
    %v2074 = vunpack.c.l.b16 %v1990
    %v2075 = vunpack.c.h.b16 %v1990
    %v2076 = vunpack.c.l.b16 %v1991
    %v2077 = vunpack.c.h.b16 %v1991
    %v2078 = vunpack.c.l.b16 %v1992
    %v2079 = vunpack.c.h.b16 %v1992
    %v2080 = vunpack.c.l.b16 %v1993
    %v2081 = vunpack.c.h.b16 %v1993
    %v2082 = vunpack.c.l.b16 %v1994
    %v2083 = vunpack.c.h.b16 %v1994
    %v2084 = vunpack.c.l.b16 %v1995
    %v2085 = vunpack.c.h.b16 %v1995
    %v2086 = vunpack.c.l.b16 %v1996
    %v2087 = vunpack.c.h.b16 %v1996
    %v2088 = vunpack.c.l.b16 %v1997
    %v2089 = vunpack.c.h.b16 %v1997
    %v2090 = vunpack.c.l.b16 %v1998
    %v2091 = vunpack.c.h.b16 %v1998
    %v2092 = vunpack.c.l.b16 %v1999
    %v2093 = vunpack.c.h.b16 %v1999
    %v2094 = vunpack.c.l.b16 %v2000
    %v2095 = vunpack.c.h.b16 %v2000
    %v2096 = vunpack.c.l.b16 %v2001
    %v2097 = vunpack.c.h.b16 %v2001
    %v2098 = vpack.c.b16 %v2038, %v2034
    %v2099 = vpack.c.b16 %v2039, %v2035
    %v2100 = vpack.c.b16 %v2040, %v2036
    %v2101 = vpack.c.b16 %v2041, %v2037
    %v2102 = vpack.c.b16 %v2046, %v2042
    %v2103 = vpack.c.b16 %v2047, %v2043
    %v2104 = vpack.c.b16 %v2048, %v2044
    %v2105 = vpack.c.b16 %v2049, %v2045
    %v2106 = vpack.c.b16 %v2054, %v2050
    %v2107 = vpack.c.b16 %v2055, %v2051
    %v2108 = vpack.c.b16 %v2056, %v2052
    %v2109 = vpack.c.b16 %v2057, %v2053
    %v2110 = vpack.c.b16 %v2062, %v2058
    %v2111 = vpack.c.b16 %v2063, %v2059
    %v2112 = vpack.c.b16 %v2064, %v2060
    %v2113 = vpack.c.b16 %v2065, %v2061
    %v2114 = vpack.c.b16 %v2070, %v2066
    %v2115 = vpack.c.b16 %v2071, %v2067
    %v2116 = vpack.c.b16 %v2072, %v2068
    %v2117 = vpack.c.b16 %v2073, %v2069
    %v2118 = vpack.c.b16 %v2078, %v2074
    %v2119 = vpack.c.b16 %v2079, %v2075
    %v2120 = vpack.c.b16 %v2080, %v2076
    %v2121 = vpack.c.b16 %v2081, %v2077
    %v2122 = vpack.c.b16 %v2086, %v2082
    %v2123 = vpack.c.b16 %v2087, %v2083
    %v2124 = vpack.c.b16 %v2088, %v2084
    %v2125 = vpack.c.b16 %v2089, %v2085
    %v2126 = vpack.c.b16 %v2094, %v2090
    %v2127 = vpack.c.b16 %v2095, %v2091
    %v2128 = vpack.c.b16 %v2096, %v2092
    %v2129 = vpack.c.b16 %v2097, %v2093
    %2162 = vmatprep.subr.bf16.mxu0 %v2099
    %2163 = vmatpush1.bf16.msra.mxu0 %v2098
    %2164 = vmatprep.subr.bf16.mxu0 %v2103
    %2165 = vmatpush1.bf16.msra.mxu0 %v2102
    %2166 = vmatprep.subr.bf16.mxu0 %v2107
    %2167 = vmatpush1.bf16.msra.mxu0 %v2106
    %2168 = vmatprep.subr.bf16.mxu0 %v2111
    %2169 = vmatpush1.bf16.msra.mxu0 %v2110
    %2170 = vmatprep.subr.bf16.mxu0 %v2115
    %2171 = vmatpush1.bf16.msra.mxu0 %v2114
    %2172 = vmatprep.subr.bf16.mxu0 %v2119
    %2173 = vmatpush1.bf16.msra.mxu0 %v2118
    %2174 = vmatprep.subr.bf16.mxu0 %v2123
    %2175 = vmatpush1.bf16.msra.mxu0 %v2122
    %2176 = vmatprep.subr.bf16.mxu0 %v2127
    %2177 = vmatpush1.bf16.msra.mxu0 %v2126
    %2178 = vmatprep.subr.bf16.mxu0 0
    %2179 = vmatpush1.bf16.msra.mxu0 0
    %2180 = vmatprep.subr.bf16.mxu0 0
    %2181 = vmatpush1.bf16.msra.mxu0 0
    %2182 = vmatprep.subr.bf16.mxu0 0
    %2183 = vmatpush1.bf16.msra.mxu0 0
    %2184 = vmatprep.subr.bf16.mxu0 0
    %2185 = vmatpush1.bf16.msra.mxu0 0
    %2186 = vmatprep.subr.bf16.mxu0 0
    %2187 = vmatpush1.bf16.msra.mxu0 0
    %2188 = vmatprep.subr.bf16.mxu0 0
    %2189 = vmatpush1.bf16.msra.mxu0 0
    %2190 = vmatprep.subr.bf16.mxu0 0
    %2191 = vmatpush1.bf16.msra.mxu0 0
    %2192 = vmatprep.subr.bf16.mxu0 0
    %2193 = vmatpush1.bf16.msra.mxu0 0
    %2194 = vmatprep.mubr.bf16.mxu0 0
    %2195 = vmatmul.mubr.bf16.gmra.mrb[0].mxu0 %v1969
    %v2196 = vpop.f32.mrb[0].mxu0
    %v2197 = vadd.f32 0.0, %v2196
    %v2198 = vpop.f32.mrb[0].mxu0
    %v2199 = vadd.f32 0.0, %v2198
    %v2200 = vpop.f32.mrb[0].mxu0
    %v2201 = vpop.f32.mrb[0].mxu0
    %2202 = vdwg.mxu0
    %2203 = vmatprep.subr.bf16.mxu0 %v2101
    %2204 = vmatpush1.bf16.msra.mxu0 %v2100
    %2205 = vmatprep.subr.bf16.mxu0 %v2105
    %2206 = vmatpush1.bf16.msra.mxu0 %v2104
    %2207 = vmatprep.subr.bf16.mxu0 %v2109
    %2208 = vmatpush1.bf16.msra.mxu0 %v2108
    %2209 = vmatprep.subr.bf16.mxu0 %v2113
    %2210 = vmatpush1.bf16.msra.mxu0 %v2112
    %2211 = vmatprep.subr.bf16.mxu0 %v2117
    %2212 = vmatpush1.bf16.msra.mxu0 %v2116
    %2213 = vmatprep.subr.bf16.mxu0 %v2121
    %2214 = vmatpush1.bf16.msra.mxu0 %v2120
    %2215 = vmatprep.subr.bf16.mxu0 %v2125
    %2216 = vmatpush1.bf16.msra.mxu0 %v2124
    %2217 = vmatprep.subr.bf16.mxu0 %v2129
    %2218 = vmatpush1.bf16.msra.mxu0 %v2128
    %2219 = vmatprep.subr.bf16.mxu0 0
    %2220 = vmatpush1.bf16.msra.mxu0 0
    %2221 = vmatprep.subr.bf16.mxu0 0
    %2222 = vmatpush1.bf16.msra.mxu0 0
    %2223 = vmatprep.subr.bf16.mxu0 0
    %2224 = vmatpush1.bf16.msra.mxu0 0
    %2225 = vmatprep.subr.bf16.mxu0 0
    %2226 = vmatpush1.bf16.msra.mxu0 0
    %2227 = vmatprep.subr.bf16.mxu0 0
    %2228 = vmatpush1.bf16.msra.mxu0 0
    %2229 = vmatprep.subr.bf16.mxu0 0
    %2230 = vmatpush1.bf16.msra.mxu0 0
    %2231 = vmatprep.subr.bf16.mxu0 0
    %2232 = vmatpush1.bf16.msra.mxu0 0
    %2233 = vmatprep.subr.bf16.mxu0 0
    %2234 = vmatpush1.bf16.msra.mxu0 0
    %2235 = vmatprep.mubr.bf16.mxu0 0
    %2236 = vmatmul.mubr.bf16.gmra.mrb[0].mxu0 %v1969
    %v2237 = vpop.f32.mrb[0].mxu0
    %v2238 = vadd.f32 0.0, %v2237
    %v2239 = vpop.f32.mrb[0].mxu0
    %v2240 = vadd.f32 0.0, %v2239
    %v2241 = vpop.f32.mrb[0].mxu0
    %v2242 = vpop.f32.mrb[0].mxu0
    %2243 = vdwg.mxu0
    %v2244 = vadd.f32 %v1965, %v2197
    %v2245 = vadd.f32 %v1966, %v2199
    %v2246 = vadd.f32 %v1967, %v2238
    %v2247 = vadd.f32 %v1968, %v2240
    %v2248 = vxor.u32 %v2244, 2147483648
    %v2249 = vmul.f32 %v2248, 1.442695
    %v2250 = vpow.pop %v2249
    %v2251 = vadd.f32 %v2250, 1.0
    %v2252 = vrcp.pop %v2251
    %v2253 = vmul.f32 1.0, %v2252
    %v2254 = vxor.u32 %v2245, 2147483648
    %v2255 = vmul.f32 %v2254, 1.442695
    %v2256 = vpow.pop %v2255
    %v2257 = vadd.f32 %v2256, 1.0
    %v2258 = vrcp.pop %v2257
    %v2259 = vmul.f32 1.0, %v2258
    %v2260 = vtanh.pop %v2246
    %v2261 = vxor.u32 %v2247, 2147483648
    %v2262 = vmul.f32 %v2261, 1.442695
    %v2263 = vpow.pop %v2262
    %v2264 = vadd.f32 %v2263, 1.0
    %v2265 = vrcp.pop %v2264
    %v2266 = vmul.f32 1.0, %v2265
    %v2267 = vmul.f32 %v2259, %v1961
    %v2268 = vmul.f32 %v2253, %v2260
    %v2269 = vadd.f32 %v2267, %v2268
    %v2270 = vtanh.pop %v2269
    %v2271 = vmul.f32 %v2266, %v2270
    %2272 = vst [vmem:[#allocation3] sm:$0xff] %v2269
    %2273 = vst [vmem:[#allocation2] sm:$0xff] %v2271
    %s2274 = scalar_lea.vmem [#allocation4], 48
    %2275 = vst [vmem:[%s2274] sm:$0xff] %v2271
    %v2276 = vld [vmem:[#allocation2] sm:$0xff]
    %v2277 = vld [vmem:[#allocation3] sm:$0xff]
    %s2278 = scalar_lea.vmem [#allocation5], 112
    %v2279 = vld [vmem:[%s2278] sm:$0xff]
    %v2280 = vld [vmem:[%s2278 + $0x8] sm:$0xff]
    %v2281 = vunpack.c.l.bf16 %v2279
    %v2282 = vunpack.c.h.bf16 %v2279
    %v2283 = vunpack.c.l.bf16 %v2280
    %v2284 = vunpack.c.h.bf16 %v2280
    %v2285 = vpack.c.bf16 %v2276, %v2276
    %v2286 = vld [vmem:[#allocation8] sm:$0xff]
    %v2287 = vld [vmem:[#allocation8 + $0x8] sm:$0xff]
    %v2288 = vld [vmem:[#allocation8 + $0x10] sm:$0xff]
    %v2289 = vld [vmem:[#allocation8 + $0x18] sm:$0xff]
    %v2290 = vld [vmem:[#allocation8 + $0x20] sm:$0xff]
    %v2291 = vld [vmem:[#allocation8 + $0x28] sm:$0xff]
    %v2292 = vld [vmem:[#allocation8 + $0x30] sm:$0xff]
    %v2293 = vld [vmem:[#allocation8 + $0x38] sm:$0xff]
    %v2294 = vld [vmem:[#allocation8 + $0x40] sm:$0xff]
    %v2295 = vld [vmem:[#allocation8 + $0x48] sm:$0xff]
    %v2296 = vld [vmem:[#allocation8 + $0x50] sm:$0xff]
    %v2297 = vld [vmem:[#allocation8 + $0x58] sm:$0xff]
    %v2298 = vld [vmem:[#allocation8 + $0x60] sm:$0xff]
    %v2299 = vld [vmem:[#allocation8 + $0x68] sm:$0xff]
    %v2300 = vld [vmem:[#allocation8 + $0x70] sm:$0xff]
    %v2301 = vld [vmem:[#allocation8 + $0x78] sm:$0xff]
    %v2302 = vld [vmem:[#allocation8 + $0x80] sm:$0xff]
    %v2303 = vld [vmem:[#allocation8 + $0x88] sm:$0xff]
    %v2304 = vld [vmem:[#allocation8 + $0x90] sm:$0xff]
    %v2305 = vld [vmem:[#allocation8 + $0x98] sm:$0xff]
    %v2306 = vld [vmem:[#allocation8 + $0xa0] sm:$0xff]
    %v2307 = vld [vmem:[#allocation8 + $0xa8] sm:$0xff]
    %v2308 = vld [vmem:[#allocation8 + $0xb0] sm:$0xff]
    %v2309 = vld [vmem:[#allocation8 + $0xb8] sm:$0xff]
    %v2310 = vld [vmem:[#allocation8 + $0xc0] sm:$0xff]
    %v2311 = vld [vmem:[#allocation8 + $0xc8] sm:$0xff]
    %v2312 = vld [vmem:[#allocation8 + $0xd0] sm:$0xff]
    %v2313 = vld [vmem:[#allocation8 + $0xd8] sm:$0xff]
    %v2314 = vld [vmem:[#allocation8 + $0xe0] sm:$0xff]
    %v2315 = vld [vmem:[#allocation8 + $0xe8] sm:$0xff]
    %v2316 = vld [vmem:[#allocation8 + $0xf0] sm:$0xff]
    %v2317 = vld [vmem:[#allocation8 + $0xf8] sm:$0xff]
    %v2350 = vunpack.c.l.b16 %v2286
    %v2351 = vunpack.c.h.b16 %v2286
    %v2352 = vunpack.c.l.b16 %v2287
    %v2353 = vunpack.c.h.b16 %v2287
    %v2354 = vunpack.c.l.b16 %v2288
    %v2355 = vunpack.c.h.b16 %v2288
    %v2356 = vunpack.c.l.b16 %v2289
    %v2357 = vunpack.c.h.b16 %v2289
    %v2358 = vunpack.c.l.b16 %v2290
    %v2359 = vunpack.c.h.b16 %v2290
    %v2360 = vunpack.c.l.b16 %v2291
    %v2361 = vunpack.c.h.b16 %v2291
    %v2362 = vunpack.c.l.b16 %v2292
    %v2363 = vunpack.c.h.b16 %v2292
    %v2364 = vunpack.c.l.b16 %v2293
    %v2365 = vunpack.c.h.b16 %v2293
    %v2366 = vunpack.c.l.b16 %v2294
    %v2367 = vunpack.c.h.b16 %v2294
    %v2368 = vunpack.c.l.b16 %v2295
    %v2369 = vunpack.c.h.b16 %v2295
    %v2370 = vunpack.c.l.b16 %v2296
    %v2371 = vunpack.c.h.b16 %v2296
    %v2372 = vunpack.c.l.b16 %v2297
    %v2373 = vunpack.c.h.b16 %v2297
    %v2374 = vunpack.c.l.b16 %v2298
    %v2375 = vunpack.c.h.b16 %v2298
    %v2376 = vunpack.c.l.b16 %v2299
    %v2377 = vunpack.c.h.b16 %v2299
    %v2378 = vunpack.c.l.b16 %v2300
    %v2379 = vunpack.c.h.b16 %v2300
    %v2380 = vunpack.c.l.b16 %v2301
    %v2381 = vunpack.c.h.b16 %v2301
    %v2382 = vunpack.c.l.b16 %v2302
    %v2383 = vunpack.c.h.b16 %v2302
    %v2384 = vunpack.c.l.b16 %v2303
    %v2385 = vunpack.c.h.b16 %v2303
    %v2386 = vunpack.c.l.b16 %v2304
    %v2387 = vunpack.c.h.b16 %v2304
    %v2388 = vunpack.c.l.b16 %v2305
    %v2389 = vunpack.c.h.b16 %v2305
    %v2390 = vunpack.c.l.b16 %v2306
    %v2391 = vunpack.c.h.b16 %v2306
    %v2392 = vunpack.c.l.b16 %v2307
    %v2393 = vunpack.c.h.b16 %v2307
    %v2394 = vunpack.c.l.b16 %v2308
    %v2395 = vunpack.c.h.b16 %v2308
    %v2396 = vunpack.c.l.b16 %v2309
    %v2397 = vunpack.c.h.b16 %v2309
    %v2398 = vunpack.c.l.b16 %v2310
    %v2399 = vunpack.c.h.b16 %v2310
    %v2400 = vunpack.c.l.b16 %v2311
    %v2401 = vunpack.c.h.b16 %v2311
    %v2402 = vunpack.c.l.b16 %v2312
    %v2403 = vunpack.c.h.b16 %v2312
    %v2404 = vunpack.c.l.b16 %v2313
    %v2405 = vunpack.c.h.b16 %v2313
    %v2406 = vunpack.c.l.b16 %v2314
    %v2407 = vunpack.c.h.b16 %v2314
    %v2408 = vunpack.c.l.b16 %v2315
    %v2409 = vunpack.c.h.b16 %v2315
    %v2410 = vunpack.c.l.b16 %v2316
    %v2411 = vunpack.c.h.b16 %v2316
    %v2412 = vunpack.c.l.b16 %v2317
    %v2413 = vunpack.c.h.b16 %v2317
    %v2414 = vpack.c.b16 %v2354, %v2350
    %v2415 = vpack.c.b16 %v2355, %v2351
    %v2416 = vpack.c.b16 %v2356, %v2352
    %v2417 = vpack.c.b16 %v2357, %v2353
    %v2418 = vpack.c.b16 %v2362, %v2358
    %v2419 = vpack.c.b16 %v2363, %v2359
    %v2420 = vpack.c.b16 %v2364, %v2360
    %v2421 = vpack.c.b16 %v2365, %v2361
    %v2422 = vpack.c.b16 %v2370, %v2366
    %v2423 = vpack.c.b16 %v2371, %v2367
    %v2424 = vpack.c.b16 %v2372, %v2368
    %v2425 = vpack.c.b16 %v2373, %v2369
    %v2426 = vpack.c.b16 %v2378, %v2374
    %v2427 = vpack.c.b16 %v2379, %v2375
    %v2428 = vpack.c.b16 %v2380, %v2376
    %v2429 = vpack.c.b16 %v2381, %v2377
    %v2430 = vpack.c.b16 %v2386, %v2382
    %v2431 = vpack.c.b16 %v2387, %v2383
    %v2432 = vpack.c.b16 %v2388, %v2384
    %v2433 = vpack.c.b16 %v2389, %v2385
    %v2434 = vpack.c.b16 %v2394, %v2390
    %v2435 = vpack.c.b16 %v2395, %v2391
    %v2436 = vpack.c.b16 %v2396, %v2392
    %v2437 = vpack.c.b16 %v2397, %v2393
    %v2438 = vpack.c.b16 %v2402, %v2398
    %v2439 = vpack.c.b16 %v2403, %v2399
    %v2440 = vpack.c.b16 %v2404, %v2400
    %v2441 = vpack.c.b16 %v2405, %v2401
    %v2442 = vpack.c.b16 %v2410, %v2406
    %v2443 = vpack.c.b16 %v2411, %v2407
    %v2444 = vpack.c.b16 %v2412, %v2408
    %v2445 = vpack.c.b16 %v2413, %v2409
    %2478 = vmatprep.subr.bf16.mxu0 %v2415
    %2479 = vmatpush1.bf16.msra.mxu0 %v2414
    %2480 = vmatprep.subr.bf16.mxu0 %v2419
    %2481 = vmatpush1.bf16.msra.mxu0 %v2418
    %2482 = vmatprep.subr.bf16.mxu0 %v2423
    %2483 = vmatpush1.bf16.msra.mxu0 %v2422
    %2484 = vmatprep.subr.bf16.mxu0 %v2427
    %2485 = vmatpush1.bf16.msra.mxu0 %v2426
    %2486 = vmatprep.subr.bf16.mxu0 %v2431
    %2487 = vmatpush1.bf16.msra.mxu0 %v2430
    %2488 = vmatprep.subr.bf16.mxu0 %v2435
    %2489 = vmatpush1.bf16.msra.mxu0 %v2434
    %2490 = vmatprep.subr.bf16.mxu0 %v2439
    %2491 = vmatpush1.bf16.msra.mxu0 %v2438
    %2492 = vmatprep.subr.bf16.mxu0 %v2443
    %2493 = vmatpush1.bf16.msra.mxu0 %v2442
    %2494 = vmatprep.subr.bf16.mxu0 0
    %2495 = vmatpush1.bf16.msra.mxu0 0
    %2496 = vmatprep.subr.bf16.mxu0 0
    %2497 = vmatpush1.bf16.msra.mxu0 0
    %2498 = vmatprep.subr.bf16.mxu0 0
    %2499 = vmatpush1.bf16.msra.mxu0 0
    %2500 = vmatprep.subr.bf16.mxu0 0
    %2501 = vmatpush1.bf16.msra.mxu0 0
    %2502 = vmatprep.subr.bf16.mxu0 0
    %2503 = vmatpush1.bf16.msra.mxu0 0
    %2504 = vmatprep.subr.bf16.mxu0 0
    %2505 = vmatpush1.bf16.msra.mxu0 0
    %2506 = vmatprep.subr.bf16.mxu0 0
    %2507 = vmatpush1.bf16.msra.mxu0 0
    %2508 = vmatprep.subr.bf16.mxu0 0
    %2509 = vmatpush1.bf16.msra.mxu0 0
    %2510 = vmatprep.mubr.bf16.mxu0 0
    %2511 = vmatmul.mubr.bf16.gmra.mrb[0].mxu0 %v2285
    %v2512 = vpop.f32.mrb[0].mxu0
    %v2513 = vadd.f32 0.0, %v2512
    %v2514 = vpop.f32.mrb[0].mxu0
    %v2515 = vadd.f32 0.0, %v2514
    %v2516 = vpop.f32.mrb[0].mxu0
    %v2517 = vpop.f32.mrb[0].mxu0
    %2518 = vdwg.mxu0
    %2519 = vmatprep.subr.bf16.mxu0 %v2417
    %2520 = vmatpush1.bf16.msra.mxu0 %v2416
    %2521 = vmatprep.subr.bf16.mxu0 %v2421
    %2522 = vmatpush1.bf16.msra.mxu0 %v2420
    %2523 = vmatprep.subr.bf16.mxu0 %v2425
    %2524 = vmatpush1.bf16.msra.mxu0 %v2424
    %2525 = vmatprep.subr.bf16.mxu0 %v2429
    %2526 = vmatpush1.bf16.msra.mxu0 %v2428
    %2527 = vmatprep.subr.bf16.mxu0 %v2433
    %2528 = vmatpush1.bf16.msra.mxu0 %v2432
    %2529 = vmatprep.subr.bf16.mxu0 %v2437
    %2530 = vmatpush1.bf16.msra.mxu0 %v2436
    %2531 = vmatprep.subr.bf16.mxu0 %v2441
    %2532 = vmatpush1.bf16.msra.mxu0 %v2440
    %2533 = vmatprep.subr.bf16.mxu0 %v2445
    %2534 = vmatpush1.bf16.msra.mxu0 %v2444
    %2535 = vmatprep.subr.bf16.mxu0 0
    %2536 = vmatpush1.bf16.msra.mxu0 0
    %2537 = vmatprep.subr.bf16.mxu0 0
    %2538 = vmatpush1.bf16.msra.mxu0 0
    %2539 = vmatprep.subr.bf16.mxu0 0
    %2540 = vmatpush1.bf16.msra.mxu0 0
    %2541 = vmatprep.subr.bf16.mxu0 0
    %2542 = vmatpush1.bf16.msra.mxu0 0
    %2543 = vmatprep.subr.bf16.mxu0 0
    %2544 = vmatpush1.bf16.msra.mxu0 0
    %2545 = vmatprep.subr.bf16.mxu0 0
    %2546 = vmatpush1.bf16.msra.mxu0 0
    %2547 = vmatprep.subr.bf16.mxu0 0
    %2548 = vmatpush1.bf16.msra.mxu0 0
    %2549 = vmatprep.subr.bf16.mxu0 0
    %2550 = vmatpush1.bf16.msra.mxu0 0
    %2551 = vmatprep.mubr.bf16.mxu0 0
    %2552 = vmatmul.mubr.bf16.gmra.mrb[0].mxu0 %v2285
    %v2553 = vpop.f32.mrb[0].mxu0
    %v2554 = vadd.f32 0.0, %v2553
    %v2555 = vpop.f32.mrb[0].mxu0
    %v2556 = vadd.f32 0.0, %v2555
    %v2557 = vpop.f32.mrb[0].mxu0
    %v2558 = vpop.f32.mrb[0].mxu0
    %2559 = vdwg.mxu0
    %v2560 = vadd.f32 %v2281, %v2513
    %v2561 = vadd.f32 %v2282, %v2515
    %v2562 = vadd.f32 %v2283, %v2554
    %v2563 = vadd.f32 %v2284, %v2556
    %v2564 = vxor.u32 %v2560, 2147483648
    %v2565 = vmul.f32 %v2564, 1.442695
    %v2566 = vpow.pop %v2565
    %v2567 = vadd.f32 %v2566, 1.0
    %v2568 = vrcp.pop %v2567
    %v2569 = vmul.f32 1.0, %v2568
    %v2570 = vxor.u32 %v2561, 2147483648
    %v2571 = vmul.f32 %v2570, 1.442695
    %v2572 = vpow.pop %v2571
    %v2573 = vadd.f32 %v2572, 1.0
    %v2574 = vrcp.pop %v2573
    %v2575 = vmul.f32 1.0, %v2574
    %v2576 = vtanh.pop %v2562
    %v2577 = vxor.u32 %v2563, 2147483648
    %v2578 = vmul.f32 %v2577, 1.442695
    %v2579 = vpow.pop %v2578
    %v2580 = vadd.f32 %v2579, 1.0
    %v2581 = vrcp.pop %v2580
    %v2582 = vmul.f32 1.0, %v2581
    %v2583 = vmul.f32 %v2575, %v2277
    %v2584 = vmul.f32 %v2569, %v2576
    %v2585 = vadd.f32 %v2583, %v2584
    %v2586 = vtanh.pop %v2585
    %v2587 = vmul.f32 %v2582, %v2586
    %2588 = vst [vmem:[#allocation3] sm:$0xff] %v2585
    %2589 = vst [vmem:[#allocation2] sm:$0xff] %v2587
    %s2590 = scalar_lea.vmem [#allocation4], 56
    %2591 = vst [vmem:[%s2590] sm:$0xff] %v2587
    %v2592 = vld [vmem:[#allocation4] sm:$0xff]
    %v2593 = vld [vmem:[#allocation4 + $0x8] sm:$0xff]
    %v2594 = vld [vmem:[#allocation4 + $0x10] sm:$0xff]
    %v2595 = vld [vmem:[#allocation4 + $0x18] sm:$0xff]
    %v2596 = vld [vmem:[#allocation4 + $0x20] sm:$0xff]
    %v2597 = vld [vmem:[#allocation4 + $0x28] sm:$0xff]
    %v2598 = vld [vmem:[#allocation4 + $0x30] sm:$0xff]
    %v2599 = vld [vmem:[#allocation4 + $0x38] sm:$0xff]
    %v2600 = vpack.c.bf16 %v2593, %v2592
    %v2601 = vpack.c.bf16 %v2595, %v2594
    %v2602 = vpack.c.bf16 %v2597, %v2596
    %v2603 = vpack.c.bf16 %v2599, %v2598
    %v2604 = vld [vmem:[#allocation10] sm:$0xf]
    %v2605 = vld [vmem:[#allocation10 + $0x4] sm:$0xf]
    %v2606 = vld [vmem:[#allocation10 + $0x8] sm:$0xf]
    %v2607 = vld [vmem:[#allocation10 + $0xc] sm:$0xf]
    %v2608 = vld [vmem:[#allocation10 + $0x10] sm:$0xf]
    %v2609 = vld [vmem:[#allocation10 + $0x14] sm:$0xf]
    %v2610 = vld [vmem:[#allocation10 + $0x18] sm:$0xf]
    %v2611 = vld [vmem:[#allocation10 + $0x1c] sm:$0xf]
    %v2612 = vld [vmem:[#allocation10 + $0x20] sm:$0xf]
    %v2613 = vld [vmem:[#allocation10 + $0x24] sm:$0xf]
    %v2614 = vld [vmem:[#allocation10 + $0x28] sm:$0xf]
    %v2615 = vld [vmem:[#allocation10 + $0x2c] sm:$0xf]
    %v2616 = vld [vmem:[#allocation10 + $0x30] sm:$0xf]
    %v2617 = vld [vmem:[#allocation10 + $0x34] sm:$0xf]
    %v2618 = vld [vmem:[#allocation10 + $0x38] sm:$0xf]
    %v2619 = vld [vmem:[#allocation10 + $0x3c] sm:$0xf]
    %v2620 = vld [vmem:[%s3] sm:$0x1]
    %v2622 = vlaneseq
    %v2623 = vshrl.u32 %v2622, 7
    %v2624 = vsub.s32 0, %v2623
    %v2625 = vrot.slane %v2620, %v2624
    %v2643 = vunpack.c.l.b16 %v2604
    %v2644 = vunpack.c.l.b16 %v2605
    %v2645 = vunpack.c.l.b16 %v2606
    %v2646 = vunpack.c.l.b16 %v2607
    %v2647 = vunpack.c.l.b16 %v2608
    %v2648 = vunpack.c.l.b16 %v2609
    %v2649 = vunpack.c.l.b16 %v2610
    %v2650 = vunpack.c.l.b16 %v2611
    %v2651 = vunpack.c.l.b16 %v2612
    %v2652 = vunpack.c.l.b16 %v2613
    %v2653 = vunpack.c.l.b16 %v2614
    %v2654 = vunpack.c.l.b16 %v2615
    %v2655 = vunpack.c.l.b16 %v2616
    %v2656 = vunpack.c.l.b16 %v2617
    %v2657 = vunpack.c.l.b16 %v2618
    %v2658 = vunpack.c.l.b16 %v2619
    %v2659 = vpack.c.b16 %v2644, %v2643
    %v2660 = vpack.c.b16 %v2646, %v2645
    %v2661 = vpack.c.b16 %v2648, %v2647
    %v2662 = vpack.c.b16 %v2650, %v2649
    %v2663 = vpack.c.b16 %v2652, %v2651
    %v2664 = vpack.c.b16 %v2654, %v2653
    %v2665 = vpack.c.b16 %v2656, %v2655
    %v2666 = vpack.c.b16 %v2658, %v2657
    %2675 = vmatprep.subr.bf16.mxu0 0
    %2676 = vmatpush1.bf16.msra.mxu0 %v2659
    %2677 = vmatprep.subr.bf16.mxu0 0
    %2678 = vmatpush1.bf16.msra.mxu0 %v2660
    %2679 = vmatprep.subr.bf16.mxu0 0
    %2680 = vmatpush1.bf16.msra.mxu0 %v2661
    %2681 = vmatprep.subr.bf16.mxu0 0
    %2682 = vmatpush1.bf16.msra.mxu0 %v2662
    %2683 = vmatprep.subr.bf16.mxu0 0
    %2684 = vmatpush1.bf16.msra.mxu0 %v2663
    %2685 = vmatprep.subr.bf16.mxu0 0
    %2686 = vmatpush1.bf16.msra.mxu0 %v2664
    %2687 = vmatprep.subr.bf16.mxu0 0
    %2688 = vmatpush1.bf16.msra.mxu0 %v2665
    %2689 = vmatprep.subr.bf16.mxu0 0
    %2690 = vmatpush1.bf16.msra.mxu0 %v2666
    %2691 = vmatprep.subr.bf16.mxu0 0
    %2692 = vmatpush1.bf16.msra.mxu0 0
    %2693 = vmatprep.subr.bf16.mxu0 0
    %2694 = vmatpush1.bf16.msra.mxu0 0
    %2695 = vmatprep.subr.bf16.mxu0 0
    %2696 = vmatpush1.bf16.msra.mxu0 0
    %2697 = vmatprep.subr.bf16.mxu0 0
    %2698 = vmatpush1.bf16.msra.mxu0 0
    %2699 = vmatprep.subr.bf16.mxu0 0
    %2700 = vmatpush1.bf16.msra.mxu0 0
    %2701 = vmatprep.subr.bf16.mxu0 0
    %2702 = vmatpush1.bf16.msra.mxu0 0
    %2703 = vmatprep.subr.bf16.mxu0 0
    %2704 = vmatpush1.bf16.msra.mxu0 0
    %2705 = vmatprep.subr.bf16.mxu0 0
    %2706 = vmatpush1.bf16.msra.mxu0 0
    %2707 = vmatprep.mubr.bf16.mxu0 0
    %2708 = vmatmul.mubr.bf16.gmra.mrb[0].mxu0 %v2600
    %v2709 = vpop.f32.mrb[0].mxu0
    %v2710 = vadd.f32 %v2625, %v2709
    %v2711 = vpop.f32.mrb[0].mxu0
    %v2712 = vpop.f32.mrb[0].mxu0
    %v2713 = vadd.f32 %v2625, %v2712
    %v2714 = vpop.f32.mrb[0].mxu0
    %2715 = vmatprep.mubr.bf16.mxu0 0
    %2716 = vmatmul.mubr.bf16.gmra.mrb[0].mxu0 %v2601
    %v2717 = vpop.f32.mrb[0].mxu0
    %v2718 = vadd.f32 %v2625, %v2717
    %v2719 = vpop.f32.mrb[0].mxu0
    %v2720 = vpop.f32.mrb[0].mxu0
    %v2721 = vadd.f32 %v2625, %v2720
    %v2722 = vpop.f32.mrb[0].mxu0
    %2723 = vmatprep.mubr.bf16.mxu0 0
    %2724 = vmatmul.mubr.bf16.gmra.mrb[0].mxu0 %v2602
    %v2725 = vpop.f32.mrb[0].mxu0
    %v2726 = vadd.f32 %v2625, %v2725
    %v2727 = vpop.f32.mrb[0].mxu0
    %v2728 = vpop.f32.mrb[0].mxu0
    %v2729 = vadd.f32 %v2625, %v2728
    %v2730 = vpop.f32.mrb[0].mxu0
    %2731 = vmatprep.mubr.bf16.mxu0 0
    %2732 = vmatmul.mubr.bf16.gmra.mrb[0].mxu0 %v2603
    %v2733 = vpop.f32.mrb[0].mxu0
    %v2734 = vadd.f32 %v2625, %v2733
    %v2735 = vpop.f32.mrb[0].mxu0
    %v2736 = vpop.f32.mrb[0].mxu0
    %v2737 = vadd.f32 %v2625, %v2736
    %v2738 = vpop.f32.mrb[0].mxu0
    %2739 = vdwg.mxu0
    %2740 = vst [vmem:[#allocation11] sm:$0xff] %v2710
    %2741 = vst [vmem:[#allocation11 + $0x8] sm:$0xff] %v2713
    %2742 = vst [vmem:[#allocation11 + $0x10] sm:$0xff] %v2718
    %2743 = vst [vmem:[#allocation11 + $0x18] sm:$0xff] %v2721
    %2744 = vst [vmem:[#allocation11 + $0x20] sm:$0xff] %v2726
    %2745 = vst [vmem:[#allocation11 + $0x28] sm:$0xff] %v2729
    %2746 = vst [vmem:[#allocation11 + $0x30] sm:$0xff] %v2734
    %2747 = vst [vmem:[#allocation11 + $0x38] sm:$0xff] %v2737
    // Predicated region
    $region34: #{tpu_custom_call.1} parent=1 // pred_check
      _
    $region35: #{tpu_custom_call.1} parent=1 // pred_check_branch
      %2749 = sbr.rel (0) target = $region37
    $region36: #{tpu_custom_call.1} parent=1 // pred_region
      %s2751 = ssub.s32 1024, 1024
      %2752 = vsyncadd [#allocation7], %s2751
      %s2753 = sshll.u32 [#allocation11], 4
      %s2754 = int_to_ptr.vmem [resolvable:$true] %s2753
      %2759 = dma.vmem_to_hbm [thread:$0]  %s2754, 1024, %s4, [#allocation7], 128, 128, 8
    $region37: #{tpu_custom_call.1} parent=1 // pred_fallthru
      _
    // Predicated region
    $region38: #{tpu_custom_call.1} parent=1 // pred_check
      _
    $region39: #{tpu_custom_call.1} parent=1 // pred_check_branch
      %2761 = sbr.rel (0) target = $region41
    $region40: #{tpu_custom_call.1} parent=1 // pred_region
      %2762 = dma.done [#allocation7], 1024
    $region41: #{tpu_custom_call.1} parent=1 // pred_fallthru
      _
    %2763 = vsyncpa [#allocation6], 1
    %2764 = vsyncpa [#allocation9], 1
    %2765 = vsyncpa [#allocation7], 1

</llo_original>
